<compile_context>
chip_gen: v6e
topology: v6e:2x2x1
jax: 0.10.0
libtpu: 0.0.40
codegen_flags: <defaults>
</compile_context>

<pallas_src>
import functools

import jax
import jax.numpy as jnp
from jax.experimental import pallas as pl
from jax.experimental.pallas import tpu as pltpu

EPS = 1e-5      # nn.BatchNorm2d default
LANES = 128     # TPU lane width
SUBLANES = 8


def _ru(x, m):
    return (x + m - 1) // m * m


def _double_conv_kernel(x_main_ref, x_halo_ref, w1_ref, s1_ref, b1_ref,
                        w2_ref, s2_ref, b2_ref, out_ref, xwin_ref, mid_ref,
                        *, tile_h, height, width):
    # x_main_ref: (1, TH, Wx, Cip)  rows [t*TH, (t+1)*TH) of the padded input (bf16)
    # x_halo_ref: (1, 4,  Wx, Cip)  rows [(t+1)*TH, (t+1)*TH+4)               (bf16)
    # w1_ref    : (3, 3*Cip, Cmp)   conv1 weights, K ordered (kx, cin)        (bf16)
    # s1/b1     : (1, Cmp)          fused BN1 scale / bias                    (f32)
    # w2_ref    : (3, 3*Cmp, Cop)   conv2 weights                             (bf16)
    # s2/b2     : (1, Cop)                                                    (f32)
    # out_ref   : (1, TH, W1, Cop)                                            (f32)
    # xwin_ref  : (TH+4, Wx, Cip)   VMEM scratch: halo'd input window         (bf16)
    # mid_ref   : (TH+2, Wm, Cmp)   VMEM scratch: conv1 activation (+1-col pad)(bf16)
    TH = tile_h
    W1 = out_ref.shape[2]
    Cip = x_main_ref.shape[3]
    Cmp = w1_ref.shape[2]
    Cop = w2_ref.shape[2]
    t = pl.program_id(1)

    # Assemble the (TH+4)-row halo'd input window in VMEM (contiguous concat).
    xwin_ref[0:TH] = x_main_ref[0]
    xwin_ref[TH:TH + 4] = x_halo_ref[0]

    # ---- conv1: 3 fat MXU matmuls (3 kx taps fused -> K = 3*Cip) ----
    acc1 = None
    for ky in range(3):
        rows = xwin_ref[ky:ky + TH + 2]                       # (TH+2, Wx, Cip)
        patch = jnp.concatenate(
            [rows[:, 0:W1], rows[:, 1:1 + W1], rows[:, 2:2 + W1]], axis=-1)
        d = jnp.dot(patch.reshape((TH + 2) * W1, 3 * Cip), w1_ref[ky],
                    preferred_element_type=jnp.float32)
        acc1 = d if acc1 is None else acc1 + d
    # fused BN(eval) + conv bias, then ReLU (all f32)
    y1 = jnp.maximum(acc1 * s1_ref[...] + b1_ref[...], 0.0)
    y1 = y1.reshape(TH + 2, W1, Cmp)

    # Rows/cols outside the real image are conv2's zero padding -> mask to 0.
    row = jax.lax.broadcasted_iota(jnp.int32, (TH + 2, 1, 1), 0) + (t * TH - 1)
    col = jax.lax.broadcasted_iota(jnp.int32, (1, W1, 1), 1)
    valid = (row >= 0) & (row < height) & (col < width)
    y1 = jnp.where(valid, y1, 0.0)

    # Store into mid scratch with a 1-column zero border (only the border columns
    # are zeroed -- not the whole scratch).
    zcol = jnp.zeros((TH + 2, 1, Cmp), mid_ref.dtype)
    mid_ref[:, 0:1, :] = zcol
    mid_ref[:, 1:1 + W1, :] = y1.astype(mid_ref.dtype)
    mid_ref[:, 1 + W1:2 + W1, :] = zcol

    # ---- conv2: same structure, TH output rows ----
    acc2 = None
    for ky in range(3):
        rows = mid_ref[ky:ky + TH]                            # (TH, Wm, Cmp)
        patch = jnp.concatenate(
            [rows[:, 0:W1], rows[:, 1:1 + W1], rows[:, 2:2 + W1]], axis=-1)
        d = jnp.dot(patch.reshape(TH * W1, 3 * Cmp), w2_ref[ky],
                    preferred_element_type=jnp.float32)
        acc2 = d if acc2 is None else acc2 + d
    y2 = jnp.maximum(acc2 * s2_ref[...] + b2_ref[...], 0.0)
    out_ref[...] = y2.reshape(1, TH, W1, Cop).astype(out_ref.dtype)


def _fold_bn_and_pack(conv_w, conv_b, gamma, beta, r_mean, r_var, cin_p, cout_p):
    """Fold conv bias + eval-mode BN into (scale, bias); pack weights for the kernel:
    (3, 3*cin_p, cout_p) bf16 with the K axis ordered (kx, cin) to match the kernel's
    kx-concatenated patch matrix."""
    cout, cin = conv_w.shape[0], conv_w.shape[1]
    scale = gamma / jnp.sqrt(r_var + EPS)
    bias = scale * (conv_b - r_mean) + beta
    w = jnp.transpose(conv_w, (2, 3, 1, 0))                   # (ky, kx, cin, cout)
    w = jnp.pad(w, ((0, 0), (0, 0), (0, cin_p - cin), (0, cout_p - cout)))
    w = w.reshape(3, 3 * cin_p, cout_p).astype(jnp.bfloat16)
    scale = jnp.pad(scale, (0, cout_p - cout)).reshape(1, cout_p).astype(jnp.float32)
    bias = jnp.pad(bias, (0, cout_p - cout)).reshape(1, cout_p).astype(jnp.float32)
    return w, scale, bias


@functools.partial(jax.jit, static_argnames=("tile_h",))
def double_conv_pallas(x_nchw, raw_params, tile_h=8):
    """x_nchw: (N, Cin, H, W) f32 -> (N, Cout, H, W) f32 (DoubleConv, eval-mode BN)."""
    raw1, raw2 = raw_params
    N, Cin, H, W = x_nchw.shape
    Cmid = raw1[0].shape[0]
    Cout = raw2[0].shape[0]
    assert tile_h % 4 == 0, "tile_h must be a multiple of 4"

    Cip, Cmp, Cop = _ru(Cin, LANES), _ru(Cmid, LANES), _ru(Cout, LANES)
    W1 = _ru(W, SUBLANES)              # padded output width (sublane aligned)
    Wx = _ru(W1 + 2, SUBLANES)         # padded input width (incl. conv halo)
    Wm = _ru(W1 + 2, SUBLANES)         # mid-activation width (incl. 1-col pad)
    Hp = _ru(H, tile_h)                # height padded to the row tile
    T = Hp // tile_h

    w1, s1, b1 = _fold_bn_and_pack(*raw1, Cip, Cmp)
    w2, s2, b2 = _fold_bn_and_pack(*raw2, Cmp, Cop)

    # NCHW -> NHWC, cast to bf16, one fused zero-pad:
    #   rows: +2 halo top, +2(+row-tile) halo bottom; cols: +1 left, align right;
    #   channels: pad to 128 lanes.
    x = jnp.transpose(x_nchw, (0, 2, 3, 1)).astype(jnp.bfloat16)
    x = jnp.pad(x, ((0, 0), (2, 2 + Hp - H), (1, Wx - W - 1), (0, Cip - Cin)))

    kernel = functools.partial(_double_conv_kernel,
                               tile_h=tile_h, height=H, width=W)

    out_nhwc = pl.pallas_call(
        kernel,
        out_shape=jax.ShapeDtypeStruct((N, Hp, W1, Cop), jnp.float32),
        grid_spec=pltpu.PrefetchScalarGridSpec(
            num_scalar_prefetch=0,
            grid=(N, T),
            in_specs=[
                # main rows [t*TH, (t+1)*TH) of the padded input
                pl.BlockSpec((1, tile_h, Wx, Cip), lambda n, t: (n, t, 0, 0)),
                # 4-row halo directly below the main block
                pl.BlockSpec((1, 4, Wx, Cip),
                             lambda n, t: (n, (t + 1) * (tile_h // 4), 0, 0)),
                pl.BlockSpec((3, 3 * Cip, Cmp), lambda n, t: (0, 0, 0)),
                pl.BlockSpec((1, Cmp), lambda n, t: (0, 0)),
                pl.BlockSpec((1, Cmp), lambda n, t: (0, 0)),
                pl.BlockSpec((3, 3 * Cmp, Cop), lambda n, t: (0, 0, 0)),
                pl.BlockSpec((1, Cop), lambda n, t: (0, 0)),
                pl.BlockSpec((1, Cop), lambda n, t: (0, 0)),
            ],
            out_specs=pl.BlockSpec((1, tile_h, W1, Cop), lambda n, t: (n, t, 0, 0)),
            scratch_shapes=[
                pltpu.VMEM((tile_h + 4, Wx, Cip), jnp.bfloat16),   # halo'd x window
                pltpu.VMEM((tile_h + 2, Wm, Cmp), jnp.bfloat16),   # mid activation
            ],
        ),
        compiler_params=pltpu.CompilerParams(
            dimension_semantics=("parallel", "parallel"),   # no carry -> v7x 2-TC
            vmem_limit_bytes=48 * 1024 * 1024),              # headroom on v7x 64MiB
    )(x, x, w1, s1, b1, w2, s2, b2)

    # Strip padding and go back to NCHW.
    return jnp.transpose(out_nhwc[:, :H, :W, :Cout], (0, 3, 1, 2))


def make_params(key, in_channels, out_channels):
    """Deterministic synthetic parameters for (Conv2d + BN2d) x 2 (PyTorch layout)."""
    ks = jax.random.split(key, 10)

    def conv_bn(kw, kb, kg, kbe, km, cin, cout):
        w = jax.random.normal(kw, (cout, cin, 3, 3), jnp.float32) * 0.1
        b = jax.random.normal(kb, (cout,), jnp.float32) * 0.1
        gamma = 1.0 + 0.1 * jax.random.normal(kg, (cout,), jnp.float32)
        beta = 0.1 * jax.random.normal(kbe, (cout,), jnp.float32)
        r_mean = 0.1 * jax.random.normal(km, (cout,), jnp.float32)
        r_var = jnp.ones((cout,), jnp.float32)
        return (w, b, gamma, beta, r_mean, r_var)

    raw1 = conv_bn(ks[0], ks[1], ks[2], ks[3], ks[4], in_channels, out_channels)
    raw2 = conv_bn(ks[5], ks[6], ks[7], ks[8], ks[9], out_channels, out_channels)
    return (raw1, raw2)


def reference_double_conv(x_nchw, raw_params, quantize_to=None):
    """Pure-JAX reference (PyTorch eval-mode semantics, NCHW).  If `quantize_to` is
    set, conv inputs/weights are rounded through that dtype (to mirror the kernel's
    bf16 quantization points) while all accumulation / BN / ReLU stays f32."""
    def maybe_round(a):
        return a if quantize_to is None else a.astype(quantize_to).astype(jnp.float32)

    y = x_nchw
    for (w, b, gamma, beta, r_mean, r_var) in raw_params:
        y = jax.lax.conv_general_dilated(
            maybe_round(y), maybe_round(w), window_strides=(1, 1),
            padding=((1, 1), (1, 1)),
            dimension_numbers=("NCHW", "OIHW", "NCHW"),
            precision=jax.lax.Precision.HIGHEST)
        y = y + b[None, :, None, None]
        y = (gamma[None, :, None, None] * (y - r_mean[None, :, None, None])
             / jnp.sqrt(r_var + EPS)[None, :, None, None]
             + beta[None, :, None, None])
        y = jnp.maximum(y, 0.0)
    return y


if __name__ == "__main__":
    key = jax.random.PRNGKey(0)
    k_x, k_p = jax.random.split(key)

    N, Cin, H, W = 2, 4, 16, 16
    Cout = 8

    x = jax.random.normal(k_x, (N, Cin, H, W), jnp.float32)
    raw_params = make_params(k_p, Cin, Cout)

    out = double_conv_pallas(x, raw_params, tile_h=8)
    out = jax.block_until_ready(out)
    assert out.shape == (N, Cout, H, W), out.shape

    # Tight check against a reference using the same bf16 rounding points as the
    # kernel (accumulation/BN/ReLU in f32 in both).
    ref_q = reference_double_conv(x, raw_params, quantize_to=jnp.bfloat16)
    err_q = float(jnp.max(jnp.abs(out - ref_q)))
    assert jnp.allclose(out, ref_q, atol=5e-3, rtol=5e-3), err_q

    # Loose sanity check against the pure-f32 reference (bound on bf16 quant error).
    ref_f = reference_double_conv(x, raw_params)
    err_f = float(jnp.max(jnp.abs(out - ref_f)))
    assert jnp.allclose(out, ref_f, atol=1e-1, rtol=1e-1), err_f

    print("KERNEL_OK")
</pallas_src>

<mosaic_0001>
module attributes {stable_mosaic.version = 11 : i64} {
  func.func @_double_conv_kernel(%arg0: i32, %arg1: i32, %arg2: memref<1x8x24x128xbf16, #tpu.memory_space<vmem>>, %arg3: memref<1x4x24x128xbf16, #tpu.memory_space<vmem>>, %arg4: memref<3x384x128xbf16, #tpu.memory_space<vmem>>, %arg5: memref<1x128xf32, #tpu.memory_space<vmem>>, %arg6: memref<1x128xf32, #tpu.memory_space<vmem>>, %arg7: memref<3x384x128xbf16, #tpu.memory_space<vmem>>, %arg8: memref<1x128xf32, #tpu.memory_space<vmem>>, %arg9: memref<1x128xf32, #tpu.memory_space<vmem>>, %arg10: memref<1x8x16x128xf32, #tpu.memory_space<vmem>>, %arg11: memref<12x24x128xbf16, #tpu.memory_space<vmem>>, %arg12: memref<10x24x128xbf16, #tpu.memory_space<vmem>>) attributes {dimension_semantics = [#tpu.dimension_semantics<parallel>, #tpu.dimension_semantics<parallel>], iteration_bounds = array<i64: 2, 2>, scalar_prefetch = 0 : i64, scratch_operands = 2 : i64, tpu.core_type = #tpu.core_type<tc>, window_params = [{transform_indices = @transform_0, window_bounds = array<i64: 1, 8, 24, 128>}, {transform_indices = @transform_1, window_bounds = array<i64: 1, 4, 24, 128>}, {pipeline_mode = #tpu.pipeline_mode<synchronous>, transform_indices = @transform_2, window_bounds = array<i64: 3, 384, 128>}, {pipeline_mode = #tpu.pipeline_mode<synchronous>, transform_indices = @transform_3, window_bounds = array<i64: 1, 128>}, {pipeline_mode = #tpu.pipeline_mode<synchronous>, transform_indices = @transform_4, window_bounds = array<i64: 1, 128>}, {pipeline_mode = #tpu.pipeline_mode<synchronous>, transform_indices = @transform_5, window_bounds = array<i64: 3, 384, 128>}, {pipeline_mode = #tpu.pipeline_mode<synchronous>, transform_indices = @transform_6, window_bounds = array<i64: 1, 128>}, {pipeline_mode = #tpu.pipeline_mode<synchronous>, transform_indices = @transform_7, window_bounds = array<i64: 1, 128>}, {transform_indices = @transform_8, window_bounds = array<i64: 1, 8, 16, 128>}]} {
    %c0 = arith.constant 0 : index
    %c0_0 = arith.constant 0 : index
    %c0_1 = arith.constant 0 : index
    %c0_2 = arith.constant 0 : index
    %0 = vector.load %arg2[%c0, %c0_0, %c0_1, %c0_2] : memref<1x8x24x128xbf16, #tpu.memory_space<vmem>>, vector<1x8x24x128xbf16>
    %1 = vector.shape_cast %0 : vector<1x8x24x128xbf16> to vector<8x24x128xbf16>
    %c0_3 = arith.constant 0 : index
    %c0_4 = arith.constant 0 : index
    %c0_5 = arith.constant 0 : index
    %2 = vector.load %arg11[%c0_3, %c0_4, %c0_5] : memref<12x24x128xbf16, #tpu.memory_space<vmem>>, vector<8x24x128xbf16>
    tpu.vector_store %arg11[%c0_3, %c0_4, %c0_5], %1 {strides = array<i32>} : memref<12x24x128xbf16, #tpu.memory_space<vmem>>, vector<8x24x128xbf16>,
    %c0_6 = arith.constant 0 : index
    %c0_7 = arith.constant 0 : index
    %c0_8 = arith.constant 0 : index
    %c0_9 = arith.constant 0 : index
    %3 = vector.load %arg3[%c0_6, %c0_7, %c0_8, %c0_9] : memref<1x4x24x128xbf16, #tpu.memory_space<vmem>>, vector<1x4x24x128xbf16>
    %4 = vector.shape_cast %3 : vector<1x4x24x128xbf16> to vector<4x24x128xbf16>
    %c8 = arith.constant 8 : index
    %c0_10 = arith.constant 0 : index
    %c0_11 = arith.constant 0 : index
    %5 = vector.load %arg11[%c8, %c0_10, %c0_11] : memref<12x24x128xbf16, #tpu.memory_space<vmem>>, vector<4x24x128xbf16>
    tpu.vector_store %arg11[%c8, %c0_10, %c0_11], %4 {strides = array<i32>} : memref<12x24x128xbf16, #tpu.memory_space<vmem>>, vector<4x24x128xbf16>,
    %c0_12 = arith.constant 0 : index
    %c0_13 = arith.constant 0 : index
    %c0_14 = arith.constant 0 : index
    %6 = vector.load %arg11[%c0_12, %c0_13, %c0_14] : memref<12x24x128xbf16, #tpu.memory_space<vmem>>, vector<10x24x128xbf16>
    %7 = vector.extract_strided_slice %6 {offsets = [0, 0, 0], sizes = [10, 16, 128], strides = [1, 1, 1]} : vector<10x24x128xbf16> to vector<10x16x128xbf16>
    %8 = vector.extract_strided_slice %6 {offsets = [0, 1, 0], sizes = [10, 16, 128], strides = [1, 1, 1]} : vector<10x24x128xbf16> to vector<10x16x128xbf16>
    %9 = vector.extract_strided_slice %6 {offsets = [0, 2, 0], sizes = [10, 16, 128], strides = [1, 1, 1]} : vector<10x24x128xbf16> to vector<10x16x128xbf16>
    %10 = tpu.concatenate %7, %8, %9 in 2 : vector<10x16x128xbf16>, vector<10x16x128xbf16>, vector<10x16x128xbf16> -> vector<10x16x384xbf16>
    %11 = vector.shape_cast %10 : vector<10x16x384xbf16> to vector<160x384xbf16>
    %c0_15 = arith.constant 0 : index
    %c0_16 = arith.constant 0 : index
    %c0_17 = arith.constant 0 : index
    %12 = vector.load %arg4[%c0_15, %c0_16, %c0_17] : memref<3x384x128xbf16, #tpu.memory_space<vmem>>, vector<1x384x128xbf16>
    %13 = vector.shape_cast %12 : vector<1x384x128xbf16> to vector<384x128xbf16>
    %cst = arith.constant dense<0.000000e+00> : vector<160x128xf32>
    %14 = tpu.matmul %11, %13, %cst {dimension_numbers = #tpu.dot_dimension_numbers<[1], [0], [0], [1], [0, 0, 1, 1], [], []>} : vector<160x384xbf16>, vector<384x128xbf16>, vector<160x128xf32> -> vector<160x128xf32>
    %c1 = arith.constant 1 : index
    %c0_18 = arith.constant 0 : index
    %c0_19 = arith.constant 0 : index
    %15 = vector.load %arg11[%c1, %c0_18, %c0_19] : memref<12x24x128xbf16, #tpu.memory_space<vmem>>, vector<10x24x128xbf16>
    %16 = vector.extract_strided_slice %15 {offsets = [0, 0, 0], sizes = [10, 16, 128], strides = [1, 1, 1]} : vector<10x24x128xbf16> to vector<10x16x128xbf16>
    %17 = vector.extract_strided_slice %15 {offsets = [0, 1, 0], sizes = [10, 16, 128], strides = [1, 1, 1]} : vector<10x24x128xbf16> to vector<10x16x128xbf16>
    %18 = vector.extract_strided_slice %15 {offsets = [0, 2, 0], sizes = [10, 16, 128], strides = [1, 1, 1]} : vector<10x24x128xbf16> to vector<10x16x128xbf16>
    %19 = tpu.concatenate %16, %17, %18 in 2 : vector<10x16x128xbf16>, vector<10x16x128xbf16>, vector<10x16x128xbf16> -> vector<10x16x384xbf16>
    %20 = vector.shape_cast %19 : vector<10x16x384xbf16> to vector<160x384xbf16>
    %c1_20 = arith.constant 1 : index
    %c0_21 = arith.constant 0 : index
    %c0_22 = arith.constant 0 : index
    %21 = vector.load %arg4[%c1_20, %c0_21, %c0_22] : memref<3x384x128xbf16, #tpu.memory_space<vmem>>, vector<1x384x128xbf16>
    %22 = vector.shape_cast %21 : vector<1x384x128xbf16> to vector<384x128xbf16>
    %cst_23 = arith.constant dense<0.000000e+00> : vector<160x128xf32>
    %23 = tpu.matmul %20, %22, %cst_23 {dimension_numbers = #tpu.dot_dimension_numbers<[1], [0], [0], [1], [0, 0, 1, 1], [], []>} : vector<160x384xbf16>, vector<384x128xbf16>, vector<160x128xf32> -> vector<160x128xf32>
    %24 = arith.addf %14, %23 : vector<160x128xf32>
    %c2 = arith.constant 2 : index
    %c0_24 = arith.constant 0 : index
    %c0_25 = arith.constant 0 : index
    %25 = vector.load %arg11[%c2, %c0_24, %c0_25] : memref<12x24x128xbf16, #tpu.memory_space<vmem>>, vector<10x24x128xbf16>
    %26 = vector.extract_strided_slice %25 {offsets = [0, 0, 0], sizes = [10, 16, 128], strides = [1, 1, 1]} : vector<10x24x128xbf16> to vector<10x16x128xbf16>
    %27 = vector.extract_strided_slice %25 {offsets = [0, 1, 0], sizes = [10, 16, 128], strides = [1, 1, 1]} : vector<10x24x128xbf16> to vector<10x16x128xbf16>
    %28 = vector.extract_strided_slice %25 {offsets = [0, 2, 0], sizes = [10, 16, 128], strides = [1, 1, 1]} : vector<10x24x128xbf16> to vector<10x16x128xbf16>
    %29 = tpu.concatenate %26, %27, %28 in 2 : vector<10x16x128xbf16>, vector<10x16x128xbf16>, vector<10x16x128xbf16> -> vector<10x16x384xbf16>
    %30 = vector.shape_cast %29 : vector<10x16x384xbf16> to vector<160x384xbf16>
    %c2_26 = arith.constant 2 : index
    %c0_27 = arith.constant 0 : index
    %c0_28 = arith.constant 0 : index
    %31 = vector.load %arg4[%c2_26, %c0_27, %c0_28] : memref<3x384x128xbf16, #tpu.memory_space<vmem>>, vector<1x384x128xbf16>
    %32 = vector.shape_cast %31 : vector<1x384x128xbf16> to vector<384x128xbf16>
    %cst_29 = arith.constant dense<0.000000e+00> : vector<160x128xf32>
    %33 = tpu.matmul %30, %32, %cst_29 {dimension_numbers = #tpu.dot_dimension_numbers<[1], [0], [0], [1], [0, 0, 1, 1], [], []>} : vector<160x384xbf16>, vector<384x128xbf16>, vector<160x128xf32> -> vector<160x128xf32>
    %34 = arith.addf %24, %33 : vector<160x128xf32>
    %c0_30 = arith.constant 0 : index
    %c0_31 = arith.constant 0 : index
    %35 = vector.load %arg5[%c0_30, %c0_31] : memref<1x128xf32, #tpu.memory_space<vmem>>, vector<1x128xf32>
    %36 = vector.broadcast %35 : vector<1x128xf32> to vector<160x128xf32>
    %37 = arith.mulf %34, %36 : vector<160x128xf32>
    %c0_32 = arith.constant 0 : index
    %c0_33 = arith.constant 0 : index
    %38 = vector.load %arg6[%c0_32, %c0_33] : memref<1x128xf32, #tpu.memory_space<vmem>>, vector<1x128xf32>
    %39 = vector.broadcast %38 : vector<1x128xf32> to vector<160x128xf32>
    %40 = arith.addf %37, %39 : vector<160x128xf32>
    %cst_34 = arith.constant 0.000000e+00 : f32
    %41 = vector.broadcast %cst_34 : f32 to vector<160x128xf32>
    %42 = arith.maximumf %40, %41 : vector<160x128xf32>
    %43 = vector.shape_cast %42 : vector<160x128xf32> to vector<10x16x128xf32>
    %44 = tpu.iota {dimensions = array<i32: 0>} : vector<10x1x1xi32>
    %c8_i32 = arith.constant 8 : i32
    %45 = arith.muli %arg1, %c8_i32 : i32
    %c1_i32 = arith.constant 1 : i32
    %46 = arith.subi %45, %c1_i32 : i32
    %47 = vector.broadcast %46 : i32 to vector<10x1x1xi32>
    %48 = arith.addi %44, %47 : vector<10x1x1xi32>
    %49 = tpu.iota {dimensions = array<i32: 1>} : vector<1x16x1xi32>
    %c0_i32 = arith.constant 0 : i32
    %50 = vector.broadcast %c0_i32 : i32 to vector<10x1x1xi32>
    %51 = arith.cmpi sge, %48, %50 : vector<10x1x1xi32>
    %c16_i32 = arith.constant 16 : i32
    %52 = vector.broadcast %c16_i32 : i32 to vector<10x1x1xi32>
    %53 = arith.cmpi slt, %48, %52 : vector<10x1x1xi32>
    %54 = arith.andi %51, %53 : vector<10x1x1xi1>
    %c16_i32_35 = arith.constant 16 : i32
    %55 = vector.broadcast %c16_i32_35 : i32 to vector<1x16x1xi32>
    %56 = arith.cmpi slt, %49, %55 : vector<1x16x1xi32>
    %57 = vector.broadcast %54 : vector<10x1x1xi1> to vector<10x16x1xi1>
    %58 = vector.broadcast %56 : vector<1x16x1xi1> to vector<10x16x1xi1>
    %59 = arith.andi %57, %58 : vector<10x16x1xi1>
    %cst_36 = arith.constant 0.000000e+00 : f32
    %60 = vector.shape_cast %59 : vector<10x16x1xi1> to vector<10x16x1xi1>
    %61 = vector.broadcast %60 : vector<10x16x1xi1> to vector<10x16x128xi1>
    %62 = vector.broadcast %cst_36 : f32 to vector<10x16x128xf32>
    %63 = arith.select %61, %43, %62 : vector<10x16x128xi1>, vector<10x16x128xf32>
    %cst_37 = arith.constant 0.000000e+00 : bf16
    %64 = vector.broadcast %cst_37 : bf16 to vector<10x1x128xbf16>
    %c0_38 = arith.constant 0 : index
    %c0_39 = arith.constant 0 : index
    %c0_40 = arith.constant 0 : index
    %65 = vector.load %arg12[%c0_38, %c0_39, %c0_40] : memref<10x24x128xbf16, #tpu.memory_space<vmem>>, vector<10x1x128xbf16>
    tpu.vector_store %arg12[%c0_38, %c0_39, %c0_40], %64 {strides = array<i32>} : memref<10x24x128xbf16, #tpu.memory_space<vmem>>, vector<10x1x128xbf16>,
    %66 = arith.truncf %63 : vector<10x16x128xf32> to vector<10x16x128xbf16>
    %c0_41 = arith.constant 0 : index
    %c1_42 = arith.constant 1 : index
    %c0_43 = arith.constant 0 : index
    %67 = vector.load %arg12[%c0_41, %c1_42, %c0_43] : memref<10x24x128xbf16, #tpu.memory_space<vmem>>, vector<10x16x128xbf16>
    tpu.vector_store %arg12[%c0_41, %c1_42, %c0_43], %66 {strides = array<i32>} : memref<10x24x128xbf16, #tpu.memory_space<vmem>>, vector<10x16x128xbf16>,
    %c0_44 = arith.constant 0 : index
    %c17 = arith.constant 17 : index
    %c0_45 = arith.constant 0 : index
    %68 = vector.load %arg12[%c0_44, %c17, %c0_45] : memref<10x24x128xbf16, #tpu.memory_space<vmem>>, vector<10x1x128xbf16>
    tpu.vector_store %arg12[%c0_44, %c17, %c0_45], %64 {strides = array<i32>} : memref<10x24x128xbf16, #tpu.memory_space<vmem>>, vector<10x1x128xbf16>,
    %c0_46 = arith.constant 0 : index
    %c0_47 = arith.constant 0 : index
    %c0_48 = arith.constant 0 : index
    %69 = vector.load %arg12[%c0_46, %c0_47, %c0_48] : memref<10x24x128xbf16, #tpu.memory_space<vmem>>, vector<8x24x128xbf16>
    %70 = vector.extract_strided_slice %69 {offsets = [0, 0, 0], sizes = [8, 16, 128], strides = [1, 1, 1]} : vector<8x24x128xbf16> to vector<8x16x128xbf16>
    %71 = vector.extract_strided_slice %69 {offsets = [0, 1, 0], sizes = [8, 16, 128], strides = [1, 1, 1]} : vector<8x24x128xbf16> to vector<8x16x128xbf16>
    %72 = vector.extract_strided_slice %69 {offsets = [0, 2, 0], sizes = [8, 16, 128], strides = [1, 1, 1]} : vector<8x24x128xbf16> to vector<8x16x128xbf16>
    %73 = tpu.concatenate %70, %71, %72 in 2 : vector<8x16x128xbf16>, vector<8x16x128xbf16>, vector<8x16x128xbf16> -> vector<8x16x384xbf16>
    %74 = vector.shape_cast %73 : vector<8x16x384xbf16> to vector<128x384xbf16>
    %c0_49 = arith.constant 0 : index
    %c0_50 = arith.constant 0 : index
    %c0_51 = arith.constant 0 : index
    %75 = vector.load %arg7[%c0_49, %c0_50, %c0_51] : memref<3x384x128xbf16, #tpu.memory_space<vmem>>, vector<1x384x128xbf16>
    %76 = vector.shape_cast %75 : vector<1x384x128xbf16> to vector<384x128xbf16>
    %cst_52 = arith.constant dense<0.000000e+00> : vector<128x128xf32>
    %77 = tpu.matmul %74, %76, %cst_52 {dimension_numbers = #tpu.dot_dimension_numbers<[1], [0], [0], [1], [0, 0, 1, 1], [], []>} : vector<128x384xbf16>, vector<384x128xbf16>, vector<128x128xf32> -> vector<128x128xf32>
    %c1_53 = arith.constant 1 : index
    %c0_54 = arith.constant 0 : index
    %c0_55 = arith.constant 0 : index
    %78 = vector.load %arg12[%c1_53, %c0_54, %c0_55] : memref<10x24x128xbf16, #tpu.memory_space<vmem>>, vector<8x24x128xbf16>
    %79 = vector.extract_strided_slice %78 {offsets = [0, 0, 0], sizes = [8, 16, 128], strides = [1, 1, 1]} : vector<8x24x128xbf16> to vector<8x16x128xbf16>
    %80 = vector.extract_strided_slice %78 {offsets = [0, 1, 0], sizes = [8, 16, 128], strides = [1, 1, 1]} : vector<8x24x128xbf16> to vector<8x16x128xbf16>
    %81 = vector.extract_strided_slice %78 {offsets = [0, 2, 0], sizes = [8, 16, 128], strides = [1, 1, 1]} : vector<8x24x128xbf16> to vector<8x16x128xbf16>
    %82 = tpu.concatenate %79, %80, %81 in 2 : vector<8x16x128xbf16>, vector<8x16x128xbf16>, vector<8x16x128xbf16> -> vector<8x16x384xbf16>
    %83 = vector.shape_cast %82 : vector<8x16x384xbf16> to vector<128x384xbf16>
    %c1_56 = arith.constant 1 : index
    %c0_57 = arith.constant 0 : index
    %c0_58 = arith.constant 0 : index
    %84 = vector.load %arg7[%c1_56, %c0_57, %c0_58] : memref<3x384x128xbf16, #tpu.memory_space<vmem>>, vector<1x384x128xbf16>
    %85 = vector.shape_cast %84 : vector<1x384x128xbf16> to vector<384x128xbf16>
    %cst_59 = arith.constant dense<0.000000e+00> : vector<128x128xf32>
    %86 = tpu.matmul %83, %85, %cst_59 {dimension_numbers = #tpu.dot_dimension_numbers<[1], [0], [0], [1], [0, 0, 1, 1], [], []>} : vector<128x384xbf16>, vector<384x128xbf16>, vector<128x128xf32> -> vector<128x128xf32>
    %87 = arith.addf %77, %86 : vector<128x128xf32>
    %c2_60 = arith.constant 2 : index
    %c0_61 = arith.constant 0 : index
    %c0_62 = arith.constant 0 : index
    %88 = vector.load %arg12[%c2_60, %c0_61, %c0_62] : memref<10x24x128xbf16, #tpu.memory_space<vmem>>, vector<8x24x128xbf16>
    %89 = vector.extract_strided_slice %88 {offsets = [0, 0, 0], sizes = [8, 16, 128], strides = [1, 1, 1]} : vector<8x24x128xbf16> to vector<8x16x128xbf16>
    %90 = vector.extract_strided_slice %88 {offsets = [0, 1, 0], sizes = [8, 16, 128], strides = [1, 1, 1]} : vector<8x24x128xbf16> to vector<8x16x128xbf16>
    %91 = vector.extract_strided_slice %88 {offsets = [0, 2, 0], sizes = [8, 16, 128], strides = [1, 1, 1]} : vector<8x24x128xbf16> to vector<8x16x128xbf16>
    %92 = tpu.concatenate %89, %90, %91 in 2 : vector<8x16x128xbf16>, vector<8x16x128xbf16>, vector<8x16x128xbf16> -> vector<8x16x384xbf16>
    %93 = vector.shape_cast %92 : vector<8x16x384xbf16> to vector<128x384xbf16>
    %c2_63 = arith.constant 2 : index
    %c0_64 = arith.constant 0 : index
    %c0_65 = arith.constant 0 : index
    %94 = vector.load %arg7[%c2_63, %c0_64, %c0_65] : memref<3x384x128xbf16, #tpu.memory_space<vmem>>, vector<1x384x128xbf16>
    %95 = vector.shape_cast %94 : vector<1x384x128xbf16> to vector<384x128xbf16>
    %cst_66 = arith.constant dense<0.000000e+00> : vector<128x128xf32>
    %96 = tpu.matmul %93, %95, %cst_66 {dimension_numbers = #tpu.dot_dimension_numbers<[1], [0], [0], [1], [0, 0, 1, 1], [], []>} : vector<128x384xbf16>, vector<384x128xbf16>, vector<128x128xf32> -> vector<128x128xf32>
    %97 = arith.addf %87, %96 : vector<128x128xf32>
    %c0_67 = arith.constant 0 : index
    %c0_68 = arith.constant 0 : index
    %98 = vector.load %arg8[%c0_67, %c0_68] : memref<1x128xf32, #tpu.memory_space<vmem>>, vector<1x128xf32>
    %99 = vector.broadcast %98 : vector<1x128xf32> to vector<128x128xf32>
    %100 = arith.mulf %97, %99 : vector<128x128xf32>
    %c0_69 = arith.constant 0 : index
    %c0_70 = arith.constant 0 : index
    %101 = vector.load %arg9[%c0_69, %c0_70] : memref<1x128xf32, #tpu.memory_space<vmem>>, vector<1x128xf32>
    %102 = vector.broadcast %101 : vector<1x128xf32> to vector<128x128xf32>
    %103 = arith.addf %100, %102 : vector<128x128xf32>
    %cst_71 = arith.constant 0.000000e+00 : f32
    %104 = vector.broadcast %cst_71 : f32 to vector<128x128xf32>
    %105 = arith.maximumf %103, %104 : vector<128x128xf32>
    %106 = vector.shape_cast %105 : vector<128x128xf32> to vector<1x8x16x128xf32>
    %c0_72 = arith.constant 0 : index
    %c0_73 = arith.constant 0 : index
    %c0_74 = arith.constant 0 : index
    %c0_75 = arith.constant 0 : index
    %107 = vector.load %arg10[%c0_72, %c0_73, %c0_74, %c0_75] : memref<1x8x16x128xf32, #tpu.memory_space<vmem>>, vector<1x8x16x128xf32>
    tpu.vector_store %arg10[%c0_72, %c0_73, %c0_74, %c0_75], %106 {strides = array<i32>} : memref<1x8x16x128xf32, #tpu.memory_space<vmem>>, vector<1x8x16x128xf32>,
    return
  }
  func.func @transform_0(%arg0: i32, %arg1: i32) -> (i32, i32, i32, i32) {
    %c0_i32 = arith.constant 0 : i32
    %c0_i32_0 = arith.constant 0 : i32
    %c0_i32_1 = arith.constant 0 : i32
    return %arg0, %arg1, %c0_i32, %c0_i32_0 : i32, i32, i32, i32
  }
  func.func @transform_1(%arg0: i32, %arg1: i32) -> (i32, i32, i32, i32) {
    %c1_i32 = arith.constant 1 : i32
    %0 = arith.addi %arg1, %c1_i32 : i32
    %c2_i32 = arith.constant 2 : i32
    %1 = arith.muli %0, %c2_i32 : i32
    %c0_i32 = arith.constant 0 : i32
    %c0_i32_0 = arith.constant 0 : i32
    %c0_i32_1 = arith.constant 0 : i32
    return %arg0, %1, %c0_i32, %c0_i32_0 : i32, i32, i32, i32
  }
  func.func @transform_2(%arg0: i32, %arg1: i32) -> (i32, i32, i32) {
    %c0_i32 = arith.constant 0 : i32
    %c0_i32_0 = arith.constant 0 : i32
    %c0_i32_1 = arith.constant 0 : i32
    %c0_i32_2 = arith.constant 0 : i32
    return %c0_i32, %c0_i32_0, %c0_i32_1 : i32, i32, i32
  }
  func.func @transform_3(%arg0: i32, %arg1: i32) -> (i32, i32) {
    %c0_i32 = arith.constant 0 : i32
    %c0_i32_0 = arith.constant 0 : i32
    %c0_i32_1 = arith.constant 0 : i32
    return %c0_i32, %c0_i32_0 : i32, i32
  }
  func.func @transform_4(%arg0: i32, %arg1: i32) -> (i32, i32) {
    %c0_i32 = arith.constant 0 : i32
    %c0_i32_0 = arith.constant 0 : i32
    %c0_i32_1 = arith.constant 0 : i32
    return %c0_i32, %c0_i32_0 : i32, i32
  }
  func.func @transform_5(%arg0: i32, %arg1: i32) -> (i32, i32, i32) {
    %c0_i32 = arith.constant 0 : i32
    %c0_i32_0 = arith.constant 0 : i32
    %c0_i32_1 = arith.constant 0 : i32
    %c0_i32_2 = arith.constant 0 : i32
    return %c0_i32, %c0_i32_0, %c0_i32_1 : i32, i32, i32
  }
  func.func @transform_6(%arg0: i32, %arg1: i32) -> (i32, i32) {
    %c0_i32 = arith.constant 0 : i32
    %c0_i32_0 = arith.constant 0 : i32
    %c0_i32_1 = arith.constant 0 : i32
    return %c0_i32, %c0_i32_0 : i32, i32
  }
  func.func @transform_7(%arg0: i32, %arg1: i32) -> (i32, i32) {
    %c0_i32 = arith.constant 0 : i32
    %c0_i32_0 = arith.constant 0 : i32
    %c0_i32_1 = arith.constant 0 : i32
    return %c0_i32, %c0_i32_0 : i32, i32
  }
  func.func @transform_8(%arg0: i32, %arg1: i32) -> (i32, i32, i32, i32) {
    %c0_i32 = arith.constant 0 : i32
    %c0_i32_0 = arith.constant 0 : i32
    %c0_i32_1 = arith.constant 0 : i32
    return %arg0, %arg1, %c0_i32, %c0_i32_0 : i32, i32, i32, i32
  }
}

</mosaic_0001>

<llo_original>
// kernel: double_conv_pallas.1
$region0: #{double_conv_pallas.1}
  #allocation0 [shape = 'u32[]', space=smem, size = 0x4, offset = 0x4, fixed_abs, tag = 'smem constant byte address 0x4 - core index']
  #allocation1 [shape = 'u32[144,128]{1,0:T(1,128)}', space=vmem, size = 0x12000, scoped, tag = 'internal scratch']
  #allocation2 [shape = 'bf16[12,24,128]{2,1,0:T(8,128)(2,1)}', space=vmem, size = 0x12000, scoped, tag = 'scratch operand']
  #allocation3 [shape = 'bf16[10,24,128]{2,1,0:T(8,128)(2,1)}', space=vmem, size = 0xf000, scoped, tag = 'scratch operand']
  %s0 = inlined_call_operand.vmem [shape: bf16[2,20,24,128], index: 0, kind: input, shape index: {}, may-alias: {0,1}]
  %s1 = inlined_call_operand.vmem [shape: bf16[2,20,24,128], index: 1, kind: input, shape index: {}, may-alias: {0,1}]
  %s2 = inlined_call_operand.vmem [shape: bf16[3,384,128], index: 2, kind: input, shape index: {}]
  %s3 = inlined_call_operand.vmem [shape: f32[1,128], index: 3, kind: input, shape index: {}]
  %s4 = inlined_call_operand.vmem [shape: f32[1,128], index: 4, kind: input, shape index: {}]
  %s5 = inlined_call_operand.vmem [shape: bf16[3,384,128], index: 5, kind: input, shape index: {}]
  %s6 = inlined_call_operand.vmem [shape: f32[1,128], index: 6, kind: input, shape index: {}]
  %s7 = inlined_call_operand.vmem [shape: f32[1,128], index: 7, kind: input, shape index: {}]
  %s8 = inlined_call_operand.vmem [shape: f32[2,16,16,128], index: 8, kind: output, shape index: {}]
  %s9 = sld [smem:[#allocation0]]
  $region65: #{double_conv_pallas.1} parent=0
    _
  %s11 = ssub.s32 1, %s9
  %s12 = scalar_select 0, %s11, %s9
  loop: start=0, step=1, limit=6
  $region2: #{double_conv_pallas.1} parent=0 // loop_pre_header
    _
  $region3: #{double_conv_pallas.1} parent=0 // loop_header
    %s14 = sphi 0, %s18
    %p15 = scmp.ge.s32.totalorder %s14, 6
    %s21 = sphi 0, %s33
    %s22 = sphi 0, %s29
    %s23 = sphi 0, %s21
    %s24 = sphi 0, %s22
    %s25 = sphi 0, %s23
    %s26 = sphi 0, %s24
    %s38 = sphi 0, %s40
    %s41 = sphi 0, %s38
    %s42 = sphi 0, %s41
    %s58 = sphi 0, %s42
    %s70 = sphi 0, %s72
    %s73 = sphi 0, %s70
    %s74 = sphi 0, %s73
    %s90 = sphi 0, %s74
    %s94 = sphi 0, %s94
    %s96 = sphi 0, %s94
    %s97 = sphi 0, %s96
    %s111 = sphi 0, %s97
    %s115 = sphi 0, %s115
    %s117 = sphi 0, %s115
    %s118 = sphi 0, %s117
    %s132 = sphi 0, %s118
    %s136 = sphi 0, %s136
    %s138 = sphi 0, %s136
    %s139 = sphi 0, %s138
    %s153 = sphi 0, %s139
    %s157 = sphi 0, %s157
    %s159 = sphi 0, %s157
    %s160 = sphi 0, %s159
    %s174 = sphi 0, %s160
    %s178 = sphi 0, %s178
    %s180 = sphi 0, %s178
    %s181 = sphi 0, %s180
    %s195 = sphi 0, %s181
    %s199 = sphi 0, %s199
    %s201 = sphi 0, %s199
    %s202 = sphi 0, %s201
    %s216 = sphi 0, %s202
    %s224 = sphi 0, %s226
    %s227 = sphi 0, %s224
    %s228 = sphi 0, %s227
    %s244 = sphi 0, %s228
  $region4: #{double_conv_pallas.1} parent=0 // loop_header_branch
    %17 = sbr.rel (%p15) target = $region8
  $region5: #{double_conv_pallas.1} parent=0 // loop_body
    %s19 = ssub.s32 %s14, 1
    %s20 = ssub.s32 %s14, 2
    %s27 = sadd.s32 1, %s22
    %p28 = scmp.ge.s32.totalorder %s27, 2
    %s29 = scalar_select %p28, 0, %s27
    %s30 = sadd.s32 1, %s21
    %s31 = scalar_select %p28, %s30, %s21
    %p32 = scmp.ge.s32.totalorder %s31, 2
    %s33 = scalar_select %p32, 0, %s31
    %s34 = ssub.s32 %s21, %s33
    %s35 = ssub.s32 %s22, %s29
    %s36 = sor.u32 %s34, %s35
    %p37 = scmp.eq.s32.totalorder %s36, 0
    %s39 = sadd.s32 %s38, 1
    %s40 = scalar_select %p37, %s38, %s39
    %p43 = pneg %p37
    %p44 = scmp.eq.s32.totalorder %s14, 3
    %p45 = por %p43, %p44
    %p46 = scmp.ne.s32.totalorder %s38, %s41
    %p47 = scmp.eq.s32.totalorder %s14, 0
    %p48 = por %p46, %p47
    %p49 = scmp.ne.s32.totalorder %s38, %s41
    %p50 = scmp.eq.s32.totalorder %s19, 3
    %p51 = por %p49, %p50
    %p52 = scmp.ne.s32.totalorder %s41, %s42
    %p53 = scmp.eq.s32.totalorder %s19, 0
    %p54 = por %p52, %p53
    %p55 = scmp.ne.s32.totalorder %s41, %s42
    %p56 = scmp.eq.s32.totalorder %s20, 3
    %p57 = por %p55, %p56
    %p59 = scmp.ne.s32.totalorder %s42, %s58
    %p60 = scmp.eq.s32.totalorder %s20, 0
    %p61 = por %p59, %p60
    %s62 = sadd.s32 %s22, 1
    %s63 = smul.u32 %s62, 2
    %s64 = sadd.s32 %s29, 1
    %s65 = smul.u32 %s64, 2
    %s66 = ssub.s32 %s21, %s33
    %s67 = ssub.s32 %s63, %s65
    %s68 = sor.u32 %s66, %s67
    %p69 = scmp.eq.s32.totalorder %s68, 0
    %s71 = sadd.s32 %s70, 1
    %s72 = scalar_select %p69, %s70, %s71
    %p75 = pneg %p69
    %p76 = scmp.eq.s32.totalorder %s14, 3
    %p77 = por %p75, %p76
    %p78 = scmp.ne.s32.totalorder %s70, %s73
    %p79 = scmp.eq.s32.totalorder %s14, 0
    %p80 = por %p78, %p79
    %p81 = scmp.ne.s32.totalorder %s70, %s73
    %p82 = scmp.eq.s32.totalorder %s19, 3
    %p83 = por %p81, %p82
    %p84 = scmp.ne.s32.totalorder %s73, %s74
    %p85 = scmp.eq.s32.totalorder %s19, 0
    %p86 = por %p84, %p85
    %p87 = scmp.ne.s32.totalorder %s73, %s74
    %p88 = scmp.eq.s32.totalorder %s20, 3
    %p89 = por %p87, %p88
    %p91 = scmp.ne.s32.totalorder %s74, %s90
    %p92 = scmp.eq.s32.totalorder %s20, 0
    %p93 = por %p91, %p92
    %s95 = sadd.s32 %s94, 1
    %p98 = scmp.eq.s32.totalorder %s14, 3
    %p99 = scmp.ne.s32.totalorder %s94, %s96
    %p100 = scmp.eq.s32.totalorder %s14, 0
    %p101 = por %p99, %p100
    %p102 = scmp.ne.s32.totalorder %s94, %s96
    %p103 = scmp.eq.s32.totalorder %s19, 3
    %p104 = por %p102, %p103
    %p105 = scmp.ne.s32.totalorder %s96, %s97
    %p106 = scmp.eq.s32.totalorder %s19, 0
    %p107 = por %p105, %p106
    %p108 = scmp.ne.s32.totalorder %s96, %s97
    %p109 = scmp.eq.s32.totalorder %s20, 3
    %p110 = por %p108, %p109
    %p112 = scmp.ne.s32.totalorder %s97, %s111
    %p113 = scmp.eq.s32.totalorder %s20, 0
    %p114 = por %p112, %p113
    %s116 = sadd.s32 %s115, 1
    %p119 = scmp.eq.s32.totalorder %s14, 3
    %p120 = scmp.ne.s32.totalorder %s115, %s117
    %p121 = scmp.eq.s32.totalorder %s14, 0
    %p122 = por %p120, %p121
    %p123 = scmp.ne.s32.totalorder %s115, %s117
    %p124 = scmp.eq.s32.totalorder %s19, 3
    %p125 = por %p123, %p124
    %p126 = scmp.ne.s32.totalorder %s117, %s118
    %p127 = scmp.eq.s32.totalorder %s19, 0
    %p128 = por %p126, %p127
    %p129 = scmp.ne.s32.totalorder %s117, %s118
    %p130 = scmp.eq.s32.totalorder %s20, 3
    %p131 = por %p129, %p130
    %p133 = scmp.ne.s32.totalorder %s118, %s132
    %p134 = scmp.eq.s32.totalorder %s20, 0
    %p135 = por %p133, %p134
    %s137 = sadd.s32 %s136, 1
    %p140 = scmp.eq.s32.totalorder %s14, 3
    %p141 = scmp.ne.s32.totalorder %s136, %s138
    %p142 = scmp.eq.s32.totalorder %s14, 0
    %p143 = por %p141, %p142
    %p144 = scmp.ne.s32.totalorder %s136, %s138
    %p145 = scmp.eq.s32.totalorder %s19, 3
    %p146 = por %p144, %p145
    %p147 = scmp.ne.s32.totalorder %s138, %s139
    %p148 = scmp.eq.s32.totalorder %s19, 0
    %p149 = por %p147, %p148
    %p150 = scmp.ne.s32.totalorder %s138, %s139
    %p151 = scmp.eq.s32.totalorder %s20, 3
    %p152 = por %p150, %p151
    %p154 = scmp.ne.s32.totalorder %s139, %s153
    %p155 = scmp.eq.s32.totalorder %s20, 0
    %p156 = por %p154, %p155
    %s158 = sadd.s32 %s157, 1
    %p161 = scmp.eq.s32.totalorder %s14, 3
    %p162 = scmp.ne.s32.totalorder %s157, %s159
    %p163 = scmp.eq.s32.totalorder %s14, 0
    %p164 = por %p162, %p163
    %p165 = scmp.ne.s32.totalorder %s157, %s159
    %p166 = scmp.eq.s32.totalorder %s19, 3
    %p167 = por %p165, %p166
    %p168 = scmp.ne.s32.totalorder %s159, %s160
    %p169 = scmp.eq.s32.totalorder %s19, 0
    %p170 = por %p168, %p169
    %p171 = scmp.ne.s32.totalorder %s159, %s160
    %p172 = scmp.eq.s32.totalorder %s20, 3
    %p173 = por %p171, %p172
    %p175 = scmp.ne.s32.totalorder %s160, %s174
    %p176 = scmp.eq.s32.totalorder %s20, 0
    %p177 = por %p175, %p176
    %s179 = sadd.s32 %s178, 1
    %p182 = scmp.eq.s32.totalorder %s14, 3
    %p183 = scmp.ne.s32.totalorder %s178, %s180
    %p184 = scmp.eq.s32.totalorder %s14, 0
    %p185 = por %p183, %p184
    %p186 = scmp.ne.s32.totalorder %s178, %s180
    %p187 = scmp.eq.s32.totalorder %s19, 3
    %p188 = por %p186, %p187
    %p189 = scmp.ne.s32.totalorder %s180, %s181
    %p190 = scmp.eq.s32.totalorder %s19, 0
    %p191 = por %p189, %p190
    %p192 = scmp.ne.s32.totalorder %s180, %s181
    %p193 = scmp.eq.s32.totalorder %s20, 3
    %p194 = por %p192, %p193
    %p196 = scmp.ne.s32.totalorder %s181, %s195
    %p197 = scmp.eq.s32.totalorder %s20, 0
    %p198 = por %p196, %p197
    %s200 = sadd.s32 %s199, 1
    %p203 = scmp.eq.s32.totalorder %s14, 3
    %p204 = scmp.ne.s32.totalorder %s199, %s201
    %p205 = scmp.eq.s32.totalorder %s14, 0
    %p206 = por %p204, %p205
    %p207 = scmp.ne.s32.totalorder %s199, %s201
    %p208 = scmp.eq.s32.totalorder %s19, 3
    %p209 = por %p207, %p208
    %p210 = scmp.ne.s32.totalorder %s201, %s202
    %p211 = scmp.eq.s32.totalorder %s19, 0
    %p212 = por %p210, %p211
    %p213 = scmp.ne.s32.totalorder %s201, %s202
    %p214 = scmp.eq.s32.totalorder %s20, 3
    %p215 = por %p213, %p214
    %p217 = scmp.ne.s32.totalorder %s202, %s216
    %p218 = scmp.eq.s32.totalorder %s20, 0
    %p219 = por %p217, %p218
    %s220 = ssub.s32 %s21, %s33
    %s221 = ssub.s32 %s22, %s29
    %s222 = sor.u32 %s220, %s221
    %p223 = scmp.eq.s32.totalorder %s222, 0
    %s225 = sadd.s32 %s224, 1
    %s226 = scalar_select %p223, %s224, %s225
    %p229 = pneg %p223
    %p230 = scmp.eq.s32.totalorder %s14, 3
    %p231 = por %p229, %p230
    %p232 = scmp.ne.s32.totalorder %s224, %s227
    %p233 = scmp.eq.s32.totalorder %s14, 0
    %p234 = por %p232, %p233
    %p235 = scmp.ne.s32.totalorder %s224, %s227
    %p236 = scmp.eq.s32.totalorder %s19, 3
    %p237 = por %p235, %p236
    %p238 = scmp.ne.s32.totalorder %s227, %s228
    %p239 = scmp.eq.s32.totalorder %s19, 0
    %p240 = por %p238, %p239
    %p241 = scmp.ne.s32.totalorder %s227, %s228
    %p242 = scmp.eq.s32.totalorder %s20, 3
    %p243 = por %p241, %p242
    %p245 = scmp.ne.s32.totalorder %s228, %s244
    %p246 = scmp.eq.s32.totalorder %s20, 0
    %p247 = por %p245, %p246
    %p248 = scmp.le.s32.totalorder 1, %s14
    %p249 = scmp.lt.s32.totalorder %s14, 5
    %p250 = pnand %p248, %p249
    %p251 = pneg %p250
    // Predicated region
    $region9: #{double_conv_pallas.1} parent=5 // pred_check
      _
    $region10: #{double_conv_pallas.1} parent=5 // pred_check_branch
      %253 = sbr.rel (%p250) target = $region12
    $region11: #{double_conv_pallas.1} parent=5 // pred_region
      %s254 = ssub.s32 %s14, 1
      // Predicated region
      $region13: #{double_conv_pallas.1} parent=11 // pred_check
        %p255 = pneg %p107
      $region14: #{double_conv_pallas.1} parent=11 // pred_check_branch
        %257 = sbr.rel (%p255) target = $region16
      $region15: #{double_conv_pallas.1} parent=11 // pred_region
        _
      $region16: #{double_conv_pallas.1} parent=11 // pred_fallthru
        _
      // Predicated region
      $region17: #{double_conv_pallas.1} parent=11 // pred_check
        %p258 = pneg %p128
      $region18: #{double_conv_pallas.1} parent=11 // pred_check_branch
        %260 = sbr.rel (%p258) target = $region20
      $region19: #{double_conv_pallas.1} parent=11 // pred_region
        _
      $region20: #{double_conv_pallas.1} parent=11 // pred_fallthru
        _
      // Predicated region
      $region21: #{double_conv_pallas.1} parent=11 // pred_check
        %p261 = pneg %p149
      $region22: #{double_conv_pallas.1} parent=11 // pred_check_branch
        %263 = sbr.rel (%p261) target = $region24
      $region23: #{double_conv_pallas.1} parent=11 // pred_region
        _
      $region24: #{double_conv_pallas.1} parent=11 // pred_fallthru
        _
      // Predicated region
      $region25: #{double_conv_pallas.1} parent=11 // pred_check
        %p264 = pneg %p170
      $region26: #{double_conv_pallas.1} parent=11 // pred_check_branch
        %266 = sbr.rel (%p264) target = $region28
      $region27: #{double_conv_pallas.1} parent=11 // pred_region
        _
      $region28: #{double_conv_pallas.1} parent=11 // pred_fallthru
        _
      // Predicated region
      $region29: #{double_conv_pallas.1} parent=11 // pred_check
        %p267 = pneg %p191
      $region30: #{double_conv_pallas.1} parent=11 // pred_check_branch
        %269 = sbr.rel (%p267) target = $region32
      $region31: #{double_conv_pallas.1} parent=11 // pred_region
        _
      $region32: #{double_conv_pallas.1} parent=11 // pred_fallthru
        _
      // Predicated region
      $region33: #{double_conv_pallas.1} parent=11 // pred_check
        %p270 = pneg %p212
      $region34: #{double_conv_pallas.1} parent=11 // pred_check_branch
        %272 = sbr.rel (%p270) target = $region36
      $region35: #{double_conv_pallas.1} parent=11 // pred_region
        _
      $region36: #{double_conv_pallas.1} parent=11 // pred_fallthru
        _
    $region12: #{double_conv_pallas.1} parent=5 // pred_fallthru
      _
    %p273 = scmp.lt.s32.totalorder %s14, 4
    // Predicated region
    $region37: #{double_conv_pallas.1} parent=5 // pred_check
      %p274 = pneg %p273
    $region38: #{double_conv_pallas.1} parent=5 // pred_check_branch
      %276 = sbr.rel (%p274) target = $region40
    $region39: #{double_conv_pallas.1} parent=5 // pred_region
      // Predicated region
      $region41: #{double_conv_pallas.1} parent=39 // pred_check
        %p277 = pneg %p48
      $region42: #{double_conv_pallas.1} parent=39 // pred_check_branch
        %279 = sbr.rel (%p277) target = $region44
      $region43: #{double_conv_pallas.1} parent=39 // pred_region
        %s280 = smul.u32 8, %s22
        %s281 = ssub.s32 20, %s280
        %p282 = scmp.lt.s32.totalorder %s281, 8
        %s283 = scalar_select %p282, %s281, 8
        %s284 = smul.u32 64, %s283
        %s285 = smul.u32 %s284, 3
        %p286 = scmp.lt.s32.totalorder %s21, 1
        %s287 = scalar_select %p286, %s21, 1
        %p288 = scmp.lt.s32.totalorder %s280, 19
        %s289 = scalar_select %p288, %s280, 19
        %s290 = smul.addr %s289, 3
        %s291 = smul.addr %s287, 60
        %s292 = sadd.s32 %s290, %s291
        %s293 = smul.addr %s292, 4
        %s294 = scalar_lea.vmem %s0, %s293
        %s295 = smul.u32 8, %s22
        %s296 = ssub.s32 20, %s295
        %p297 = scmp.lt.s32.totalorder %s296, 8
        %s298 = scalar_select %p297, %s296, 8
        %s299 = smul.u32 64, %s298
        %s300 = smul.u32 %s299, 3
      $region44: #{double_conv_pallas.1} parent=39 // pred_fallthru
        _
      // Predicated region
      $region45: #{double_conv_pallas.1} parent=39 // pred_check
        %p301 = pneg %p80
      $region46: #{double_conv_pallas.1} parent=39 // pred_check_branch
        %303 = sbr.rel (%p301) target = $region48
      $region47: #{double_conv_pallas.1} parent=39 // pred_region
        %s304 = sadd.s32 %s22, 1
        %s305 = smul.u32 %s304, 2
        %s306 = smul.u32 4, %s305
        %p307 = scmp.lt.s32.totalorder %s21, 1
        %s308 = scalar_select %p307, %s21, 1
        %p309 = scmp.lt.s32.totalorder %s306, 19
        %s310 = scalar_select %p309, %s306, 19
        %s311 = smul.addr %s310, 3
        %s312 = smul.addr %s308, 60
        %s313 = sadd.s32 %s311, %s312
        %s314 = smul.addr %s313, 4
        %s315 = scalar_lea.vmem %s1, %s314
        %s316 = sadd.s32 %s22, 1
        %s317 = smul.u32 %s316, 2
        %s318 = smul.u32 4, %s317
      $region48: #{double_conv_pallas.1} parent=39 // pred_fallthru
        _
    $region40: #{double_conv_pallas.1} parent=5 // pred_fallthru
      _
    %p319 = scmp.le.s32.totalorder 1, %s14
    %p320 = scmp.lt.s32.totalorder %s14, 5
    %p321 = pnand %p319, %p320
    %p322 = pneg %p321
    // Predicated region
    $region49: #{double_conv_pallas.1} parent=5 // pred_check
      _
    $region50: #{double_conv_pallas.1} parent=5 // pred_check_branch
      %324 = sbr.rel (%p321) target = $region52
    $region51: #{double_conv_pallas.1} parent=5 // pred_region
      %s325 = ssub.s32 %s14, 1
      %s326 = smul.u32 8, %s24
      %s327 = ssub.s32 20, %s326
      %p328 = scmp.lt.s32.totalorder %s327, 8
      %s329 = scalar_select %p328, %s327, 8
      %s330 = smul.u32 64, %s329
      %s331 = smul.u32 %s330, 3
      %p332 = scmp.lt.s32.totalorder %s23, 1
      %s333 = scalar_select %p332, %s23, 1
      %p334 = scmp.lt.s32.totalorder %s326, 19
      %s335 = scalar_select %p334, %s326, 19
      %s336 = smul.addr %s335, 3
      %s337 = smul.addr %s333, 60
      %s338 = sadd.s32 %s336, %s337
      %s339 = smul.addr %s338, 4
      %s340 = scalar_lea.vmem %s0, %s339
      %p341 = pneg %p54
      %p342 = pneg %p51
      %s343 = sadd.s32 %s24, 1
      %s344 = smul.u32 %s343, 2
      %s345 = smul.u32 4, %s344
      %p346 = scmp.lt.s32.totalorder %s23, 1
      %s347 = scalar_select %p346, %s23, 1
      %p348 = scmp.lt.s32.totalorder %s345, 19
      %s349 = scalar_select %p348, %s345, 19
      %s350 = smul.addr %s349, 3
      %s351 = smul.addr %s347, 60
      %s352 = sadd.s32 %s350, %s351
      %s353 = smul.addr %s352, 4
      %s354 = scalar_lea.vmem %s1, %s353
      %p355 = pneg %p86
      %p356 = pneg %p83
      %p357 = pneg %p107
      %p358 = pneg %p104
      %p359 = pneg %p128
      %p360 = pneg %p125
      %p361 = pneg %p149
      %p362 = pneg %p146
      %p363 = pneg %p170
      %p364 = pneg %p167
      %p365 = pneg %p191
      %p366 = pneg %p188
      %p367 = pneg %p212
      %p368 = pneg %p209
      %p369 = pneg %p240
      %p370 = pneg %p237
      %s371 = smul.u32 8, %s24
      %p372 = scmp.lt.s32.totalorder %s23, 1
      %s373 = scalar_select %p372, %s23, 1
      %p374 = scmp.lt.s32.totalorder %s371, 15
      %s375 = scalar_select %p374, %s371, 15
      %s376 = smul.addr %s375, 2
      %s377 = smul.addr %s373, 32
      %s378 = sadd.s32 %s376, %s377
      %s379 = smul.addr %s378, 8
      %s380 = scalar_lea.vmem %s8, %s379
      %s381 = smul.u32 8, %s24
      %s382 = ssub.s32 20, %s381
      %p383 = scmp.lt.s32.totalorder %s382, 8
      %s384 = scalar_select %p383, %s382, 8
      %s385 = smul.u32 64, %s384
      %s386 = smul.u32 %s385, 3
      %p387 = scmp.lt.s32.totalorder %s23, 1
      %s388 = scalar_select %p387, %s23, 1
      %p389 = scmp.lt.s32.totalorder %s381, 19
      %s390 = scalar_select %p389, %s381, 19
      %s391 = smul.addr %s390, 3
      %s392 = smul.addr %s388, 60
      %s393 = sadd.s32 %s391, %s392
      %s394 = smul.addr %s393, 4
      %s395 = scalar_lea.vmem %s0, %s394
      %s396 = smul.u32 8, %s24
      %s397 = ssub.s32 20, %s396
      %p398 = scmp.lt.s32.totalorder %s397, 8
      %s399 = scalar_select %p398, %s397, 8
      %s400 = smul.u32 64, %s399
      %s401 = smul.u32 %s400, 3
      %s402 = sadd.s32 %s24, 1
      %s403 = smul.u32 %s402, 2
      %s404 = smul.u32 4, %s403
      %p405 = scmp.lt.s32.totalorder %s23, 1
      %s406 = scalar_select %p405, %s23, 1
      %p407 = scmp.lt.s32.totalorder %s404, 19
      %s408 = scalar_select %p407, %s404, 19
      %s409 = smul.addr %s408, 3
      %s410 = smul.addr %s406, 60
      %s411 = sadd.s32 %s409, %s410
      %s412 = smul.addr %s411, 4
      %s413 = scalar_lea.vmem %s1, %s412
      %s414 = sadd.s32 %s24, 1
      %s415 = smul.u32 %s414, 2
      %s416 = smul.u32 4, %s415
      %s417 = smul.u32 8, %s24
      %p418 = scmp.lt.s32.totalorder %s23, 1
      %s419 = scalar_select %p418, %s23, 1
      %p420 = scmp.lt.s32.totalorder %s417, 15
      %s421 = scalar_select %p420, %s417, 15
      %s422 = smul.addr %s421, 2
      %s423 = smul.addr %s419, 32
      %s424 = sadd.s32 %s422, %s423
      %s425 = smul.addr %s424, 8
      %s426 = scalar_lea.vmem %s8, %s425
      %s427 = smul.u32 8, %s24
      %v429 = vld [vmem:[%s395] sm:$0xf]
      %v430 = vld [vmem:[%s395 + $0x4] sm:$0xf]
      %v431 = vld [vmem:[%s395 + $0x8] sm:$0xf]
      %v432 = vld [vmem:[%s395 + $0xc] sm:$0xf]
      %v433 = vld [vmem:[%s395 + $0x10] sm:$0xf]
      %v434 = vld [vmem:[%s395 + $0x14] sm:$0xf]
      %v435 = vld [vmem:[%s395 + $0x18] sm:$0xf]
      %v436 = vld [vmem:[%s395 + $0x1c] sm:$0xf]
      %v437 = vld [vmem:[%s395 + $0x20] sm:$0xf]
      %v438 = vld [vmem:[%s395 + $0x24] sm:$0xf]
      %v439 = vld [vmem:[%s395 + $0x28] sm:$0xf]
      %v440 = vld [vmem:[%s395 + $0x2c] sm:$0xf]
      %v441 = vld [vmem:[%s395 + $0x30] sm:$0xf]
      %v442 = vld [vmem:[%s395 + $0x34] sm:$0xf]
      %v443 = vld [vmem:[%s395 + $0x38] sm:$0xf]
      %v444 = vld [vmem:[%s395 + $0x3c] sm:$0xf]
      %v445 = vld [vmem:[%s395 + $0x40] sm:$0xf]
      %v446 = vld [vmem:[%s395 + $0x44] sm:$0xf]
      %v447 = vld [vmem:[%s395 + $0x48] sm:$0xf]
      %v448 = vld [vmem:[%s395 + $0x4c] sm:$0xf]
      %v449 = vld [vmem:[%s395 + $0x50] sm:$0xf]
      %v450 = vld [vmem:[%s395 + $0x54] sm:$0xf]
      %v451 = vld [vmem:[%s395 + $0x58] sm:$0xf]
      %v452 = vld [vmem:[%s395 + $0x5c] sm:$0xf]
      %453 = vst [vmem:[#allocation2] sm:$0xf] %v429
      %454 = vst [vmem:[#allocation2 + $0x4] sm:$0xf] %v430
      %455 = vst [vmem:[#allocation2 + $0x8] sm:$0xf] %v431
      %456 = vst [vmem:[#allocation2 + $0xc] sm:$0xf] %v432
      %457 = vst [vmem:[#allocation2 + $0x10] sm:$0xf] %v433
      %458 = vst [vmem:[#allocation2 + $0x14] sm:$0xf] %v434
      %459 = vst [vmem:[#allocation2 + $0x18] sm:$0xf] %v435
      %460 = vst [vmem:[#allocation2 + $0x1c] sm:$0xf] %v436
      %461 = vst [vmem:[#allocation2 + $0x20] sm:$0xf] %v437
      %462 = vst [vmem:[#allocation2 + $0x24] sm:$0xf] %v438
      %463 = vst [vmem:[#allocation2 + $0x28] sm:$0xf] %v439
      %464 = vst [vmem:[#allocation2 + $0x2c] sm:$0xf] %v440
      %465 = vst [vmem:[#allocation2 + $0x30] sm:$0xf] %v441
      %466 = vst [vmem:[#allocation2 + $0x34] sm:$0xf] %v442
      %467 = vst [vmem:[#allocation2 + $0x38] sm:$0xf] %v443
      %468 = vst [vmem:[#allocation2 + $0x3c] sm:$0xf] %v444
      %469 = vst [vmem:[#allocation2 + $0x40] sm:$0xf] %v445
      %470 = vst [vmem:[#allocation2 + $0x44] sm:$0xf] %v446
      %471 = vst [vmem:[#allocation2 + $0x48] sm:$0xf] %v447
      %472 = vst [vmem:[#allocation2 + $0x4c] sm:$0xf] %v448
      %473 = vst [vmem:[#allocation2 + $0x50] sm:$0xf] %v449
      %474 = vst [vmem:[#allocation2 + $0x54] sm:$0xf] %v450
      %475 = vst [vmem:[#allocation2 + $0x58] sm:$0xf] %v451
      %476 = vst [vmem:[#allocation2 + $0x5c] sm:$0xf] %v452
      %v477 = vld [vmem:[%s413] sm:$0xf]
      %v478 = vld [vmem:[%s413 + $0x4] sm:$0xf]
      %v479 = vld [vmem:[%s413 + $0x8] sm:$0xf]
      %v480 = vld [vmem:[%s413 + $0xc] sm:$0xf]
      %v481 = vld [vmem:[%s413 + $0x10] sm:$0xf]
      %v482 = vld [vmem:[%s413 + $0x14] sm:$0xf]
      %v483 = vld [vmem:[%s413 + $0x18] sm:$0xf]
      %v484 = vld [vmem:[%s413 + $0x1c] sm:$0xf]
      %v485 = vld [vmem:[%s413 + $0x20] sm:$0xf]
      %v486 = vld [vmem:[%s413 + $0x24] sm:$0xf]
      %v487 = vld [vmem:[%s413 + $0x28] sm:$0xf]
      %v488 = vld [vmem:[%s413 + $0x2c] sm:$0xf]
      %s489 = scalar_lea.vmem [#allocation2], 96
      %490 = vst [vmem:[%s489] sm:$0xf] %v477
      %491 = vst [vmem:[%s489 + $0x4] sm:$0xf] %v478
      %492 = vst [vmem:[%s489 + $0x8] sm:$0xf] %v479
      %493 = vst [vmem:[%s489 + $0xc] sm:$0xf] %v480
      %494 = vst [vmem:[%s489 + $0x10] sm:$0xf] %v481
      %495 = vst [vmem:[%s489 + $0x14] sm:$0xf] %v482
      %496 = vst [vmem:[%s489 + $0x18] sm:$0xf] %v483
      %497 = vst [vmem:[%s489 + $0x1c] sm:$0xf] %v484
      %498 = vst [vmem:[%s489 + $0x20] sm:$0xf] %v485
      %499 = vst [vmem:[%s489 + $0x24] sm:$0xf] %v486
      %500 = vst [vmem:[%s489 + $0x28] sm:$0xf] %v487
      %501 = vst [vmem:[%s489 + $0x2c] sm:$0xf] %v488
      %v502 = vld [vmem:[#allocation2] sm:$0xf]
      %v503 = vld [vmem:[#allocation2 + $0x4] sm:$0xf]
      %v504 = vld [vmem:[#allocation2 + $0x8] sm:$0xf]
      %v505 = vld [vmem:[#allocation2 + $0xc] sm:$0xf]
      %v506 = vld [vmem:[#allocation2 + $0x10] sm:$0xf]
      %v507 = vld [vmem:[#allocation2 + $0x14] sm:$0xf]
      %v508 = vld [vmem:[#allocation2 + $0x18] sm:$0xf]
      %v509 = vld [vmem:[#allocation2 + $0x1c] sm:$0xf]
      %v510 = vld [vmem:[#allocation2 + $0x20] sm:$0xf]
      %v511 = vld [vmem:[#allocation2 + $0x24] sm:$0xf]
      %v512 = vld [vmem:[#allocation2 + $0x28] sm:$0xf]
      %v513 = vld [vmem:[#allocation2 + $0x2c] sm:$0xf]
      %v514 = vld [vmem:[#allocation2 + $0x30] sm:$0xf]
      %v515 = vld [vmem:[#allocation2 + $0x34] sm:$0xf]
      %v516 = vld [vmem:[#allocation2 + $0x38] sm:$0xf]
      %v517 = vld [vmem:[#allocation2 + $0x3c] sm:$0xf]
      %v518 = vld [vmem:[#allocation2 + $0x40] sm:$0xf]
      %v519 = vld [vmem:[#allocation2 + $0x44] sm:$0xf]
      %v520 = vld [vmem:[#allocation2 + $0x48] sm:$0xf]
      %v521 = vld [vmem:[#allocation2 + $0x4c] sm:$0xf]
      %v522 = vld [vmem:[#allocation2 + $0x50] sm:$0xf]
      %v523 = vld [vmem:[#allocation2 + $0x54] sm:$0xf]
      %v524 = vld [vmem:[#allocation2 + $0x58] sm:$0xf]
      %v525 = vld [vmem:[#allocation2 + $0x5c] sm:$0xf]
      %v526 = vld [vmem:[#allocation2 + $0x60] sm:$0xf]
      %v527 = vld [vmem:[#allocation2 + $0x64] sm:$0xf]
      %v528 = vld [vmem:[#allocation2 + $0x68] sm:$0xf]
      %v529 = vld [vmem:[#allocation2 + $0x6c] sm:$0xf]
      %v530 = vld [vmem:[#allocation2 + $0x70] sm:$0xf]
      %v531 = vld [vmem:[#allocation2 + $0x74] sm:$0xf]
      %v552 = vunpack.c.l.b16 %v502
      %v553 = vunpack.c.l.b16 %v503
      %v554 = vunpack.c.l.b16 %v505
      %v555 = vunpack.c.l.b16 %v506
      %v556 = vunpack.c.l.b16 %v508
      %v557 = vunpack.c.l.b16 %v509
      %v558 = vunpack.c.l.b16 %v511
      %v559 = vunpack.c.l.b16 %v512
      %v560 = vunpack.c.l.b16 %v514
      %v561 = vunpack.c.l.b16 %v515
      %v562 = vunpack.c.l.b16 %v517
      %v563 = vunpack.c.l.b16 %v518
      %v564 = vunpack.c.l.b16 %v520
      %v565 = vunpack.c.l.b16 %v521
      %v566 = vunpack.c.l.b16 %v523
      %v567 = vunpack.c.l.b16 %v524
      %v568 = vunpack.c.l.b16 %v526
      %v569 = vunpack.c.l.b16 %v527
      %v570 = vunpack.c.l.b16 %v529
      %v571 = vunpack.c.l.b16 %v530
      %v572 = vpack.c.b16 %v553, %v552
      %v573 = vpack.c.b16 %v555, %v554
      %v574 = vpack.c.b16 %v557, %v556
      %v575 = vpack.c.b16 %v559, %v558
      %v576 = vpack.c.b16 %v561, %v560
      %v577 = vpack.c.b16 %v563, %v562
      %v578 = vpack.c.b16 %v565, %v564
      %v579 = vpack.c.b16 %v567, %v566
      %v580 = vpack.c.b16 %v569, %v568
      %v581 = vpack.c.b16 %v571, %v570
      %v602 = vunpack.c.l.b16 %v504
      %v603 = vunpack.c.l.b16 %v507
      %v604 = vunpack.c.l.b16 %v510
      %v605 = vunpack.c.l.b16 %v513
      %v606 = vunpack.c.l.b16 %v516
      %v607 = vunpack.c.l.b16 %v519
      %v608 = vunpack.c.l.b16 %v522
      %v609 = vunpack.c.l.b16 %v525
      %v610 = vunpack.c.l.b16 %v528
      %v611 = vunpack.c.l.b16 %v531
      %v612 = vpack.c.b16 %v602, %v602
      %v613 = vpack.c.b16 %v603, %v603
      %v614 = vpack.c.b16 %v604, %v604
      %v615 = vpack.c.b16 %v605, %v605
      %v616 = vpack.c.b16 %v606, %v606
      %v617 = vpack.c.b16 %v607, %v607
      %v618 = vpack.c.b16 %v608, %v608
      %v619 = vpack.c.b16 %v609, %v609
      %v620 = vpack.c.b16 %v610, %v610
      %v621 = vpack.c.b16 %v611, %v611
      %vm622 = vsmask.f32 7424
      %v624 = vshrl.u32 %v572, 16
      %v626 = vshll.u32 %v572, 16
      %v628 = vrot.slane %v626, 1
      %v629 = vor.u32 %v624, %v628
      %v631 = vshll.u32 %v612, 16
      %v633 = vrot.slane %v631, 1
      %v634 = vsel %vm622, %v629, %v633
      %v636 = vshrl.u32 %v573, 16
      %v638 = vshll.u32 %v573, 16
      %v640 = vrot.slane %v638, 1
      %v641 = vor.u32 %v636, %v640
      %v643 = vshll.u32 %v613, 16
      %v645 = vrot.slane %v643, 1
      %v646 = vsel %vm622, %v641, %v645
      %v648 = vshrl.u32 %v574, 16
      %v650 = vshll.u32 %v574, 16
      %v652 = vrot.slane %v650, 1
      %v653 = vor.u32 %v648, %v652
      %v655 = vshll.u32 %v614, 16
      %v657 = vrot.slane %v655, 1
      %v658 = vsel %vm622, %v653, %v657
      %v660 = vshrl.u32 %v575, 16
      %v662 = vshll.u32 %v575, 16
      %v664 = vrot.slane %v662, 1
      %v665 = vor.u32 %v660, %v664
      %v667 = vshll.u32 %v615, 16
      %v669 = vrot.slane %v667, 1
      %v670 = vsel %vm622, %v665, %v669
      %v672 = vshrl.u32 %v576, 16
      %v674 = vshll.u32 %v576, 16
      %v676 = vrot.slane %v674, 1
      %v677 = vor.u32 %v672, %v676
      %v679 = vshll.u32 %v616, 16
      %v681 = vrot.slane %v679, 1
      %v682 = vsel %vm622, %v677, %v681
      %v684 = vshrl.u32 %v577, 16
      %v686 = vshll.u32 %v577, 16
      %v688 = vrot.slane %v686, 1
      %v689 = vor.u32 %v684, %v688
      %v691 = vshll.u32 %v617, 16
      %v693 = vrot.slane %v691, 1
      %v694 = vsel %vm622, %v689, %v693
      %v696 = vshrl.u32 %v578, 16
      %v698 = vshll.u32 %v578, 16
      %v700 = vrot.slane %v698, 1
      %v701 = vor.u32 %v696, %v700
      %v703 = vshll.u32 %v618, 16
      %v705 = vrot.slane %v703, 1
      %v706 = vsel %vm622, %v701, %v705
      %v708 = vshrl.u32 %v579, 16
      %v710 = vshll.u32 %v579, 16
      %v712 = vrot.slane %v710, 1
      %v713 = vor.u32 %v708, %v712
      %v715 = vshll.u32 %v619, 16
      %v717 = vrot.slane %v715, 1
      %v718 = vsel %vm622, %v713, %v717
      %v720 = vshrl.u32 %v580, 16
      %v722 = vshll.u32 %v580, 16
      %v724 = vrot.slane %v722, 1
      %v725 = vor.u32 %v720, %v724
      %v727 = vshll.u32 %v620, 16
      %v729 = vrot.slane %v727, 1
      %v730 = vsel %vm622, %v725, %v729
      %v732 = vshrl.u32 %v581, 16
      %v734 = vshll.u32 %v581, 16
      %v736 = vrot.slane %v734, 1
      %v737 = vor.u32 %v732, %v736
      %v739 = vshll.u32 %v621, 16
      %v741 = vrot.slane %v739, 1
      %v742 = vsel %vm622, %v737, %v741
      %vm753 = vcmask 1046528
      %v754 = vrot.slane %v572, 1
      %v755 = vrot.slane %v612, 1
      %v756 = vsel %vm753, %v754, %v755
      %v757 = vrot.slane %v573, 1
      %v758 = vrot.slane %v613, 1
      %v759 = vsel %vm753, %v757, %v758
      %v760 = vrot.slane %v574, 1
      %v761 = vrot.slane %v614, 1
      %v762 = vsel %vm753, %v760, %v761
      %v763 = vrot.slane %v575, 1
      %v764 = vrot.slane %v615, 1
      %v765 = vsel %vm753, %v763, %v764
      %v766 = vrot.slane %v576, 1
      %v767 = vrot.slane %v616, 1
      %v768 = vsel %vm753, %v766, %v767
      %v769 = vrot.slane %v577, 1
      %v770 = vrot.slane %v617, 1
      %v771 = vsel %vm753, %v769, %v770
      %v772 = vrot.slane %v578, 1
      %v773 = vrot.slane %v618, 1
      %v774 = vsel %vm753, %v772, %v773
      %v775 = vrot.slane %v579, 1
      %v776 = vrot.slane %v619, 1
      %v777 = vsel %vm753, %v775, %v776
      %v778 = vrot.slane %v580, 1
      %v779 = vrot.slane %v620, 1
      %v780 = vsel %vm753, %v778, %v779
      %v781 = vrot.slane %v581, 1
      %v782 = vrot.slane %v621, 1
      %v783 = vsel %vm753, %v781, %v782
      %v794 = vld [vmem:[%s2] sm:$0xf]
      %v795 = vld [vmem:[%s2 + $0x4] sm:$0xf]
      %v796 = vld [vmem:[%s2 + $0x8] sm:$0xf]
      %v797 = vld [vmem:[%s2 + $0xc] sm:$0xf]
      %v798 = vld [vmem:[%s2 + $0x10] sm:$0xf]
      %v799 = vld [vmem:[%s2 + $0x14] sm:$0xf]
      %v800 = vld [vmem:[%s2 + $0x18] sm:$0xf]
      %v801 = vld [vmem:[%s2 + $0x1c] sm:$0xf]
      %v802 = vld [vmem:[%s2 + $0x20] sm:$0xf]
      %v803 = vld [vmem:[%s2 + $0x24] sm:$0xf]
      %v804 = vld [vmem:[%s2 + $0x28] sm:$0xf]
      %v805 = vld [vmem:[%s2 + $0x2c] sm:$0xf]
      %v806 = vld [vmem:[%s2 + $0x30] sm:$0xf]
      %v807 = vld [vmem:[%s2 + $0x34] sm:$0xf]
      %v808 = vld [vmem:[%s2 + $0x38] sm:$0xf]
      %v809 = vld [vmem:[%s2 + $0x3c] sm:$0xf]
      %v810 = vld [vmem:[%s2 + $0x40] sm:$0xf]
      %v811 = vld [vmem:[%s2 + $0x44] sm:$0xf]
      %v812 = vld [vmem:[%s2 + $0x48] sm:$0xf]
      %v813 = vld [vmem:[%s2 + $0x4c] sm:$0xf]
      %v814 = vld [vmem:[%s2 + $0x50] sm:$0xf]
      %v815 = vld [vmem:[%s2 + $0x54] sm:$0xf]
      %v816 = vld [vmem:[%s2 + $0x58] sm:$0xf]
      %v817 = vld [vmem:[%s2 + $0x5c] sm:$0xf]
      %v818 = vld [vmem:[%s2 + $0x60] sm:$0xf]
      %v819 = vld [vmem:[%s2 + $0x64] sm:$0xf]
      %v820 = vld [vmem:[%s2 + $0x68] sm:$0xf]
      %v821 = vld [vmem:[%s2 + $0x6c] sm:$0xf]
      %v822 = vld [vmem:[%s2 + $0x70] sm:$0xf]
      %v823 = vld [vmem:[%s2 + $0x74] sm:$0xf]
      %v824 = vld [vmem:[%s2 + $0x78] sm:$0xf]
      %v825 = vld [vmem:[%s2 + $0x7c] sm:$0xf]
      %v826 = vld [vmem:[%s2 + $0x80] sm:$0xf]
      %v827 = vld [vmem:[%s2 + $0x84] sm:$0xf]
      %v828 = vld [vmem:[%s2 + $0x88] sm:$0xf]
      %v829 = vld [vmem:[%s2 + $0x8c] sm:$0xf]
      %v830 = vld [vmem:[%s2 + $0x90] sm:$0xf]
      %v831 = vld [vmem:[%s2 + $0x94] sm:$0xf]
      %v832 = vld [vmem:[%s2 + $0x98] sm:$0xf]
      %v833 = vld [vmem:[%s2 + $0x9c] sm:$0xf]
      %v834 = vld [vmem:[%s2 + $0xa0] sm:$0xf]
      %v835 = vld [vmem:[%s2 + $0xa4] sm:$0xf]
      %v836 = vld [vmem:[%s2 + $0xa8] sm:$0xf]
      %v837 = vld [vmem:[%s2 + $0xac] sm:$0xf]
      %v838 = vld [vmem:[%s2 + $0xb0] sm:$0xf]
      %v839 = vld [vmem:[%s2 + $0xb4] sm:$0xf]
      %v840 = vld [vmem:[%s2 + $0xb8] sm:$0xf]
      %v841 = vld [vmem:[%s2 + $0xbc] sm:$0xf]
      %s842 = scalar_lea.vmem [#allocation2], 12
      %v843 = vld [vmem:[%s842] sm:$0xf]
      %v844 = vld [vmem:[%s842 + $0x4] sm:$0xf]
      %v845 = vld [vmem:[%s842 + $0x8] sm:$0xf]
      %v846 = vld [vmem:[%s842 + $0xc] sm:$0xf]
      %v847 = vld [vmem:[%s842 + $0x10] sm:$0xf]
      %v848 = vld [vmem:[%s842 + $0x14] sm:$0xf]
      %v849 = vld [vmem:[%s842 + $0x18] sm:$0xf]
      %v850 = vld [vmem:[%s842 + $0x1c] sm:$0xf]
      %v851 = vld [vmem:[%s842 + $0x20] sm:$0xf]
      %v852 = vld [vmem:[%s842 + $0x24] sm:$0xf]
      %v853 = vld [vmem:[%s842 + $0x28] sm:$0xf]
      %v854 = vld [vmem:[%s842 + $0x2c] sm:$0xf]
      %v855 = vld [vmem:[%s842 + $0x30] sm:$0xf]
      %v856 = vld [vmem:[%s842 + $0x34] sm:$0xf]
      %v857 = vld [vmem:[%s842 + $0x38] sm:$0xf]
      %v858 = vld [vmem:[%s842 + $0x3c] sm:$0xf]
      %v859 = vld [vmem:[%s842 + $0x40] sm:$0xf]
      %v860 = vld [vmem:[%s842 + $0x44] sm:$0xf]
      %v861 = vld [vmem:[%s842 + $0x48] sm:$0xf]
      %v862 = vld [vmem:[%s842 + $0x4c] sm:$0xf]
      %v863 = vld [vmem:[%s842 + $0x50] sm:$0xf]
      %v864 = vld [vmem:[%s842 + $0x54] sm:$0xf]
      %v865 = vld [vmem:[%s842 + $0x58] sm:$0xf]
      %v866 = vld [vmem:[%s842 + $0x5c] sm:$0xf]
      %v867 = vld [vmem:[%s842 + $0x60] sm:$0xf]
      %v868 = vld [vmem:[%s842 + $0x64] sm:$0xf]
      %v869 = vld [vmem:[%s842 + $0x68] sm:$0xf]
      %v870 = vld [vmem:[%s842 + $0x6c] sm:$0xf]
      %v871 = vld [vmem:[%s842 + $0x70] sm:$0xf]
      %v872 = vld [vmem:[%s842 + $0x74] sm:$0xf]
      %v893 = vunpack.c.l.b16 %v843
      %v894 = vunpack.c.l.b16 %v844
      %v895 = vunpack.c.l.b16 %v846
      %v896 = vunpack.c.l.b16 %v847
      %v897 = vunpack.c.l.b16 %v849
      %v898 = vunpack.c.l.b16 %v850
      %v899 = vunpack.c.l.b16 %v852
      %v900 = vunpack.c.l.b16 %v853
      %v901 = vunpack.c.l.b16 %v855
      %v902 = vunpack.c.l.b16 %v856
      %v903 = vunpack.c.l.b16 %v858
      %v904 = vunpack.c.l.b16 %v859
      %v905 = vunpack.c.l.b16 %v861
      %v906 = vunpack.c.l.b16 %v862
      %v907 = vunpack.c.l.b16 %v864
      %v908 = vunpack.c.l.b16 %v865
      %v909 = vunpack.c.l.b16 %v867
      %v910 = vunpack.c.l.b16 %v868
      %v911 = vunpack.c.l.b16 %v870
      %v912 = vunpack.c.l.b16 %v871
      %v913 = vpack.c.b16 %v894, %v893
      %v914 = vpack.c.b16 %v896, %v895
      %v915 = vpack.c.b16 %v898, %v897
      %v916 = vpack.c.b16 %v900, %v899
      %v917 = vpack.c.b16 %v902, %v901
      %v918 = vpack.c.b16 %v904, %v903
      %v919 = vpack.c.b16 %v906, %v905
      %v920 = vpack.c.b16 %v908, %v907
      %v921 = vpack.c.b16 %v910, %v909
      %v922 = vpack.c.b16 %v912, %v911
      %v943 = vunpack.c.l.b16 %v845
      %v944 = vunpack.c.l.b16 %v848
      %v945 = vunpack.c.l.b16 %v851
      %v946 = vunpack.c.l.b16 %v854
      %v947 = vunpack.c.l.b16 %v857
      %v948 = vunpack.c.l.b16 %v860
      %v949 = vunpack.c.l.b16 %v863
      %v950 = vunpack.c.l.b16 %v866
      %v951 = vunpack.c.l.b16 %v869
      %v952 = vunpack.c.l.b16 %v872
      %v953 = vpack.c.b16 %v943, %v943
      %v954 = vpack.c.b16 %v944, %v944
      %v955 = vpack.c.b16 %v945, %v945
      %v956 = vpack.c.b16 %v946, %v946
      %v957 = vpack.c.b16 %v947, %v947
      %v958 = vpack.c.b16 %v948, %v948
      %v959 = vpack.c.b16 %v949, %v949
      %v960 = vpack.c.b16 %v950, %v950
      %v961 = vpack.c.b16 %v951, %v951
      %v962 = vpack.c.b16 %v952, %v952
      %v964 = vshrl.u32 %v913, 16
      %v966 = vshll.u32 %v913, 16
      %v968 = vrot.slane %v966, 1
      %v969 = vor.u32 %v964, %v968
      %v971 = vshll.u32 %v953, 16
      %v973 = vrot.slane %v971, 1
      %v974 = vsel %vm622, %v969, %v973
      %v976 = vshrl.u32 %v914, 16
      %v978 = vshll.u32 %v914, 16
      %v980 = vrot.slane %v978, 1
      %v981 = vor.u32 %v976, %v980
      %v983 = vshll.u32 %v954, 16
      %v985 = vrot.slane %v983, 1
      %v986 = vsel %vm622, %v981, %v985
      %v988 = vshrl.u32 %v915, 16
      %v990 = vshll.u32 %v915, 16
      %v992 = vrot.slane %v990, 1
      %v993 = vor.u32 %v988, %v992
      %v995 = vshll.u32 %v955, 16
      %v997 = vrot.slane %v995, 1
      %v998 = vsel %vm622, %v993, %v997
      %v1000 = vshrl.u32 %v916, 16
      %v1002 = vshll.u32 %v916, 16
      %v1004 = vrot.slane %v1002, 1
      %v1005 = vor.u32 %v1000, %v1004
      %v1007 = vshll.u32 %v956, 16
      %v1009 = vrot.slane %v1007, 1
      %v1010 = vsel %vm622, %v1005, %v1009
      %v1012 = vshrl.u32 %v917, 16
      %v1014 = vshll.u32 %v917, 16
      %v1016 = vrot.slane %v1014, 1
      %v1017 = vor.u32 %v1012, %v1016
      %v1019 = vshll.u32 %v957, 16
      %v1021 = vrot.slane %v1019, 1
      %v1022 = vsel %vm622, %v1017, %v1021
      %v1024 = vshrl.u32 %v918, 16
      %v1026 = vshll.u32 %v918, 16
      %v1028 = vrot.slane %v1026, 1
      %v1029 = vor.u32 %v1024, %v1028
      %v1031 = vshll.u32 %v958, 16
      %v1033 = vrot.slane %v1031, 1
      %v1034 = vsel %vm622, %v1029, %v1033
      %v1036 = vshrl.u32 %v919, 16
      %v1038 = vshll.u32 %v919, 16
      %v1040 = vrot.slane %v1038, 1
      %v1041 = vor.u32 %v1036, %v1040
      %v1043 = vshll.u32 %v959, 16
      %v1045 = vrot.slane %v1043, 1
      %v1046 = vsel %vm622, %v1041, %v1045
      %v1048 = vshrl.u32 %v920, 16
      %v1050 = vshll.u32 %v920, 16
      %v1052 = vrot.slane %v1050, 1
      %v1053 = vor.u32 %v1048, %v1052
      %v1055 = vshll.u32 %v960, 16
      %v1057 = vrot.slane %v1055, 1
      %v1058 = vsel %vm622, %v1053, %v1057
      %v1060 = vshrl.u32 %v921, 16
      %v1062 = vshll.u32 %v921, 16
      %v1064 = vrot.slane %v1062, 1
      %v1065 = vor.u32 %v1060, %v1064
      %v1067 = vshll.u32 %v961, 16
      %v1069 = vrot.slane %v1067, 1
      %v1070 = vsel %vm622, %v1065, %v1069
      %v1072 = vshrl.u32 %v922, 16
      %v1074 = vshll.u32 %v922, 16
      %v1076 = vrot.slane %v1074, 1
      %v1077 = vor.u32 %v1072, %v1076
      %v1079 = vshll.u32 %v962, 16
      %v1081 = vrot.slane %v1079, 1
      %v1082 = vsel %vm622, %v1077, %v1081
      %v1093 = vrot.slane %v913, 1
      %v1094 = vrot.slane %v953, 1
      %v1095 = vsel %vm753, %v1093, %v1094
      %v1096 = vrot.slane %v914, 1
      %v1097 = vrot.slane %v954, 1
      %v1098 = vsel %vm753, %v1096, %v1097
      %v1099 = vrot.slane %v915, 1
      %v1100 = vrot.slane %v955, 1
      %v1101 = vsel %vm753, %v1099, %v1100
      %v1102 = vrot.slane %v916, 1
      %v1103 = vrot.slane %v956, 1
      %v1104 = vsel %vm753, %v1102, %v1103
      %v1105 = vrot.slane %v917, 1
      %v1106 = vrot.slane %v957, 1
      %v1107 = vsel %vm753, %v1105, %v1106
      %v1108 = vrot.slane %v918, 1
      %v1109 = vrot.slane %v958, 1
      %v1110 = vsel %vm753, %v1108, %v1109
      %v1111 = vrot.slane %v919, 1
      %v1112 = vrot.slane %v959, 1
      %v1113 = vsel %vm753, %v1111, %v1112
      %v1114 = vrot.slane %v920, 1
      %v1115 = vrot.slane %v960, 1
      %v1116 = vsel %vm753, %v1114, %v1115
      %v1117 = vrot.slane %v921, 1
      %v1118 = vrot.slane %v961, 1
      %v1119 = vsel %vm753, %v1117, %v1118
      %v1120 = vrot.slane %v922, 1
      %v1121 = vrot.slane %v962, 1
      %v1122 = vsel %vm753, %v1120, %v1121
      %s1133 = scalar_lea.vmem %s2, 192
      %v1134 = vld [vmem:[%s1133] sm:$0xf]
      %v1135 = vld [vmem:[%s1133 + $0x4] sm:$0xf]
      %v1136 = vld [vmem:[%s1133 + $0x8] sm:$0xf]
      %v1137 = vld [vmem:[%s1133 + $0xc] sm:$0xf]
      %v1138 = vld [vmem:[%s1133 + $0x10] sm:$0xf]
      %v1139 = vld [vmem:[%s1133 + $0x14] sm:$0xf]
      %v1140 = vld [vmem:[%s1133 + $0x18] sm:$0xf]
      %v1141 = vld [vmem:[%s1133 + $0x1c] sm:$0xf]
      %v1142 = vld [vmem:[%s1133 + $0x20] sm:$0xf]
      %v1143 = vld [vmem:[%s1133 + $0x24] sm:$0xf]
      %v1144 = vld [vmem:[%s1133 + $0x28] sm:$0xf]
      %v1145 = vld [vmem:[%s1133 + $0x2c] sm:$0xf]
      %v1146 = vld [vmem:[%s1133 + $0x30] sm:$0xf]
      %v1147 = vld [vmem:[%s1133 + $0x34] sm:$0xf]
      %v1148 = vld [vmem:[%s1133 + $0x38] sm:$0xf]
      %v1149 = vld [vmem:[%s1133 + $0x3c] sm:$0xf]
      %v1150 = vld [vmem:[%s1133 + $0x40] sm:$0xf]
      %v1151 = vld [vmem:[%s1133 + $0x44] sm:$0xf]
      %v1152 = vld [vmem:[%s1133 + $0x48] sm:$0xf]
      %v1153 = vld [vmem:[%s1133 + $0x4c] sm:$0xf]
      %v1154 = vld [vmem:[%s1133 + $0x50] sm:$0xf]
      %v1155 = vld [vmem:[%s1133 + $0x54] sm:$0xf]
      %v1156 = vld [vmem:[%s1133 + $0x58] sm:$0xf]
      %v1157 = vld [vmem:[%s1133 + $0x5c] sm:$0xf]
      %v1158 = vld [vmem:[%s1133 + $0x60] sm:$0xf]
      %v1159 = vld [vmem:[%s1133 + $0x64] sm:$0xf]
      %v1160 = vld [vmem:[%s1133 + $0x68] sm:$0xf]
      %v1161 = vld [vmem:[%s1133 + $0x6c] sm:$0xf]
      %v1162 = vld [vmem:[%s1133 + $0x70] sm:$0xf]
      %v1163 = vld [vmem:[%s1133 + $0x74] sm:$0xf]
      %v1164 = vld [vmem:[%s1133 + $0x78] sm:$0xf]
      %v1165 = vld [vmem:[%s1133 + $0x7c] sm:$0xf]
      %v1166 = vld [vmem:[%s1133 + $0x80] sm:$0xf]
      %v1167 = vld [vmem:[%s1133 + $0x84] sm:$0xf]
      %v1168 = vld [vmem:[%s1133 + $0x88] sm:$0xf]
      %v1169 = vld [vmem:[%s1133 + $0x8c] sm:$0xf]
      %v1170 = vld [vmem:[%s1133 + $0x90] sm:$0xf]
      %v1171 = vld [vmem:[%s1133 + $0x94] sm:$0xf]
      %v1172 = vld [vmem:[%s1133 + $0x98] sm:$0xf]
      %v1173 = vld [vmem:[%s1133 + $0x9c] sm:$0xf]
      %v1174 = vld [vmem:[%s1133 + $0xa0] sm:$0xf]
      %v1175 = vld [vmem:[%s1133 + $0xa4] sm:$0xf]
      %v1176 = vld [vmem:[%s1133 + $0xa8] sm:$0xf]
      %v1177 = vld [vmem:[%s1133 + $0xac] sm:$0xf]
      %v1178 = vld [vmem:[%s1133 + $0xb0] sm:$0xf]
      %v1179 = vld [vmem:[%s1133 + $0xb4] sm:$0xf]
      %v1180 = vld [vmem:[%s1133 + $0xb8] sm:$0xf]
      %v1181 = vld [vmem:[%s1133 + $0xbc] sm:$0xf]
      %v1230 = vunpack.c.l.b16 %v1134
      %v1231 = vunpack.c.l.b16 %v1135
      %v1232 = vunpack.c.l.b16 %v1136
      %v1233 = vunpack.c.l.b16 %v1137
      %v1234 = vunpack.c.l.b16 %v1138
      %v1235 = vunpack.c.l.b16 %v1139
      %v1236 = vunpack.c.l.b16 %v1140
      %v1237 = vunpack.c.l.b16 %v1141
      %v1238 = vunpack.c.l.b16 %v1142
      %v1239 = vunpack.c.l.b16 %v1143
      %v1240 = vunpack.c.l.b16 %v1144
      %v1241 = vunpack.c.l.b16 %v1145
      %v1242 = vunpack.c.l.b16 %v1146
      %v1243 = vunpack.c.l.b16 %v1147
      %v1244 = vunpack.c.l.b16 %v1148
      %v1245 = vunpack.c.l.b16 %v1149
      %v1246 = vunpack.c.l.b16 %v1150
      %v1247 = vunpack.c.l.b16 %v1151
      %v1248 = vunpack.c.l.b16 %v1152
      %v1249 = vunpack.c.l.b16 %v1153
      %v1250 = vunpack.c.l.b16 %v1154
      %v1251 = vunpack.c.l.b16 %v1155
      %v1252 = vunpack.c.l.b16 %v1156
      %v1253 = vunpack.c.l.b16 %v1157
      %v1254 = vunpack.c.l.b16 %v1158
      %v1255 = vunpack.c.l.b16 %v1159
      %v1256 = vunpack.c.l.b16 %v1160
      %v1257 = vunpack.c.l.b16 %v1161
      %v1258 = vunpack.c.l.b16 %v1162
      %v1259 = vunpack.c.l.b16 %v1163
      %v1260 = vunpack.c.l.b16 %v1164
      %v1261 = vunpack.c.l.b16 %v1165
      %v1262 = vunpack.c.l.b16 %v1166
      %v1263 = vunpack.c.l.b16 %v1167
      %v1264 = vunpack.c.l.b16 %v1168
      %v1265 = vunpack.c.l.b16 %v1169
      %v1266 = vunpack.c.l.b16 %v1170
      %v1267 = vunpack.c.l.b16 %v1171
      %v1268 = vunpack.c.l.b16 %v1172
      %v1269 = vunpack.c.l.b16 %v1173
      %v1270 = vunpack.c.l.b16 %v1174
      %v1271 = vunpack.c.l.b16 %v1175
      %v1272 = vunpack.c.l.b16 %v1176
      %v1273 = vunpack.c.l.b16 %v1177
      %v1274 = vunpack.c.l.b16 %v1178
      %v1275 = vunpack.c.l.b16 %v1179
      %v1276 = vunpack.c.l.b16 %v1180
      %v1277 = vunpack.c.l.b16 %v1181
      %v1278 = vpack.c.b16 %v1231, %v1230
      %v1279 = vpack.c.b16 %v1233, %v1232
      %v1280 = vpack.c.b16 %v1235, %v1234
      %v1281 = vpack.c.b16 %v1237, %v1236
      %v1282 = vpack.c.b16 %v1239, %v1238
      %v1283 = vpack.c.b16 %v1241, %v1240
      %v1284 = vpack.c.b16 %v1243, %v1242
      %v1285 = vpack.c.b16 %v1245, %v1244
      %v1286 = vpack.c.b16 %v1247, %v1246
      %v1287 = vpack.c.b16 %v1249, %v1248
      %v1288 = vpack.c.b16 %v1251, %v1250
      %v1289 = vpack.c.b16 %v1253, %v1252
      %v1290 = vpack.c.b16 %v1255, %v1254
      %v1291 = vpack.c.b16 %v1257, %v1256
      %v1292 = vpack.c.b16 %v1259, %v1258
      %v1293 = vpack.c.b16 %v1261, %v1260
      %v1294 = vpack.c.b16 %v1263, %v1262
      %v1295 = vpack.c.b16 %v1265, %v1264
      %v1296 = vpack.c.b16 %v1267, %v1266
      %v1297 = vpack.c.b16 %v1269, %v1268
      %v1298 = vpack.c.b16 %v1271, %v1270
      %v1299 = vpack.c.b16 %v1273, %v1272
      %v1300 = vpack.c.b16 %v1275, %v1274
      %v1301 = vpack.c.b16 %v1277, %v1276
      %1326 = vmatprep.subr.bf16.mxu0 0
      %1327 = vmatpush1.bf16.msra.mxu0 %v1285
      %1328 = vmatprep.subr.bf16.mxu0 0
      %1329 = vmatpush1.bf16.msra.mxu0 %v1284
      %1330 = vmatprep.subr.bf16.mxu0 0
      %1331 = vmatpush1.bf16.msra.mxu0 %v1283
      %1332 = vmatprep.subr.bf16.mxu0 0
      %1333 = vmatpush1.bf16.msra.mxu0 %v1282
      %1334 = vmatprep.subr.bf16.mxu0 0
      %1335 = vmatpush1.bf16.msra.mxu0 %v1281
      %1336 = vmatprep.subr.bf16.mxu0 0
      %1337 = vmatpush1.bf16.msra.mxu0 %v1280
      %1338 = vmatprep.subr.bf16.mxu0 0
      %1339 = vmatpush1.bf16.msra.mxu0 %v1279
      %1340 = vmatprep.subr.bf16.mxu0 0
      %1341 = vmatpush1.bf16.msra.mxu0 %v1278
      %1342 = vmatprep.subr.bf16.mxu0 0
      %1343 = vmatpush2.bf16.msra.mxu0 %v1293
      %1344 = vmatprep.subr.bf16.mxu0 0
      %1345 = vmatpush2.bf16.msra.mxu0 %v1292
      %1346 = vmatprep.subr.bf16.mxu0 0
      %1347 = vmatpush2.bf16.msra.mxu0 %v1291
      %1348 = vmatprep.subr.bf16.mxu0 0
      %1349 = vmatpush2.bf16.msra.mxu0 %v1290
      %1350 = vmatprep.subr.bf16.mxu0 0
      %1351 = vmatpush2.bf16.msra.mxu0 %v1289
      %1352 = vmatprep.subr.bf16.mxu0 0
      %1353 = vmatpush2.bf16.msra.mxu0 %v1288
      %1354 = vmatprep.subr.bf16.mxu0 0
      %1355 = vmatpush2.bf16.msra.mxu0 %v1287
      %1356 = vmatprep.subr.bf16.mxu0 0
      %1357 = vmatpush2.bf16.msra.mxu0 %v1286
      %1358 = vmatprep.mubr.bf16.mxu0 %v974
      %1359 = vmatmul.mubr.bf16.gmra.mxu0 %v913
      %v1360 = vpop.f32.mrf.mxu0
      %v1361 = vadd.f32 0.0, %v1360
      %v1362 = vpop.f32.mrf.mxu0
      %v1363 = vpop.f32.mrf.mxu0
      %v1364 = vadd.f32 0.0, %v1363
      %v1365 = vpop.f32.mrf.mxu0
      %1366 = vmatprep.mubr.bf16.mxu0 %v986
      %1367 = vmatmul.mubr.bf16.gmra.mxu0 %v914
      %v1368 = vpop.f32.mrf.mxu0
      %v1369 = vadd.f32 0.0, %v1368
      %v1370 = vpop.f32.mrf.mxu0
      %v1371 = vpop.f32.mrf.mxu0
      %v1372 = vadd.f32 0.0, %v1371
      %v1373 = vpop.f32.mrf.mxu0
      %1374 = vmatprep.mubr.bf16.mxu0 %v998
      %1375 = vmatmul.mubr.bf16.gmra.mxu0 %v915
      %v1376 = vpop.f32.mrf.mxu0
      %v1377 = vadd.f32 0.0, %v1376
      %v1378 = vpop.f32.mrf.mxu0
      %v1379 = vpop.f32.mrf.mxu0
      %v1380 = vadd.f32 0.0, %v1379
      %v1381 = vpop.f32.mrf.mxu0
      %1382 = vmatprep.mubr.bf16.mxu0 %v1010
      %1383 = vmatmul.mubr.bf16.gmra.mxu0 %v916
      %v1384 = vpop.f32.mrf.mxu0
      %v1385 = vadd.f32 0.0, %v1384
      %v1386 = vpop.f32.mrf.mxu0
      %v1387 = vpop.f32.mrf.mxu0
      %v1388 = vadd.f32 0.0, %v1387
      %v1389 = vpop.f32.mrf.mxu0
      %1390 = vmatprep.mubr.bf16.mxu0 %v1022
      %1391 = vmatmul.mubr.bf16.gmra.mxu0 %v917
      %v1392 = vpop.f32.mrf.mxu0
      %v1393 = vadd.f32 0.0, %v1392
      %v1394 = vpop.f32.mrf.mxu0
      %v1395 = vpop.f32.mrf.mxu0
      %v1396 = vadd.f32 0.0, %v1395
      %v1397 = vpop.f32.mrf.mxu0
      %1398 = vmatprep.mubr.bf16.mxu0 %v1034
      %1399 = vmatmul.mubr.bf16.gmra.mxu0 %v918
      %v1400 = vpop.f32.mrf.mxu0
      %v1401 = vadd.f32 0.0, %v1400
      %v1402 = vpop.f32.mrf.mxu0
      %v1403 = vpop.f32.mrf.mxu0
      %v1404 = vadd.f32 0.0, %v1403
      %v1405 = vpop.f32.mrf.mxu0
      %1406 = vmatprep.mubr.bf16.mxu0 %v1046
      %1407 = vmatmul.mubr.bf16.gmra.mxu0 %v919
      %v1408 = vpop.f32.mrf.mxu0
      %v1409 = vadd.f32 0.0, %v1408
      %v1410 = vpop.f32.mrf.mxu0
      %v1411 = vpop.f32.mrf.mxu0
      %v1412 = vadd.f32 0.0, %v1411
      %v1413 = vpop.f32.mrf.mxu0
      %1414 = vmatprep.mubr.bf16.mxu0 %v1058
      %1415 = vmatmul.mubr.bf16.gmra.mxu0 %v920
      %v1416 = vpop.f32.mrf.mxu0
      %v1417 = vadd.f32 0.0, %v1416
      %v1418 = vpop.f32.mrf.mxu0
      %v1419 = vpop.f32.mrf.mxu0
      %v1420 = vadd.f32 0.0, %v1419
      %v1421 = vpop.f32.mrf.mxu0
      %1422 = vmatprep.mubr.bf16.mxu0 %v1070
      %1423 = vmatmul.mubr.bf16.gmra.mxu0 %v921
      %v1424 = vpop.f32.mrf.mxu0
      %v1425 = vadd.f32 0.0, %v1424
      %v1426 = vpop.f32.mrf.mxu0
      %v1427 = vpop.f32.mrf.mxu0
      %v1428 = vadd.f32 0.0, %v1427
      %v1429 = vpop.f32.mrf.mxu0
      %1430 = vmatprep.mubr.bf16.mxu0 %v1082
      %1431 = vmatmul.mubr.bf16.gmra.mxu0 %v922
      %v1432 = vpop.f32.mrf.mxu0
      %v1433 = vadd.f32 0.0, %v1432
      %v1434 = vpop.f32.mrf.mxu0
      %v1435 = vpop.f32.mrf.mxu0
      %v1436 = vadd.f32 0.0, %v1435
      %v1437 = vpop.f32.mrf.mxu0
      %1438 = vdwg.mxu0
      %1439 = vmatprep.subr.bf16.mxu0 0
      %1440 = vmatpush1.bf16.msra.mxu0 %v1301
      %1441 = vmatprep.subr.bf16.mxu0 0
      %1442 = vmatpush1.bf16.msra.mxu0 %v1300
      %1443 = vmatprep.subr.bf16.mxu0 0
      %1444 = vmatpush1.bf16.msra.mxu0 %v1299
      %1445 = vmatprep.subr.bf16.mxu0 0
      %1446 = vmatpush1.bf16.msra.mxu0 %v1298
      %1447 = vmatprep.subr.bf16.mxu0 0
      %1448 = vmatpush1.bf16.msra.mxu0 %v1297
      %1449 = vmatprep.subr.bf16.mxu0 0
      %1450 = vmatpush1.bf16.msra.mxu0 %v1296
      %1451 = vmatprep.subr.bf16.mxu0 0
      %1452 = vmatpush1.bf16.msra.mxu0 %v1295
      %1453 = vmatprep.subr.bf16.mxu0 0
      %1454 = vmatpush1.bf16.msra.mxu0 %v1294
      %1455 = vmatprep.subr.bf16.mxu0 0
      %1456 = vmatpush2.bf16.msra.mxu0 0
      %1457 = vmatprep.subr.bf16.mxu0 0
      %1458 = vmatpush2.bf16.msra.mxu0 0
      %1459 = vmatprep.subr.bf16.mxu0 0
      %1460 = vmatpush2.bf16.msra.mxu0 0
      %1461 = vmatprep.subr.bf16.mxu0 0
      %1462 = vmatpush2.bf16.msra.mxu0 0
      %1463 = vmatprep.subr.bf16.mxu0 0
      %1464 = vmatpush2.bf16.msra.mxu0 0
      %1465 = vmatprep.subr.bf16.mxu0 0
      %1466 = vmatpush2.bf16.msra.mxu0 0
      %1467 = vmatprep.subr.bf16.mxu0 0
      %1468 = vmatpush2.bf16.msra.mxu0 0
      %1469 = vmatprep.subr.bf16.mxu0 0
      %1470 = vmatpush2.bf16.msra.mxu0 0
      %1471 = vmatprep.mubr.bf16.mxu0 0
      %1472 = vmatmul.mubr.bf16.gmra.mxu0 %v1095
      %v1473 = vpop.f32.mrf.mxu0
      %v1474 = vadd.f32 %v1361, %v1473
      %v1475 = vpop.f32.mrf.mxu0
      %v1476 = vpop.f32.mrf.mxu0
      %v1477 = vadd.f32 %v1364, %v1476
      %v1478 = vpop.f32.mrf.mxu0
      %1479 = vmatprep.mubr.bf16.mxu0 0
      %1480 = vmatmul.mubr.bf16.gmra.mxu0 %v1098
      %v1481 = vpop.f32.mrf.mxu0
      %v1482 = vadd.f32 %v1369, %v1481
      %v1483 = vpop.f32.mrf.mxu0
      %v1484 = vpop.f32.mrf.mxu0
      %v1485 = vadd.f32 %v1372, %v1484
      %v1486 = vpop.f32.mrf.mxu0
      %1487 = vmatprep.mubr.bf16.mxu0 0
      %1488 = vmatmul.mubr.bf16.gmra.mxu0 %v1101
      %v1489 = vpop.f32.mrf.mxu0
      %v1490 = vadd.f32 %v1377, %v1489
      %v1491 = vpop.f32.mrf.mxu0
      %v1492 = vpop.f32.mrf.mxu0
      %v1493 = vadd.f32 %v1380, %v1492
      %v1494 = vpop.f32.mrf.mxu0
      %1495 = vmatprep.mubr.bf16.mxu0 0
      %1496 = vmatmul.mubr.bf16.gmra.mxu0 %v1104
      %v1497 = vpop.f32.mrf.mxu0
      %v1498 = vadd.f32 %v1385, %v1497
      %v1499 = vpop.f32.mrf.mxu0
      %v1500 = vpop.f32.mrf.mxu0
      %v1501 = vadd.f32 %v1388, %v1500
      %v1502 = vpop.f32.mrf.mxu0
      %1503 = vmatprep.mubr.bf16.mxu0 0
      %1504 = vmatmul.mubr.bf16.gmra.mxu0 %v1107
      %v1505 = vpop.f32.mrf.mxu0
      %v1506 = vadd.f32 %v1393, %v1505
      %v1507 = vpop.f32.mrf.mxu0
      %v1508 = vpop.f32.mrf.mxu0
      %v1509 = vadd.f32 %v1396, %v1508
      %v1510 = vpop.f32.mrf.mxu0
      %1511 = vmatprep.mubr.bf16.mxu0 0
      %1512 = vmatmul.mubr.bf16.gmra.mxu0 %v1110
      %v1513 = vpop.f32.mrf.mxu0
      %v1514 = vadd.f32 %v1401, %v1513
      %v1515 = vpop.f32.mrf.mxu0
      %v1516 = vpop.f32.mrf.mxu0
      %v1517 = vadd.f32 %v1404, %v1516
      %v1518 = vpop.f32.mrf.mxu0
      %1519 = vmatprep.mubr.bf16.mxu0 0
      %1520 = vmatmul.mubr.bf16.gmra.mxu0 %v1113
      %v1521 = vpop.f32.mrf.mxu0
      %v1522 = vadd.f32 %v1409, %v1521
      %v1523 = vpop.f32.mrf.mxu0
      %v1524 = vpop.f32.mrf.mxu0
      %v1525 = vadd.f32 %v1412, %v1524
      %v1526 = vpop.f32.mrf.mxu0
      %1527 = vmatprep.mubr.bf16.mxu0 0
      %1528 = vmatmul.mubr.bf16.gmra.mxu0 %v1116
      %v1529 = vpop.f32.mrf.mxu0
      %v1530 = vadd.f32 %v1417, %v1529
      %v1531 = vpop.f32.mrf.mxu0
      %v1532 = vpop.f32.mrf.mxu0
      %v1533 = vadd.f32 %v1420, %v1532
      %v1534 = vpop.f32.mrf.mxu0
      %1535 = vmatprep.mubr.bf16.mxu0 0
      %1536 = vmatmul.mubr.bf16.gmra.mxu0 %v1119
      %v1537 = vpop.f32.mrf.mxu0
      %v1538 = vadd.f32 %v1425, %v1537
      %v1539 = vpop.f32.mrf.mxu0
      %v1540 = vpop.f32.mrf.mxu0
      %v1541 = vadd.f32 %v1428, %v1540
      %v1542 = vpop.f32.mrf.mxu0
      %1543 = vmatprep.mubr.bf16.mxu0 0
      %1544 = vmatmul.mubr.bf16.gmra.mxu0 %v1122
      %v1545 = vpop.f32.mrf.mxu0
      %v1546 = vadd.f32 %v1433, %v1545
      %v1547 = vpop.f32.mrf.mxu0
      %v1548 = vpop.f32.mrf.mxu0
      %v1549 = vadd.f32 %v1436, %v1548
      %v1550 = vpop.f32.mrf.mxu0
      %1551 = vdwg.mxu0
      %v1600 = vunpack.c.l.b16 %v794
      %v1601 = vunpack.c.l.b16 %v795
      %v1602 = vunpack.c.l.b16 %v796
      %v1603 = vunpack.c.l.b16 %v797
      %v1604 = vunpack.c.l.b16 %v798
      %v1605 = vunpack.c.l.b16 %v799
      %v1606 = vunpack.c.l.b16 %v800
      %v1607 = vunpack.c.l.b16 %v801
      %v1608 = vunpack.c.l.b16 %v802
      %v1609 = vunpack.c.l.b16 %v803
      %v1610 = vunpack.c.l.b16 %v804
      %v1611 = vunpack.c.l.b16 %v805
      %v1612 = vunpack.c.l.b16 %v806
      %v1613 = vunpack.c.l.b16 %v807
      %v1614 = vunpack.c.l.b16 %v808
      %v1615 = vunpack.c.l.b16 %v809
      %v1616 = vunpack.c.l.b16 %v810
      %v1617 = vunpack.c.l.b16 %v811
      %v1618 = vunpack.c.l.b16 %v812
      %v1619 = vunpack.c.l.b16 %v813
      %v1620 = vunpack.c.l.b16 %v814
      %v1621 = vunpack.c.l.b16 %v815
      %v1622 = vunpack.c.l.b16 %v816
      %v1623 = vunpack.c.l.b16 %v817
      %v1624 = vunpack.c.l.b16 %v818
      %v1625 = vunpack.c.l.b16 %v819
      %v1626 = vunpack.c.l.b16 %v820
      %v1627 = vunpack.c.l.b16 %v821
      %v1628 = vunpack.c.l.b16 %v822
      %v1629 = vunpack.c.l.b16 %v823
      %v1630 = vunpack.c.l.b16 %v824
      %v1631 = vunpack.c.l.b16 %v825
      %v1632 = vunpack.c.l.b16 %v826
      %v1633 = vunpack.c.l.b16 %v827
      %v1634 = vunpack.c.l.b16 %v828
      %v1635 = vunpack.c.l.b16 %v829
      %v1636 = vunpack.c.l.b16 %v830
      %v1637 = vunpack.c.l.b16 %v831
      %v1638 = vunpack.c.l.b16 %v832
      %v1639 = vunpack.c.l.b16 %v833
      %v1640 = vunpack.c.l.b16 %v834
      %v1641 = vunpack.c.l.b16 %v835
      %v1642 = vunpack.c.l.b16 %v836
      %v1643 = vunpack.c.l.b16 %v837
      %v1644 = vunpack.c.l.b16 %v838
      %v1645 = vunpack.c.l.b16 %v839
      %v1646 = vunpack.c.l.b16 %v840
      %v1647 = vunpack.c.l.b16 %v841
      %v1648 = vpack.c.b16 %v1601, %v1600
      %v1649 = vpack.c.b16 %v1603, %v1602
      %v1650 = vpack.c.b16 %v1605, %v1604
      %v1651 = vpack.c.b16 %v1607, %v1606
      %v1652 = vpack.c.b16 %v1609, %v1608
      %v1653 = vpack.c.b16 %v1611, %v1610
      %v1654 = vpack.c.b16 %v1613, %v1612
      %v1655 = vpack.c.b16 %v1615, %v1614
      %v1656 = vpack.c.b16 %v1617, %v1616
      %v1657 = vpack.c.b16 %v1619, %v1618
      %v1658 = vpack.c.b16 %v1621, %v1620
      %v1659 = vpack.c.b16 %v1623, %v1622
      %v1660 = vpack.c.b16 %v1625, %v1624
      %v1661 = vpack.c.b16 %v1627, %v1626
      %v1662 = vpack.c.b16 %v1629, %v1628
      %v1663 = vpack.c.b16 %v1631, %v1630
      %v1664 = vpack.c.b16 %v1633, %v1632
      %v1665 = vpack.c.b16 %v1635, %v1634
      %v1666 = vpack.c.b16 %v1637, %v1636
      %v1667 = vpack.c.b16 %v1639, %v1638
      %v1668 = vpack.c.b16 %v1641, %v1640
      %v1669 = vpack.c.b16 %v1643, %v1642
      %v1670 = vpack.c.b16 %v1645, %v1644
      %v1671 = vpack.c.b16 %v1647, %v1646
      %1696 = vmatprep.subr.bf16.mxu0 0
      %1697 = vmatpush1.bf16.msra.mxu0 %v1655
      %1698 = vmatprep.subr.bf16.mxu0 0
      %1699 = vmatpush1.bf16.msra.mxu0 %v1654
      %1700 = vmatprep.subr.bf16.mxu0 0
      %1701 = vmatpush1.bf16.msra.mxu0 %v1653
      %1702 = vmatprep.subr.bf16.mxu0 0
      %1703 = vmatpush1.bf16.msra.mxu0 %v1652
      %1704 = vmatprep.subr.bf16.mxu0 0
      %1705 = vmatpush1.bf16.msra.mxu0 %v1651
      %1706 = vmatprep.subr.bf16.mxu0 0
      %1707 = vmatpush1.bf16.msra.mxu0 %v1650
      %1708 = vmatprep.subr.bf16.mxu0 0
      %1709 = vmatpush1.bf16.msra.mxu0 %v1649
      %1710 = vmatprep.subr.bf16.mxu0 0
      %1711 = vmatpush1.bf16.msra.mxu0 %v1648
      %1712 = vmatprep.subr.bf16.mxu0 0
      %1713 = vmatpush2.bf16.msra.mxu0 %v1663
      %1714 = vmatprep.subr.bf16.mxu0 0
      %1715 = vmatpush2.bf16.msra.mxu0 %v1662
      %1716 = vmatprep.subr.bf16.mxu0 0
      %1717 = vmatpush2.bf16.msra.mxu0 %v1661
      %1718 = vmatprep.subr.bf16.mxu0 0
      %1719 = vmatpush2.bf16.msra.mxu0 %v1660
      %1720 = vmatprep.subr.bf16.mxu0 0
      %1721 = vmatpush2.bf16.msra.mxu0 %v1659
      %1722 = vmatprep.subr.bf16.mxu0 0
      %1723 = vmatpush2.bf16.msra.mxu0 %v1658
      %1724 = vmatprep.subr.bf16.mxu0 0
      %1725 = vmatpush2.bf16.msra.mxu0 %v1657
      %1726 = vmatprep.subr.bf16.mxu0 0
      %1727 = vmatpush2.bf16.msra.mxu0 %v1656
      %1728 = vmatprep.mubr.bf16.mxu0 %v634
      %1729 = vmatmul.mubr.bf16.gmra.mxu0 %v572
      %v1730 = vpop.f32.mrf.mxu0
      %v1731 = vadd.f32 %v1474, %v1730
      %v1732 = vpop.f32.mrf.mxu0
      %v1733 = vpop.f32.mrf.mxu0
      %v1734 = vadd.f32 %v1477, %v1733
      %v1735 = vpop.f32.mrf.mxu0
      %1736 = vmatprep.mubr.bf16.mxu0 %v646
      %1737 = vmatmul.mubr.bf16.gmra.mxu0 %v573
      %v1738 = vpop.f32.mrf.mxu0
      %v1739 = vadd.f32 %v1482, %v1738
      %v1740 = vpop.f32.mrf.mxu0
      %v1741 = vpop.f32.mrf.mxu0
      %v1742 = vadd.f32 %v1485, %v1741
      %v1743 = vpop.f32.mrf.mxu0
      %1744 = vmatprep.mubr.bf16.mxu0 %v658
      %1745 = vmatmul.mubr.bf16.gmra.mxu0 %v574
      %v1746 = vpop.f32.mrf.mxu0
      %v1747 = vadd.f32 %v1490, %v1746
      %v1748 = vpop.f32.mrf.mxu0
      %v1749 = vpop.f32.mrf.mxu0
      %v1750 = vadd.f32 %v1493, %v1749
      %v1751 = vpop.f32.mrf.mxu0
      %1752 = vmatprep.mubr.bf16.mxu0 %v670
      %1753 = vmatmul.mubr.bf16.gmra.mxu0 %v575
      %v1754 = vpop.f32.mrf.mxu0
      %v1755 = vadd.f32 %v1498, %v1754
      %v1756 = vpop.f32.mrf.mxu0
      %v1757 = vpop.f32.mrf.mxu0
      %v1758 = vadd.f32 %v1501, %v1757
      %v1759 = vpop.f32.mrf.mxu0
      %1760 = vmatprep.mubr.bf16.mxu0 %v682
      %1761 = vmatmul.mubr.bf16.gmra.mxu0 %v576
      %v1762 = vpop.f32.mrf.mxu0
      %v1763 = vadd.f32 %v1506, %v1762
      %v1764 = vpop.f32.mrf.mxu0
      %v1765 = vpop.f32.mrf.mxu0
      %v1766 = vadd.f32 %v1509, %v1765
      %v1767 = vpop.f32.mrf.mxu0
      %1768 = vmatprep.mubr.bf16.mxu0 %v694
      %1769 = vmatmul.mubr.bf16.gmra.mxu0 %v577
      %v1770 = vpop.f32.mrf.mxu0
      %v1771 = vadd.f32 %v1514, %v1770
      %v1772 = vpop.f32.mrf.mxu0
      %v1773 = vpop.f32.mrf.mxu0
      %v1774 = vadd.f32 %v1517, %v1773
      %v1775 = vpop.f32.mrf.mxu0
      %1776 = vmatprep.mubr.bf16.mxu0 %v706
      %1777 = vmatmul.mubr.bf16.gmra.mxu0 %v578
      %v1778 = vpop.f32.mrf.mxu0
      %v1779 = vadd.f32 %v1522, %v1778
      %v1780 = vpop.f32.mrf.mxu0
      %v1781 = vpop.f32.mrf.mxu0
      %v1782 = vadd.f32 %v1525, %v1781
      %v1783 = vpop.f32.mrf.mxu0
      %1784 = vmatprep.mubr.bf16.mxu0 %v718
      %1785 = vmatmul.mubr.bf16.gmra.mxu0 %v579
      %v1786 = vpop.f32.mrf.mxu0
      %v1787 = vadd.f32 %v1530, %v1786
      %v1788 = vpop.f32.mrf.mxu0
      %v1789 = vpop.f32.mrf.mxu0
      %v1790 = vadd.f32 %v1533, %v1789
      %v1791 = vpop.f32.mrf.mxu0
      %1792 = vmatprep.mubr.bf16.mxu0 %v730
      %1793 = vmatmul.mubr.bf16.gmra.mxu0 %v580
      %v1794 = vpop.f32.mrf.mxu0
      %v1795 = vadd.f32 %v1538, %v1794
      %v1796 = vpop.f32.mrf.mxu0
      %v1797 = vpop.f32.mrf.mxu0
      %v1798 = vadd.f32 %v1541, %v1797
      %v1799 = vpop.f32.mrf.mxu0
      %1800 = vmatprep.mubr.bf16.mxu0 %v742
      %1801 = vmatmul.mubr.bf16.gmra.mxu0 %v581
      %v1802 = vpop.f32.mrf.mxu0
      %v1803 = vadd.f32 %v1546, %v1802
      %v1804 = vpop.f32.mrf.mxu0
      %v1805 = vpop.f32.mrf.mxu0
      %v1806 = vadd.f32 %v1549, %v1805
      %v1807 = vpop.f32.mrf.mxu0
      %1808 = vdwg.mxu0
      %1809 = vmatprep.subr.bf16.mxu0 0
      %1810 = vmatpush1.bf16.msra.mxu0 %v1671
      %1811 = vmatprep.subr.bf16.mxu0 0
      %1812 = vmatpush1.bf16.msra.mxu0 %v1670
      %1813 = vmatprep.subr.bf16.mxu0 0
      %1814 = vmatpush1.bf16.msra.mxu0 %v1669
      %1815 = vmatprep.subr.bf16.mxu0 0
      %1816 = vmatpush1.bf16.msra.mxu0 %v1668
      %1817 = vmatprep.subr.bf16.mxu0 0
      %1818 = vmatpush1.bf16.msra.mxu0 %v1667
      %1819 = vmatprep.subr.bf16.mxu0 0
      %1820 = vmatpush1.bf16.msra.mxu0 %v1666
      %1821 = vmatprep.subr.bf16.mxu0 0
      %1822 = vmatpush1.bf16.msra.mxu0 %v1665
      %1823 = vmatprep.subr.bf16.mxu0 0
      %1824 = vmatpush1.bf16.msra.mxu0 %v1664
      %1825 = vmatprep.subr.bf16.mxu0 0
      %1826 = vmatpush2.bf16.msra.mxu0 0
      %1827 = vmatprep.subr.bf16.mxu0 0
      %1828 = vmatpush2.bf16.msra.mxu0 0
      %1829 = vmatprep.subr.bf16.mxu0 0
      %1830 = vmatpush2.bf16.msra.mxu0 0
      %1831 = vmatprep.subr.bf16.mxu0 0
      %1832 = vmatpush2.bf16.msra.mxu0 0
      %1833 = vmatprep.subr.bf16.mxu0 0
      %1834 = vmatpush2.bf16.msra.mxu0 0
      %1835 = vmatprep.subr.bf16.mxu0 0
      %1836 = vmatpush2.bf16.msra.mxu0 0
      %1837 = vmatprep.subr.bf16.mxu0 0
      %1838 = vmatpush2.bf16.msra.mxu0 0
      %1839 = vmatprep.subr.bf16.mxu0 0
      %1840 = vmatpush2.bf16.msra.mxu0 0
      %1841 = vmatprep.mubr.bf16.mxu0 0
      %1842 = vmatmul.mubr.bf16.gmra.mxu0 %v756
      %v1843 = vpop.f32.mrf.mxu0
      %v1844 = vadd.f32 %v1731, %v1843
      %v1845 = vpop.f32.mrf.mxu0
      %v1846 = vpop.f32.mrf.mxu0
      %v1847 = vadd.f32 %v1734, %v1846
      %v1848 = vpop.f32.mrf.mxu0
      %1849 = vmatprep.mubr.bf16.mxu0 0
      %1850 = vmatmul.mubr.bf16.gmra.mxu0 %v759
      %v1851 = vpop.f32.mrf.mxu0
      %v1852 = vadd.f32 %v1739, %v1851
      %v1853 = vpop.f32.mrf.mxu0
      %v1854 = vpop.f32.mrf.mxu0
      %v1855 = vadd.f32 %v1742, %v1854
      %v1856 = vpop.f32.mrf.mxu0
      %1857 = vmatprep.mubr.bf16.mxu0 0
      %1858 = vmatmul.mubr.bf16.gmra.mxu0 %v762
      %v1859 = vpop.f32.mrf.mxu0
      %v1860 = vadd.f32 %v1747, %v1859
      %v1861 = vpop.f32.mrf.mxu0
      %v1862 = vpop.f32.mrf.mxu0
      %v1863 = vadd.f32 %v1750, %v1862
      %v1864 = vpop.f32.mrf.mxu0
      %1865 = vmatprep.mubr.bf16.mxu0 0
      %1866 = vmatmul.mubr.bf16.gmra.mxu0 %v765
      %v1867 = vpop.f32.mrf.mxu0
      %v1868 = vadd.f32 %v1755, %v1867
      %v1869 = vpop.f32.mrf.mxu0
      %v1870 = vpop.f32.mrf.mxu0
      %v1871 = vadd.f32 %v1758, %v1870
      %v1872 = vpop.f32.mrf.mxu0
      %1873 = vmatprep.mubr.bf16.mxu0 0
      %1874 = vmatmul.mubr.bf16.gmra.mxu0 %v768
      %v1875 = vpop.f32.mrf.mxu0
      %v1876 = vadd.f32 %v1763, %v1875
      %v1877 = vpop.f32.mrf.mxu0
      %v1878 = vpop.f32.mrf.mxu0
      %v1879 = vadd.f32 %v1766, %v1878
      %v1880 = vpop.f32.mrf.mxu0
      %1881 = vmatprep.mubr.bf16.mxu0 0
      %1882 = vmatmul.mubr.bf16.gmra.mxu0 %v771
      %v1883 = vpop.f32.mrf.mxu0
      %v1884 = vadd.f32 %v1771, %v1883
      %v1885 = vpop.f32.mrf.mxu0
      %v1886 = vpop.f32.mrf.mxu0
      %v1887 = vadd.f32 %v1774, %v1886
      %v1888 = vpop.f32.mrf.mxu0
      %1889 = vmatprep.mubr.bf16.mxu0 0
      %1890 = vmatmul.mubr.bf16.gmra.mxu0 %v774
      %v1891 = vpop.f32.mrf.mxu0
      %v1892 = vadd.f32 %v1779, %v1891
      %v1893 = vpop.f32.mrf.mxu0
      %v1894 = vpop.f32.mrf.mxu0
      %v1895 = vadd.f32 %v1782, %v1894
      %v1896 = vpop.f32.mrf.mxu0
      %1897 = vmatprep.mubr.bf16.mxu0 0
      %1898 = vmatmul.mubr.bf16.gmra.mxu0 %v777
      %v1899 = vpop.f32.mrf.mxu0
      %v1900 = vadd.f32 %v1787, %v1899
      %v1901 = vpop.f32.mrf.mxu0
      %v1902 = vpop.f32.mrf.mxu0
      %v1903 = vadd.f32 %v1790, %v1902
      %v1904 = vpop.f32.mrf.mxu0
      %1905 = vmatprep.mubr.bf16.mxu0 0
      %1906 = vmatmul.mubr.bf16.gmra.mxu0 %v780
      %v1907 = vpop.f32.mrf.mxu0
      %v1908 = vadd.f32 %v1795, %v1907
      %v1909 = vpop.f32.mrf.mxu0
      %v1910 = vpop.f32.mrf.mxu0
      %v1911 = vadd.f32 %v1798, %v1910
      %v1912 = vpop.f32.mrf.mxu0
      %1913 = vmatprep.mubr.bf16.mxu0 0
      %1914 = vmatmul.mubr.bf16.gmra.mxu0 %v783
      %v1915 = vpop.f32.mrf.mxu0
      %v1916 = vadd.f32 %v1803, %v1915
      %v1917 = vpop.f32.mrf.mxu0
      %v1918 = vpop.f32.mrf.mxu0
      %v1919 = vadd.f32 %v1806, %v1918
      %v1920 = vpop.f32.mrf.mxu0
      %1921 = vdwg.mxu0
      %s1922 = scalar_lea.vmem [#allocation2], 24
      %v1923 = vld [vmem:[%s1922] sm:$0xf]
      %v1924 = vld [vmem:[%s1922 + $0x4] sm:$0xf]
      %v1925 = vld [vmem:[%s1922 + $0x8] sm:$0xf]
      %v1926 = vld [vmem:[%s1922 + $0xc] sm:$0xf]
      %v1927 = vld [vmem:[%s1922 + $0x10] sm:$0xf]
      %v1928 = vld [vmem:[%s1922 + $0x14] sm:$0xf]
      %v1929 = vld [vmem:[%s1922 + $0x18] sm:$0xf]
      %v1930 = vld [vmem:[%s1922 + $0x1c] sm:$0xf]
      %v1931 = vld [vmem:[%s1922 + $0x20] sm:$0xf]
      %v1932 = vld [vmem:[%s1922 + $0x24] sm:$0xf]
      %v1933 = vld [vmem:[%s1922 + $0x28] sm:$0xf]
      %v1934 = vld [vmem:[%s1922 + $0x2c] sm:$0xf]
      %v1935 = vld [vmem:[%s1922 + $0x30] sm:$0xf]
      %v1936 = vld [vmem:[%s1922 + $0x34] sm:$0xf]
      %v1937 = vld [vmem:[%s1922 + $0x38] sm:$0xf]
      %v1938 = vld [vmem:[%s1922 + $0x3c] sm:$0xf]
      %v1939 = vld [vmem:[%s1922 + $0x40] sm:$0xf]
      %v1940 = vld [vmem:[%s1922 + $0x44] sm:$0xf]
      %v1941 = vld [vmem:[%s1922 + $0x48] sm:$0xf]
      %v1942 = vld [vmem:[%s1922 + $0x4c] sm:$0xf]
      %v1943 = vld [vmem:[%s1922 + $0x50] sm:$0xf]
      %v1944 = vld [vmem:[%s1922 + $0x54] sm:$0xf]
      %v1945 = vld [vmem:[%s1922 + $0x58] sm:$0xf]
      %v1946 = vld [vmem:[%s1922 + $0x5c] sm:$0xf]
      %v1947 = vld [vmem:[%s1922 + $0x60] sm:$0xf]
      %v1948 = vld [vmem:[%s1922 + $0x64] sm:$0xf]
      %v1949 = vld [vmem:[%s1922 + $0x68] sm:$0xf]
      %v1950 = vld [vmem:[%s1922 + $0x6c] sm:$0xf]
      %v1951 = vld [vmem:[%s1922 + $0x70] sm:$0xf]
      %v1952 = vld [vmem:[%s1922 + $0x74] sm:$0xf]
      %v1973 = vunpack.c.l.b16 %v1923
      %v1974 = vunpack.c.l.b16 %v1924
      %v1975 = vunpack.c.l.b16 %v1926
      %v1976 = vunpack.c.l.b16 %v1927
      %v1977 = vunpack.c.l.b16 %v1929
      %v1978 = vunpack.c.l.b16 %v1930
      %v1979 = vunpack.c.l.b16 %v1932
      %v1980 = vunpack.c.l.b16 %v1933
      %v1981 = vunpack.c.l.b16 %v1935
      %v1982 = vunpack.c.l.b16 %v1936
      %v1983 = vunpack.c.l.b16 %v1938
      %v1984 = vunpack.c.l.b16 %v1939
      %v1985 = vunpack.c.l.b16 %v1941
      %v1986 = vunpack.c.l.b16 %v1942
      %v1987 = vunpack.c.l.b16 %v1944
      %v1988 = vunpack.c.l.b16 %v1945
      %v1989 = vunpack.c.l.b16 %v1947
      %v1990 = vunpack.c.l.b16 %v1948
      %v1991 = vunpack.c.l.b16 %v1950
      %v1992 = vunpack.c.l.b16 %v1951
      %v1993 = vpack.c.b16 %v1974, %v1973
      %v1994 = vpack.c.b16 %v1976, %v1975
      %v1995 = vpack.c.b16 %v1978, %v1977
      %v1996 = vpack.c.b16 %v1980, %v1979
      %v1997 = vpack.c.b16 %v1982, %v1981
      %v1998 = vpack.c.b16 %v1984, %v1983
      %v1999 = vpack.c.b16 %v1986, %v1985
      %v2000 = vpack.c.b16 %v1988, %v1987
      %v2001 = vpack.c.b16 %v1990, %v1989
      %v2002 = vpack.c.b16 %v1992, %v1991
      %v2023 = vunpack.c.l.b16 %v1925
      %v2024 = vunpack.c.l.b16 %v1928
      %v2025 = vunpack.c.l.b16 %v1931
      %v2026 = vunpack.c.l.b16 %v1934
      %v2027 = vunpack.c.l.b16 %v1937
      %v2028 = vunpack.c.l.b16 %v1940
      %v2029 = vunpack.c.l.b16 %v1943
      %v2030 = vunpack.c.l.b16 %v1946
      %v2031 = vunpack.c.l.b16 %v1949
      %v2032 = vunpack.c.l.b16 %v1952
      %v2033 = vpack.c.b16 %v2023, %v2023
      %v2034 = vpack.c.b16 %v2024, %v2024
      %v2035 = vpack.c.b16 %v2025, %v2025
      %v2036 = vpack.c.b16 %v2026, %v2026
      %v2037 = vpack.c.b16 %v2027, %v2027
      %v2038 = vpack.c.b16 %v2028, %v2028
      %v2039 = vpack.c.b16 %v2029, %v2029
      %v2040 = vpack.c.b16 %v2030, %v2030
      %v2041 = vpack.c.b16 %v2031, %v2031
      %v2042 = vpack.c.b16 %v2032, %v2032
      %v2044 = vshrl.u32 %v1993, 16
      %v2046 = vshll.u32 %v1993, 16
      %v2048 = vrot.slane %v2046, 1
      %v2049 = vor.u32 %v2044, %v2048
      %v2051 = vshll.u32 %v2033, 16
      %v2053 = vrot.slane %v2051, 1
      %v2054 = vsel %vm622, %v2049, %v2053
      %v2056 = vshrl.u32 %v1994, 16
      %v2058 = vshll.u32 %v1994, 16
      %v2060 = vrot.slane %v2058, 1
      %v2061 = vor.u32 %v2056, %v2060
      %v2063 = vshll.u32 %v2034, 16
      %v2065 = vrot.slane %v2063, 1
      %v2066 = vsel %vm622, %v2061, %v2065
      %v2068 = vshrl.u32 %v1995, 16
      %v2070 = vshll.u32 %v1995, 16
      %v2072 = vrot.slane %v2070, 1
      %v2073 = vor.u32 %v2068, %v2072
      %v2075 = vshll.u32 %v2035, 16
      %v2077 = vrot.slane %v2075, 1
      %v2078 = vsel %vm622, %v2073, %v2077
      %v2080 = vshrl.u32 %v1996, 16
      %v2082 = vshll.u32 %v1996, 16
      %v2084 = vrot.slane %v2082, 1
      %v2085 = vor.u32 %v2080, %v2084
      %v2087 = vshll.u32 %v2036, 16
      %v2089 = vrot.slane %v2087, 1
      %v2090 = vsel %vm622, %v2085, %v2089
      %v2092 = vshrl.u32 %v1997, 16
      %v2094 = vshll.u32 %v1997, 16
      %v2096 = vrot.slane %v2094, 1
      %v2097 = vor.u32 %v2092, %v2096
      %v2099 = vshll.u32 %v2037, 16
      %v2101 = vrot.slane %v2099, 1
      %v2102 = vsel %vm622, %v2097, %v2101
      %v2104 = vshrl.u32 %v1998, 16
      %v2106 = vshll.u32 %v1998, 16
      %v2108 = vrot.slane %v2106, 1
      %v2109 = vor.u32 %v2104, %v2108
      %v2111 = vshll.u32 %v2038, 16
      %v2113 = vrot.slane %v2111, 1
      %v2114 = vsel %vm622, %v2109, %v2113
      %v2116 = vshrl.u32 %v1999, 16
      %v2118 = vshll.u32 %v1999, 16
      %v2120 = vrot.slane %v2118, 1
      %v2121 = vor.u32 %v2116, %v2120
      %v2123 = vshll.u32 %v2039, 16
      %v2125 = vrot.slane %v2123, 1
      %v2126 = vsel %vm622, %v2121, %v2125
      %v2128 = vshrl.u32 %v2000, 16
      %v2130 = vshll.u32 %v2000, 16
      %v2132 = vrot.slane %v2130, 1
      %v2133 = vor.u32 %v2128, %v2132
      %v2135 = vshll.u32 %v2040, 16
      %v2137 = vrot.slane %v2135, 1
      %v2138 = vsel %vm622, %v2133, %v2137
      %v2140 = vshrl.u32 %v2001, 16
      %v2142 = vshll.u32 %v2001, 16
      %v2144 = vrot.slane %v2142, 1
      %v2145 = vor.u32 %v2140, %v2144
      %v2147 = vshll.u32 %v2041, 16
      %v2149 = vrot.slane %v2147, 1
      %v2150 = vsel %vm622, %v2145, %v2149
      %v2152 = vshrl.u32 %v2002, 16
      %v2154 = vshll.u32 %v2002, 16
      %v2156 = vrot.slane %v2154, 1
      %v2157 = vor.u32 %v2152, %v2156
      %v2159 = vshll.u32 %v2042, 16
      %v2161 = vrot.slane %v2159, 1
      %v2162 = vsel %vm622, %v2157, %v2161
      %v2173 = vrot.slane %v1993, 1
      %v2174 = vrot.slane %v2033, 1
      %v2175 = vsel %vm753, %v2173, %v2174
      %v2176 = vrot.slane %v1994, 1
      %v2177 = vrot.slane %v2034, 1
      %v2178 = vsel %vm753, %v2176, %v2177
      %v2179 = vrot.slane %v1995, 1
      %v2180 = vrot.slane %v2035, 1
      %v2181 = vsel %vm753, %v2179, %v2180
      %v2182 = vrot.slane %v1996, 1
      %v2183 = vrot.slane %v2036, 1
      %v2184 = vsel %vm753, %v2182, %v2183
      %v2185 = vrot.slane %v1997, 1
      %v2186 = vrot.slane %v2037, 1
      %v2187 = vsel %vm753, %v2185, %v2186
      %v2188 = vrot.slane %v1998, 1
      %v2189 = vrot.slane %v2038, 1
      %v2190 = vsel %vm753, %v2188, %v2189
      %v2191 = vrot.slane %v1999, 1
      %v2192 = vrot.slane %v2039, 1
      %v2193 = vsel %vm753, %v2191, %v2192
      %v2194 = vrot.slane %v2000, 1
      %v2195 = vrot.slane %v2040, 1
      %v2196 = vsel %vm753, %v2194, %v2195
      %v2197 = vrot.slane %v2001, 1
      %v2198 = vrot.slane %v2041, 1
      %v2199 = vsel %vm753, %v2197, %v2198
      %v2200 = vrot.slane %v2002, 1
      %v2201 = vrot.slane %v2042, 1
      %v2202 = vsel %vm753, %v2200, %v2201
      %s2213 = scalar_lea.vmem %s2, 384
      %v2214 = vld [vmem:[%s2213] sm:$0xf]
      %v2215 = vld [vmem:[%s2213 + $0x4] sm:$0xf]
      %v2216 = vld [vmem:[%s2213 + $0x8] sm:$0xf]
      %v2217 = vld [vmem:[%s2213 + $0xc] sm:$0xf]
      %v2218 = vld [vmem:[%s2213 + $0x10] sm:$0xf]
      %v2219 = vld [vmem:[%s2213 + $0x14] sm:$0xf]
      %v2220 = vld [vmem:[%s2213 + $0x18] sm:$0xf]
      %v2221 = vld [vmem:[%s2213 + $0x1c] sm:$0xf]
      %v2222 = vld [vmem:[%s2213 + $0x20] sm:$0xf]
      %v2223 = vld [vmem:[%s2213 + $0x24] sm:$0xf]
      %v2224 = vld [vmem:[%s2213 + $0x28] sm:$0xf]
      %v2225 = vld [vmem:[%s2213 + $0x2c] sm:$0xf]
      %v2226 = vld [vmem:[%s2213 + $0x30] sm:$0xf]
      %v2227 = vld [vmem:[%s2213 + $0x34] sm:$0xf]
      %v2228 = vld [vmem:[%s2213 + $0x38] sm:$0xf]
      %v2229 = vld [vmem:[%s2213 + $0x3c] sm:$0xf]
      %v2230 = vld [vmem:[%s2213 + $0x40] sm:$0xf]
      %v2231 = vld [vmem:[%s2213 + $0x44] sm:$0xf]
      %v2232 = vld [vmem:[%s2213 + $0x48] sm:$0xf]
      %v2233 = vld [vmem:[%s2213 + $0x4c] sm:$0xf]
      %v2234 = vld [vmem:[%s2213 + $0x50] sm:$0xf]
      %v2235 = vld [vmem:[%s2213 + $0x54] sm:$0xf]
      %v2236 = vld [vmem:[%s2213 + $0x58] sm:$0xf]
      %v2237 = vld [vmem:[%s2213 + $0x5c] sm:$0xf]
      %v2238 = vld [vmem:[%s2213 + $0x60] sm:$0xf]
      %v2239 = vld [vmem:[%s2213 + $0x64] sm:$0xf]
      %v2240 = vld [vmem:[%s2213 + $0x68] sm:$0xf]
      %v2241 = vld [vmem:[%s2213 + $0x6c] sm:$0xf]
      %v2242 = vld [vmem:[%s2213 + $0x70] sm:$0xf]
      %v2243 = vld [vmem:[%s2213 + $0x74] sm:$0xf]
      %v2244 = vld [vmem:[%s2213 + $0x78] sm:$0xf]
      %v2245 = vld [vmem:[%s2213 + $0x7c] sm:$0xf]
      %v2246 = vld [vmem:[%s2213 + $0x80] sm:$0xf]
      %v2247 = vld [vmem:[%s2213 + $0x84] sm:$0xf]
      %v2248 = vld [vmem:[%s2213 + $0x88] sm:$0xf]
      %v2249 = vld [vmem:[%s2213 + $0x8c] sm:$0xf]
      %v2250 = vld [vmem:[%s2213 + $0x90] sm:$0xf]
      %v2251 = vld [vmem:[%s2213 + $0x94] sm:$0xf]
      %v2252 = vld [vmem:[%s2213 + $0x98] sm:$0xf]
      %v2253 = vld [vmem:[%s2213 + $0x9c] sm:$0xf]
      %v2254 = vld [vmem:[%s2213 + $0xa0] sm:$0xf]
      %v2255 = vld [vmem:[%s2213 + $0xa4] sm:$0xf]
      %v2256 = vld [vmem:[%s2213 + $0xa8] sm:$0xf]
      %v2257 = vld [vmem:[%s2213 + $0xac] sm:$0xf]
      %v2258 = vld [vmem:[%s2213 + $0xb0] sm:$0xf]
      %v2259 = vld [vmem:[%s2213 + $0xb4] sm:$0xf]
      %v2260 = vld [vmem:[%s2213 + $0xb8] sm:$0xf]
      %v2261 = vld [vmem:[%s2213 + $0xbc] sm:$0xf]
      %v2310 = vunpack.c.l.b16 %v2214
      %v2311 = vunpack.c.l.b16 %v2215
      %v2312 = vunpack.c.l.b16 %v2216
      %v2313 = vunpack.c.l.b16 %v2217
      %v2314 = vunpack.c.l.b16 %v2218
      %v2315 = vunpack.c.l.b16 %v2219
      %v2316 = vunpack.c.l.b16 %v2220
      %v2317 = vunpack.c.l.b16 %v2221
      %v2318 = vunpack.c.l.b16 %v2222
      %v2319 = vunpack.c.l.b16 %v2223
      %v2320 = vunpack.c.l.b16 %v2224
      %v2321 = vunpack.c.l.b16 %v2225
      %v2322 = vunpack.c.l.b16 %v2226
      %v2323 = vunpack.c.l.b16 %v2227
      %v2324 = vunpack.c.l.b16 %v2228
      %v2325 = vunpack.c.l.b16 %v2229
      %v2326 = vunpack.c.l.b16 %v2230
      %v2327 = vunpack.c.l.b16 %v2231
      %v2328 = vunpack.c.l.b16 %v2232
      %v2329 = vunpack.c.l.b16 %v2233
      %v2330 = vunpack.c.l.b16 %v2234
      %v2331 = vunpack.c.l.b16 %v2235
      %v2332 = vunpack.c.l.b16 %v2236
      %v2333 = vunpack.c.l.b16 %v2237
      %v2334 = vunpack.c.l.b16 %v2238
      %v2335 = vunpack.c.l.b16 %v2239
      %v2336 = vunpack.c.l.b16 %v2240
      %v2337 = vunpack.c.l.b16 %v2241
      %v2338 = vunpack.c.l.b16 %v2242
      %v2339 = vunpack.c.l.b16 %v2243
      %v2340 = vunpack.c.l.b16 %v2244
      %v2341 = vunpack.c.l.b16 %v2245
      %v2342 = vunpack.c.l.b16 %v2246
      %v2343 = vunpack.c.l.b16 %v2247
      %v2344 = vunpack.c.l.b16 %v2248
      %v2345 = vunpack.c.l.b16 %v2249
      %v2346 = vunpack.c.l.b16 %v2250
      %v2347 = vunpack.c.l.b16 %v2251
      %v2348 = vunpack.c.l.b16 %v2252
      %v2349 = vunpack.c.l.b16 %v2253
      %v2350 = vunpack.c.l.b16 %v2254
      %v2351 = vunpack.c.l.b16 %v2255
      %v2352 = vunpack.c.l.b16 %v2256
      %v2353 = vunpack.c.l.b16 %v2257
      %v2354 = vunpack.c.l.b16 %v2258
      %v2355 = vunpack.c.l.b16 %v2259
      %v2356 = vunpack.c.l.b16 %v2260
      %v2357 = vunpack.c.l.b16 %v2261
      %v2358 = vpack.c.b16 %v2311, %v2310
      %v2359 = vpack.c.b16 %v2313, %v2312
      %v2360 = vpack.c.b16 %v2315, %v2314
      %v2361 = vpack.c.b16 %v2317, %v2316
      %v2362 = vpack.c.b16 %v2319, %v2318
      %v2363 = vpack.c.b16 %v2321, %v2320
      %v2364 = vpack.c.b16 %v2323, %v2322
      %v2365 = vpack.c.b16 %v2325, %v2324
      %v2366 = vpack.c.b16 %v2327, %v2326
      %v2367 = vpack.c.b16 %v2329, %v2328
      %v2368 = vpack.c.b16 %v2331, %v2330
      %v2369 = vpack.c.b16 %v2333, %v2332
      %v2370 = vpack.c.b16 %v2335, %v2334
      %v2371 = vpack.c.b16 %v2337, %v2336
      %v2372 = vpack.c.b16 %v2339, %v2338
      %v2373 = vpack.c.b16 %v2341, %v2340
      %v2374 = vpack.c.b16 %v2343, %v2342
      %v2375 = vpack.c.b16 %v2345, %v2344
      %v2376 = vpack.c.b16 %v2347, %v2346
      %v2377 = vpack.c.b16 %v2349, %v2348
      %v2378 = vpack.c.b16 %v2351, %v2350
      %v2379 = vpack.c.b16 %v2353, %v2352
      %v2380 = vpack.c.b16 %v2355, %v2354
      %v2381 = vpack.c.b16 %v2357, %v2356
      %2406 = vmatprep.subr.bf16.mxu0 0
      %2407 = vmatpush1.bf16.msra.mxu0 %v2365
      %2408 = vmatprep.subr.bf16.mxu0 0
      %2409 = vmatpush1.bf16.msra.mxu0 %v2364
      %2410 = vmatprep.subr.bf16.mxu0 0
      %2411 = vmatpush1.bf16.msra.mxu0 %v2363
      %2412 = vmatprep.subr.bf16.mxu0 0
      %2413 = vmatpush1.bf16.msra.mxu0 %v2362
      %2414 = vmatprep.subr.bf16.mxu0 0
      %2415 = vmatpush1.bf16.msra.mxu0 %v2361
      %2416 = vmatprep.subr.bf16.mxu0 0
      %2417 = vmatpush1.bf16.msra.mxu0 %v2360
      %2418 = vmatprep.subr.bf16.mxu0 0
      %2419 = vmatpush1.bf16.msra.mxu0 %v2359
      %2420 = vmatprep.subr.bf16.mxu0 0
      %2421 = vmatpush1.bf16.msra.mxu0 %v2358
      %2422 = vmatprep.subr.bf16.mxu0 0
      %2423 = vmatpush2.bf16.msra.mxu0 %v2373
      %2424 = vmatprep.subr.bf16.mxu0 0
      %2425 = vmatpush2.bf16.msra.mxu0 %v2372
      %2426 = vmatprep.subr.bf16.mxu0 0
      %2427 = vmatpush2.bf16.msra.mxu0 %v2371
      %2428 = vmatprep.subr.bf16.mxu0 0
      %2429 = vmatpush2.bf16.msra.mxu0 %v2370
      %2430 = vmatprep.subr.bf16.mxu0 0
      %2431 = vmatpush2.bf16.msra.mxu0 %v2369
      %2432 = vmatprep.subr.bf16.mxu0 0
      %2433 = vmatpush2.bf16.msra.mxu0 %v2368
      %2434 = vmatprep.subr.bf16.mxu0 0
      %2435 = vmatpush2.bf16.msra.mxu0 %v2367
      %2436 = vmatprep.subr.bf16.mxu0 0
      %2437 = vmatpush2.bf16.msra.mxu0 %v2366
      %2438 = vmatprep.mubr.bf16.mxu0 %v2054
      %2439 = vmatmul.mubr.bf16.gmra.mxu0 %v1993
      %v2440 = vpop.f32.mrf.mxu0
      %v2441 = vadd.f32 0.0, %v2440
      %v2442 = vpop.f32.mrf.mxu0
      %v2443 = vpop.f32.mrf.mxu0
      %v2444 = vadd.f32 0.0, %v2443
      %v2445 = vpop.f32.mrf.mxu0
      %2446 = vmatprep.mubr.bf16.mxu0 %v2066
      %2447 = vmatmul.mubr.bf16.gmra.mxu0 %v1994
      %v2448 = vpop.f32.mrf.mxu0
      %v2449 = vadd.f32 0.0, %v2448
      %v2450 = vpop.f32.mrf.mxu0
      %v2451 = vpop.f32.mrf.mxu0
      %v2452 = vadd.f32 0.0, %v2451
      %v2453 = vpop.f32.mrf.mxu0
      %2454 = vmatprep.mubr.bf16.mxu0 %v2078
      %2455 = vmatmul.mubr.bf16.gmra.mxu0 %v1995
      %v2456 = vpop.f32.mrf.mxu0
      %v2457 = vadd.f32 0.0, %v2456
      %v2458 = vpop.f32.mrf.mxu0
      %v2459 = vpop.f32.mrf.mxu0
      %v2460 = vadd.f32 0.0, %v2459
      %v2461 = vpop.f32.mrf.mxu0
      %2462 = vmatprep.mubr.bf16.mxu0 %v2090
      %2463 = vmatmul.mubr.bf16.gmra.mxu0 %v1996
      %v2464 = vpop.f32.mrf.mxu0
      %v2465 = vadd.f32 0.0, %v2464
      %v2466 = vpop.f32.mrf.mxu0
      %v2467 = vpop.f32.mrf.mxu0
      %v2468 = vadd.f32 0.0, %v2467
      %v2469 = vpop.f32.mrf.mxu0
      %2470 = vmatprep.mubr.bf16.mxu0 %v2102
      %2471 = vmatmul.mubr.bf16.gmra.mxu0 %v1997
      %v2472 = vpop.f32.mrf.mxu0
      %v2473 = vadd.f32 0.0, %v2472
      %v2474 = vpop.f32.mrf.mxu0
      %v2475 = vpop.f32.mrf.mxu0
      %v2476 = vadd.f32 0.0, %v2475
      %v2477 = vpop.f32.mrf.mxu0
      %2478 = vmatprep.mubr.bf16.mxu0 %v2114
      %2479 = vmatmul.mubr.bf16.gmra.mxu0 %v1998
      %v2480 = vpop.f32.mrf.mxu0
      %v2481 = vadd.f32 0.0, %v2480
      %v2482 = vpop.f32.mrf.mxu0
      %v2483 = vpop.f32.mrf.mxu0
      %v2484 = vadd.f32 0.0, %v2483
      %v2485 = vpop.f32.mrf.mxu0
      %2486 = vmatprep.mubr.bf16.mxu0 %v2126
      %2487 = vmatmul.mubr.bf16.gmra.mxu0 %v1999
      %v2488 = vpop.f32.mrf.mxu0
      %v2489 = vadd.f32 0.0, %v2488
      %v2490 = vpop.f32.mrf.mxu0
      %v2491 = vpop.f32.mrf.mxu0
      %v2492 = vadd.f32 0.0, %v2491
      %v2493 = vpop.f32.mrf.mxu0
      %2494 = vmatprep.mubr.bf16.mxu0 %v2138
      %2495 = vmatmul.mubr.bf16.gmra.mxu0 %v2000
      %v2496 = vpop.f32.mrf.mxu0
      %v2497 = vadd.f32 0.0, %v2496
      %v2498 = vpop.f32.mrf.mxu0
      %v2499 = vpop.f32.mrf.mxu0
      %v2500 = vadd.f32 0.0, %v2499
      %v2501 = vpop.f32.mrf.mxu0
      %2502 = vmatprep.mubr.bf16.mxu0 %v2150
      %2503 = vmatmul.mubr.bf16.gmra.mxu0 %v2001
      %v2504 = vpop.f32.mrf.mxu0
      %v2505 = vadd.f32 0.0, %v2504
      %v2506 = vpop.f32.mrf.mxu0
      %v2507 = vpop.f32.mrf.mxu0
      %v2508 = vadd.f32 0.0, %v2507
      %v2509 = vpop.f32.mrf.mxu0
      %2510 = vmatprep.mubr.bf16.mxu0 %v2162
      %2511 = vmatmul.mubr.bf16.gmra.mxu0 %v2002
      %v2512 = vpop.f32.mrf.mxu0
      %v2513 = vadd.f32 0.0, %v2512
      %v2514 = vpop.f32.mrf.mxu0
      %v2515 = vpop.f32.mrf.mxu0
      %v2516 = vadd.f32 0.0, %v2515
      %v2517 = vpop.f32.mrf.mxu0
      %2518 = vdwg.mxu0
      %2519 = vmatprep.subr.bf16.mxu0 0
      %2520 = vmatpush1.bf16.msra.mxu0 %v2381
      %2521 = vmatprep.subr.bf16.mxu0 0
      %2522 = vmatpush1.bf16.msra.mxu0 %v2380
      %2523 = vmatprep.subr.bf16.mxu0 0
      %2524 = vmatpush1.bf16.msra.mxu0 %v2379
      %2525 = vmatprep.subr.bf16.mxu0 0
      %2526 = vmatpush1.bf16.msra.mxu0 %v2378
      %2527 = vmatprep.subr.bf16.mxu0 0
      %2528 = vmatpush1.bf16.msra.mxu0 %v2377
      %2529 = vmatprep.subr.bf16.mxu0 0
      %2530 = vmatpush1.bf16.msra.mxu0 %v2376
      %2531 = vmatprep.subr.bf16.mxu0 0
      %2532 = vmatpush1.bf16.msra.mxu0 %v2375
      %2533 = vmatprep.subr.bf16.mxu0 0
      %2534 = vmatpush1.bf16.msra.mxu0 %v2374
      %2535 = vmatprep.subr.bf16.mxu0 0
      %2536 = vmatpush2.bf16.msra.mxu0 0
      %2537 = vmatprep.subr.bf16.mxu0 0
      %2538 = vmatpush2.bf16.msra.mxu0 0
      %2539 = vmatprep.subr.bf16.mxu0 0
      %2540 = vmatpush2.bf16.msra.mxu0 0
      %2541 = vmatprep.subr.bf16.mxu0 0
      %2542 = vmatpush2.bf16.msra.mxu0 0
      %2543 = vmatprep.subr.bf16.mxu0 0
      %2544 = vmatpush2.bf16.msra.mxu0 0
      %2545 = vmatprep.subr.bf16.mxu0 0
      %2546 = vmatpush2.bf16.msra.mxu0 0
      %2547 = vmatprep.subr.bf16.mxu0 0
      %2548 = vmatpush2.bf16.msra.mxu0 0
      %2549 = vmatprep.subr.bf16.mxu0 0
      %2550 = vmatpush2.bf16.msra.mxu0 0
      %2551 = vmatprep.mubr.bf16.mxu0 0
      %2552 = vmatmul.mubr.bf16.gmra.mxu0 %v2175
      %v2553 = vpop.f32.mrf.mxu0
      %v2554 = vadd.f32 %v2441, %v2553
      %v2555 = vpop.f32.mrf.mxu0
      %v2556 = vpop.f32.mrf.mxu0
      %v2557 = vadd.f32 %v2444, %v2556
      %v2558 = vpop.f32.mrf.mxu0
      %2559 = vmatprep.mubr.bf16.mxu0 0
      %2560 = vmatmul.mubr.bf16.gmra.mxu0 %v2178
      %v2561 = vpop.f32.mrf.mxu0
      %v2562 = vadd.f32 %v2449, %v2561
      %v2563 = vpop.f32.mrf.mxu0
      %v2564 = vpop.f32.mrf.mxu0
      %v2565 = vadd.f32 %v2452, %v2564
      %v2566 = vpop.f32.mrf.mxu0
      %2567 = vmatprep.mubr.bf16.mxu0 0
      %2568 = vmatmul.mubr.bf16.gmra.mxu0 %v2181
      %v2569 = vpop.f32.mrf.mxu0
      %v2570 = vadd.f32 %v2457, %v2569
      %v2571 = vpop.f32.mrf.mxu0
      %v2572 = vpop.f32.mrf.mxu0
      %v2573 = vadd.f32 %v2460, %v2572
      %v2574 = vpop.f32.mrf.mxu0
      %2575 = vmatprep.mubr.bf16.mxu0 0
      %2576 = vmatmul.mubr.bf16.gmra.mxu0 %v2184
      %v2577 = vpop.f32.mrf.mxu0
      %v2578 = vadd.f32 %v2465, %v2577
      %v2579 = vpop.f32.mrf.mxu0
      %v2580 = vpop.f32.mrf.mxu0
      %v2581 = vadd.f32 %v2468, %v2580
      %v2582 = vpop.f32.mrf.mxu0
      %2583 = vmatprep.mubr.bf16.mxu0 0
      %2584 = vmatmul.mubr.bf16.gmra.mxu0 %v2187
      %v2585 = vpop.f32.mrf.mxu0
      %v2586 = vadd.f32 %v2473, %v2585
      %v2587 = vpop.f32.mrf.mxu0
      %v2588 = vpop.f32.mrf.mxu0
      %v2589 = vadd.f32 %v2476, %v2588
      %v2590 = vpop.f32.mrf.mxu0
      %2591 = vmatprep.mubr.bf16.mxu0 0
      %2592 = vmatmul.mubr.bf16.gmra.mxu0 %v2190
      %v2593 = vpop.f32.mrf.mxu0
      %v2594 = vadd.f32 %v2481, %v2593
      %v2595 = vpop.f32.mrf.mxu0
      %v2596 = vpop.f32.mrf.mxu0
      %v2597 = vadd.f32 %v2484, %v2596
      %v2598 = vpop.f32.mrf.mxu0
      %2599 = vmatprep.mubr.bf16.mxu0 0
      %2600 = vmatmul.mubr.bf16.gmra.mxu0 %v2193
      %v2601 = vpop.f32.mrf.mxu0
      %v2602 = vadd.f32 %v2489, %v2601
      %v2603 = vpop.f32.mrf.mxu0
      %v2604 = vpop.f32.mrf.mxu0
      %v2605 = vadd.f32 %v2492, %v2604
      %v2606 = vpop.f32.mrf.mxu0
      %2607 = vmatprep.mubr.bf16.mxu0 0
      %2608 = vmatmul.mubr.bf16.gmra.mxu0 %v2196
      %v2609 = vpop.f32.mrf.mxu0
      %v2610 = vadd.f32 %v2497, %v2609
      %v2611 = vpop.f32.mrf.mxu0
      %v2612 = vpop.f32.mrf.mxu0
      %v2613 = vadd.f32 %v2500, %v2612
      %v2614 = vpop.f32.mrf.mxu0
      %2615 = vmatprep.mubr.bf16.mxu0 0
      %2616 = vmatmul.mubr.bf16.gmra.mxu0 %v2199
      %v2617 = vpop.f32.mrf.mxu0
      %v2618 = vadd.f32 %v2505, %v2617
      %v2619 = vpop.f32.mrf.mxu0
      %v2620 = vpop.f32.mrf.mxu0
      %v2621 = vadd.f32 %v2508, %v2620
      %v2622 = vpop.f32.mrf.mxu0
      %2623 = vmatprep.mubr.bf16.mxu0 0
      %2624 = vmatmul.mubr.bf16.gmra.mxu0 %v2202
      %v2625 = vpop.f32.mrf.mxu0
      %v2626 = vadd.f32 %v2513, %v2625
      %v2627 = vpop.f32.mrf.mxu0
      %v2628 = vpop.f32.mrf.mxu0
      %v2629 = vadd.f32 %v2516, %v2628
      %v2630 = vpop.f32.mrf.mxu0
      %2631 = vdwg.mxu0
      %v2632 = vadd.f32 %v1844, %v2554
      %v2633 = vadd.f32 %v1847, %v2557
      %v2634 = vadd.f32 %v1852, %v2562
      %v2635 = vadd.f32 %v1855, %v2565
      %v2636 = vadd.f32 %v1860, %v2570
      %v2637 = vadd.f32 %v1863, %v2573
      %v2638 = vadd.f32 %v1868, %v2578
      %v2639 = vadd.f32 %v1871, %v2581
      %v2640 = vadd.f32 %v1876, %v2586
      %v2641 = vadd.f32 %v1879, %v2589
      %v2642 = vadd.f32 %v1884, %v2594
      %v2643 = vadd.f32 %v1887, %v2597
      %v2644 = vadd.f32 %v1892, %v2602
      %v2645 = vadd.f32 %v1895, %v2605
      %v2646 = vadd.f32 %v1900, %v2610
      %v2647 = vadd.f32 %v1903, %v2613
      %v2648 = vadd.f32 %v1908, %v2618
      %v2649 = vadd.f32 %v1911, %v2621
      %v2650 = vadd.f32 %v1916, %v2626
      %v2651 = vadd.f32 %v1919, %v2629
      %v2652 = vld [vmem:[%s3] sm:$0x1]
      %v2654 = vlaneseq
      %v2655 = vshrl.u32 %v2654, 7
      %v2656 = vsub.s32 0, %v2655
      %v2657 = vrot.slane %v2652, %v2656
      %v2659 = vmul.f32 %v2632, %v2657
      %v2660 = vmul.f32 %v2633, %v2657
      %v2661 = vmul.f32 %v2634, %v2657
      %v2662 = vmul.f32 %v2635, %v2657
      %v2663 = vmul.f32 %v2636, %v2657
      %v2664 = vmul.f32 %v2637, %v2657
      %v2665 = vmul.f32 %v2638, %v2657
      %v2666 = vmul.f32 %v2639, %v2657
      %v2667 = vmul.f32 %v2640, %v2657
      %v2668 = vmul.f32 %v2641, %v2657
      %v2669 = vmul.f32 %v2642, %v2657
      %v2670 = vmul.f32 %v2643, %v2657
      %v2671 = vmul.f32 %v2644, %v2657
      %v2672 = vmul.f32 %v2645, %v2657
      %v2673 = vmul.f32 %v2646, %v2657
      %v2674 = vmul.f32 %v2647, %v2657
      %v2675 = vmul.f32 %v2648, %v2657
      %v2676 = vmul.f32 %v2649, %v2657
      %v2677 = vmul.f32 %v2650, %v2657
      %v2678 = vmul.f32 %v2651, %v2657
      %v2679 = vld [vmem:[%s4] sm:$0x1]
      %v2681 = vlaneseq
      %v2682 = vshrl.u32 %v2681, 7
      %v2683 = vsub.s32 0, %v2682
      %v2684 = vrot.slane %v2679, %v2683
      %v2686 = vadd.f32 %v2659, %v2684
      %v2687 = vadd.f32 %v2660, %v2684
      %v2688 = vadd.f32 %v2661, %v2684
      %v2689 = vadd.f32 %v2662, %v2684
      %v2690 = vadd.f32 %v2663, %v2684
      %v2691 = vadd.f32 %v2664, %v2684
      %v2692 = vadd.f32 %v2665, %v2684
      %v2693 = vadd.f32 %v2666, %v2684
      %v2694 = vadd.f32 %v2667, %v2684
      %v2695 = vadd.f32 %v2668, %v2684
      %v2696 = vadd.f32 %v2669, %v2684
      %v2697 = vadd.f32 %v2670, %v2684
      %v2698 = vadd.f32 %v2671, %v2684
      %v2699 = vadd.f32 %v2672, %v2684
      %v2700 = vadd.f32 %v2673, %v2684
      %v2701 = vadd.f32 %v2674, %v2684
      %v2702 = vadd.f32 %v2675, %v2684
      %v2703 = vadd.f32 %v2676, %v2684
      %v2704 = vadd.f32 %v2677, %v2684
      %v2705 = vadd.f32 %v2678, %v2684
      %v2706 = vmax.f32 %v2686, 0.0
      %v2707 = vmax.f32 %v2687, 0.0
      %v2708 = vmax.f32 %v2688, 0.0
      %v2709 = vmax.f32 %v2689, 0.0
      %v2710 = vmax.f32 %v2690, 0.0
      %v2711 = vmax.f32 %v2691, 0.0
      %v2712 = vmax.f32 %v2692, 0.0
      %v2713 = vmax.f32 %v2693, 0.0
      %v2714 = vmax.f32 %v2694, 0.0
      %v2715 = vmax.f32 %v2695, 0.0
      %v2716 = vmax.f32 %v2696, 0.0
      %v2717 = vmax.f32 %v2697, 0.0
      %v2718 = vmax.f32 %v2698, 0.0
      %v2719 = vmax.f32 %v2699, 0.0
      %v2720 = vmax.f32 %v2700, 0.0
      %v2721 = vmax.f32 %v2701, 0.0
      %v2722 = vmax.f32 %v2702, 0.0
      %v2723 = vmax.f32 %v2703, 0.0
      %v2724 = vmax.f32 %v2704, 0.0
      %v2725 = vmax.f32 %v2705, 0.0
      %s2726 = smul.u32 %s24, 8
      %s2727 = ssub.s32 %s2726, 1
      %v2728 = vstv %s2727
      %v2729 = vadd.s32 %v2728, 1
      %v2730 = vadd.s32 %v2728, 2
      %v2731 = vadd.s32 %v2728, 3
      %v2732 = vadd.s32 %v2728, 4
      %v2733 = vadd.s32 %v2728, 5
      %v2734 = vadd.s32 %v2728, 6
      %v2735 = vadd.s32 %v2728, 7
      %v2736 = vadd.s32 %v2728, 8
      %v2737 = vadd.s32 %v2728, 9
      %v2738 = vlaneseq
      %v2739 = vshrl.u32 %v2738, 7
      %v2740 = vadd.s32 %v2739, 8
      %vm2741 = vcmp.ge.s32.totalorder %v2728, 0
      %vm2742 = vcmp.ge.s32.totalorder %v2729, 0
      %vm2743 = vcmp.ge.s32.totalorder %v2730, 0
      %vm2744 = vcmp.ge.s32.totalorder %v2731, 0
      %vm2745 = vcmp.ge.s32.totalorder %v2732, 0
      %vm2746 = vcmp.ge.s32.totalorder %v2733, 0
      %vm2747 = vcmp.ge.s32.totalorder %v2734, 0
      %vm2748 = vcmp.ge.s32.totalorder %v2735, 0
      %vm2749 = vcmp.ge.s32.totalorder %v2736, 0
      %vm2750 = vcmp.ge.s32.totalorder %v2737, 0
      %vm2751 = vcmp.lt.s32.totalorder %v2728, 16
      %vm2752 = vcmp.lt.s32.totalorder %v2729, 16
      %vm2753 = vcmp.lt.s32.totalorder %v2730, 16
      %vm2754 = vcmp.lt.s32.totalorder %v2731, 16
      %vm2755 = vcmp.lt.s32.totalorder %v2732, 16
      %vm2756 = vcmp.lt.s32.totalorder %v2733, 16
      %vm2757 = vcmp.lt.s32.totalorder %v2734, 16
      %vm2758 = vcmp.lt.s32.totalorder %v2735, 16
      %vm2759 = vcmp.lt.s32.totalorder %v2736, 16
      %vm2760 = vcmp.lt.s32.totalorder %v2737, 16
      %vm2761 = vmand %vm2741, %vm2751
      %vm2762 = vmand %vm2742, %vm2752
      %vm2763 = vmand %vm2743, %vm2753
      %vm2764 = vmand %vm2744, %vm2754
      %vm2765 = vmand %vm2745, %vm2755
      %vm2766 = vmand %vm2746, %vm2756
      %vm2767 = vmand %vm2747, %vm2757
      %vm2768 = vmand %vm2748, %vm2758
      %vm2769 = vmand %vm2749, %vm2759
      %vm2770 = vmand %vm2750, %vm2760
      %vm2771 = vcmp.lt.s32.totalorder %v2739, 16
      %vm2772 = vcmp.lt.s32.totalorder %v2740, 16
      %v2773 = vsel %vm2761, 1, 0
      %v2774 = vsel %vm2762, 1, 0
      %v2775 = vsel %vm2763, 1, 0
      %v2776 = vsel %vm2764, 1, 0
      %v2777 = vsel %vm2765, 1, 0
      %v2778 = vsel %vm2766, 1, 0
      %v2779 = vsel %vm2767, 1, 0
      %v2780 = vsel %vm2768, 1, 0
      %v2781 = vsel %vm2769, 1, 0
      %v2782 = vsel %vm2770, 1, 0
      %vm2783 = vcmp.eq.s32.totalorder %v2773, 1
      %vm2784 = vcmp.eq.s32.totalorder %v2774, 1
      %vm2785 = vcmp.eq.s32.totalorder %v2775, 1
      %vm2786 = vcmp.eq.s32.totalorder %v2776, 1
      %vm2787 = vcmp.eq.s32.totalorder %v2777, 1
      %vm2788 = vcmp.eq.s32.totalorder %v2778, 1
      %vm2789 = vcmp.eq.s32.totalorder %v2779, 1
      %vm2790 = vcmp.eq.s32.totalorder %v2780, 1
      %vm2791 = vcmp.eq.s32.totalorder %v2781, 1
      %vm2792 = vcmp.eq.s32.totalorder %v2782, 1
      %v2793 = vsel %vm2771, 1, 0
      %v2794 = vsel %vm2772, 1, 0
      %vm2795 = vcmp.eq.s32.totalorder %v2793, 1
      %vm2796 = vcmp.eq.s32.totalorder %v2794, 1
      %vm2797 = vmand %vm2783, %vm2795
      %vm2798 = vmand %vm2783, %vm2796
      %vm2799 = vmand %vm2784, %vm2795
      %vm2800 = vmand %vm2784, %vm2796
      %vm2801 = vmand %vm2785, %vm2795
      %vm2802 = vmand %vm2785, %vm2796
      %vm2803 = vmand %vm2786, %vm2795
      %vm2804 = vmand %vm2786, %vm2796
      %vm2805 = vmand %vm2787, %vm2795
      %vm2806 = vmand %vm2787, %vm2796
      %vm2807 = vmand %vm2788, %vm2795
      %vm2808 = vmand %vm2788, %vm2796
      %vm2809 = vmand %vm2789, %vm2795
      %vm2810 = vmand %vm2789, %vm2796
      %vm2811 = vmand %vm2790, %vm2795
      %vm2812 = vmand %vm2790, %vm2796
      %vm2813 = vmand %vm2791, %vm2795
      %vm2814 = vmand %vm2791, %vm2796
      %vm2815 = vmand %vm2792, %vm2795
      %vm2816 = vmand %vm2792, %vm2796
      %v2817 = vsel %vm2797, 1, 0
      %v2818 = vsel %vm2798, 1, 0
      %v2819 = vsel %vm2799, 1, 0
      %v2820 = vsel %vm2800, 1, 0
      %v2821 = vsel %vm2801, 1, 0
      %v2822 = vsel %vm2802, 1, 0
      %v2823 = vsel %vm2803, 1, 0
      %v2824 = vsel %vm2804, 1, 0
      %v2825 = vsel %vm2805, 1, 0
      %v2826 = vsel %vm2806, 1, 0
      %v2827 = vsel %vm2807, 1, 0
      %v2828 = vsel %vm2808, 1, 0
      %v2829 = vsel %vm2809, 1, 0
      %v2830 = vsel %vm2810, 1, 0
      %v2831 = vsel %vm2811, 1, 0
      %v2832 = vsel %vm2812, 1, 0
      %v2833 = vsel %vm2813, 1, 0
      %v2834 = vsel %vm2814, 1, 0
      %v2835 = vsel %vm2815, 1, 0
      %v2836 = vsel %vm2816, 1, 0
      %vm2837 = vcmp.eq.s32.totalorder %v2817, 1
      %vm2838 = vcmp.eq.s32.totalorder %v2818, 1
      %vm2839 = vcmp.eq.s32.totalorder %v2819, 1
      %vm2840 = vcmp.eq.s32.totalorder %v2820, 1
      %vm2841 = vcmp.eq.s32.totalorder %v2821, 1
      %vm2842 = vcmp.eq.s32.totalorder %v2822, 1
      %vm2843 = vcmp.eq.s32.totalorder %v2823, 1
      %vm2844 = vcmp.eq.s32.totalorder %v2824, 1
      %vm2845 = vcmp.eq.s32.totalorder %v2825, 1
      %vm2846 = vcmp.eq.s32.totalorder %v2826, 1
      %vm2847 = vcmp.eq.s32.totalorder %v2827, 1
      %vm2848 = vcmp.eq.s32.totalorder %v2828, 1
      %vm2849 = vcmp.eq.s32.totalorder %v2829, 1
      %vm2850 = vcmp.eq.s32.totalorder %v2830, 1
      %vm2851 = vcmp.eq.s32.totalorder %v2831, 1
      %vm2852 = vcmp.eq.s32.totalorder %v2832, 1
      %vm2853 = vcmp.eq.s32.totalorder %v2833, 1
      %vm2854 = vcmp.eq.s32.totalorder %v2834, 1
      %vm2855 = vcmp.eq.s32.totalorder %v2835, 1
      %vm2856 = vcmp.eq.s32.totalorder %v2836, 1
      %v2857 = vsel %vm2837, %v2706, 0.0
      %v2858 = vsel %vm2838, %v2707, 0.0
      %v2859 = vsel %vm2839, %v2708, 0.0
      %v2860 = vsel %vm2840, %v2709, 0.0
      %v2861 = vsel %vm2841, %v2710, 0.0
      %v2862 = vsel %vm2842, %v2711, 0.0
      %v2863 = vsel %vm2843, %v2712, 0.0
      %v2864 = vsel %vm2844, %v2713, 0.0
      %v2865 = vsel %vm2845, %v2714, 0.0
      %v2866 = vsel %vm2846, %v2715, 0.0
      %v2867 = vsel %vm2847, %v2716, 0.0
      %v2868 = vsel %vm2848, %v2717, 0.0
      %v2869 = vsel %vm2849, %v2718, 0.0
      %v2870 = vsel %vm2850, %v2719, 0.0
      %v2871 = vsel %vm2851, %v2720, 0.0
      %v2872 = vsel %vm2852, %v2721, 0.0
      %v2873 = vsel %vm2853, %v2722, 0.0
      %v2874 = vsel %vm2854, %v2723, 0.0
      %v2875 = vsel %vm2855, %v2724, 0.0
      %v2876 = vsel %vm2856, %v2725, 0.0
      %vm2877 = vcmask 1040384
      %vm2878 = vsmask.f32 256
      %vm2879 = vmand %vm2877, %vm2878
      %v2880 = vld [vmem:[#allocation3] sm:$0x1]
      %v2881 = vsel %vm2879, 0, %v2880
      %2882 = vst [vmem:[#allocation3] sm:$0x1] %v2881
      %v2883 = vld [vmem:[#allocation3 + $0xc] sm:$0x1]
      %v2884 = vsel %vm2879, 0, %v2883
      %2885 = vst [vmem:[#allocation3 + $0xc] sm:$0x1] %v2884
      %v2886 = vld [vmem:[#allocation3 + $0x18] sm:$0x1]
      %v2887 = vsel %vm2879, 0, %v2886
      %2888 = vst [vmem:[#allocation3 + $0x18] sm:$0x1] %v2887
      %v2889 = vld [vmem:[#allocation3 + $0x24] sm:$0x1]
      %v2890 = vsel %vm2879, 0, %v2889
      %2891 = vst [vmem:[#allocation3 + $0x24] sm:$0x1] %v2890
      %v2892 = vld [vmem:[#allocation3 + $0x30] sm:$0x1]
      %v2893 = vsel %vm2879, 0, %v2892
      %2894 = vst [vmem:[#allocation3 + $0x30] sm:$0x1] %v2893
      %v2895 = vld [vmem:[#allocation3 + $0x3c] sm:$0x1]
      %v2896 = vsel %vm2879, 0, %v2895
      %2897 = vst [vmem:[#allocation3 + $0x3c] sm:$0x1] %v2896
      %v2898 = vld [vmem:[#allocation3 + $0x48] sm:$0x1]
      %v2899 = vsel %vm2879, 0, %v2898
      %2900 = vst [vmem:[#allocation3 + $0x48] sm:$0x1] %v2899
      %v2901 = vld [vmem:[#allocation3 + $0x54] sm:$0x1]
      %v2902 = vsel %vm2879, 0, %v2901
      %2903 = vst [vmem:[#allocation3 + $0x54] sm:$0x1] %v2902
      %v2904 = vld [vmem:[#allocation3 + $0x60] sm:$0x1]
      %v2905 = vsel %vm2879, 0, %v2904
      %2906 = vst [vmem:[#allocation3 + $0x60] sm:$0x1] %v2905
      %v2907 = vld [vmem:[#allocation3 + $0x6c] sm:$0x1]
      %v2908 = vsel %vm2879, 0, %v2907
      %2909 = vst [vmem:[#allocation3 + $0x6c] sm:$0x1] %v2908
      %v2910 = vpack.c.bf16 %v2858, %v2857
      %v2911 = vpack.c.bf16 %v2860, %v2859
      %v2912 = vpack.c.bf16 %v2862, %v2861
      %v2913 = vpack.c.bf16 %v2864, %v2863
      %v2914 = vpack.c.bf16 %v2866, %v2865
      %v2915 = vpack.c.bf16 %v2868, %v2867
      %v2916 = vpack.c.bf16 %v2870, %v2869
      %v2917 = vpack.c.bf16 %v2872, %v2871
      %v2918 = vpack.c.bf16 %v2874, %v2873
      %v2919 = vpack.c.bf16 %v2876, %v2875
      %v2930 = vunpack.c.l.b16 %v2910
      %v2931 = vunpack.c.h.b16 %v2910
      %v2932 = vunpack.c.l.b16 %v2911
      %v2933 = vunpack.c.h.b16 %v2911
      %v2934 = vunpack.c.l.b16 %v2912
      %v2935 = vunpack.c.h.b16 %v2912
      %v2936 = vunpack.c.l.b16 %v2913
      %v2937 = vunpack.c.h.b16 %v2913
      %v2938 = vunpack.c.l.b16 %v2914
      %v2939 = vunpack.c.h.b16 %v2914
      %v2940 = vunpack.c.l.b16 %v2915
      %v2941 = vunpack.c.h.b16 %v2915
      %v2942 = vunpack.c.l.b16 %v2916
      %v2943 = vunpack.c.h.b16 %v2916
      %v2944 = vunpack.c.l.b16 %v2917
      %v2945 = vunpack.c.h.b16 %v2917
      %v2946 = vunpack.c.l.b16 %v2918
      %v2947 = vunpack.c.h.b16 %v2918
      %v2948 = vunpack.c.l.b16 %v2919
      %v2949 = vunpack.c.h.b16 %v2919
      %v2950 = vpack.c.b16 %v2930, %v2930
      %v2951 = vpack.c.b16 %v2931, %v2931
      %v2952 = vpack.c.b16 %v2932, %v2932
      %v2953 = vpack.c.b16 %v2933, %v2933
      %v2954 = vpack.c.b16 %v2934, %v2934
      %v2955 = vpack.c.b16 %v2935, %v2935
      %v2956 = vpack.c.b16 %v2936, %v2936
      %v2957 = vpack.c.b16 %v2937, %v2937
      %v2958 = vpack.c.b16 %v2938, %v2938
      %v2959 = vpack.c.b16 %v2939, %v2939
      %v2960 = vpack.c.b16 %v2940, %v2940
      %v2961 = vpack.c.b16 %v2941, %v2941
      %v2962 = vpack.c.b16 %v2942, %v2942
      %v2963 = vpack.c.b16 %v2943, %v2943
      %v2964 = vpack.c.b16 %v2944, %v2944
      %v2965 = vpack.c.b16 %v2945, %v2945
      %v2966 = vpack.c.b16 %v2946, %v2946
      %v2967 = vpack.c.b16 %v2947, %v2947
      %v2968 = vpack.c.b16 %v2948, %v2948
      %v2969 = vpack.c.b16 %v2949, %v2949
      %vm2970 = vsmask.f32 4368
      %vm2971 = vmor %vm2878, %vm2970
      %v2973 = vshrl.u32 %v2950, 16
      %v2975 = vrot.slane %v2973, 7
      %v2976 = vshll.u32 %v2950, 16
      %v2978 = vor.u32 %v2975, %v2976
      %v2979 = vrot.slane %v2975, 4
      %v2981 = vshrl.u32 %v2951, 16
      %v2983 = vrot.slane %v2981, 7
      %v2984 = vshll.u32 %v2951, 16
      %v2986 = vor.u32 %v2983, %v2984
      %v2987 = vsel %vm2971, %v2979, %v2986
      %v2988 = vrot.slane %v2983, 4
      %v2990 = vshrl.u32 %v2952, 16
      %v2992 = vrot.slane %v2990, 7
      %v2993 = vshll.u32 %v2952, 16
      %v2995 = vor.u32 %v2992, %v2993
      %v2996 = vrot.slane %v2992, 4
      %v2998 = vshrl.u32 %v2953, 16
      %v3000 = vrot.slane %v2998, 7
      %v3001 = vshll.u32 %v2953, 16
      %v3003 = vor.u32 %v3000, %v3001
      %v3004 = vsel %vm2971, %v2996, %v3003
      %v3005 = vrot.slane %v3000, 4
      %v3007 = vshrl.u32 %v2954, 16
      %v3009 = vrot.slane %v3007, 7
      %v3010 = vshll.u32 %v2954, 16
      %v3012 = vor.u32 %v3009, %v3010
      %v3013 = vrot.slane %v3009, 4
      %v3015 = vshrl.u32 %v2955, 16
      %v3017 = vrot.slane %v3015, 7
      %v3018 = vshll.u32 %v2955, 16
      %v3020 = vor.u32 %v3017, %v3018
      %v3021 = vsel %vm2971, %v3013, %v3020
      %v3022 = vrot.slane %v3017, 4
      %v3024 = vshrl.u32 %v2956, 16
      %v3026 = vrot.slane %v3024, 7
      %v3027 = vshll.u32 %v2956, 16
      %v3029 = vor.u32 %v3026, %v3027
      %v3030 = vrot.slane %v3026, 4
      %v3032 = vshrl.u32 %v2957, 16
      %v3034 = vrot.slane %v3032, 7
      %v3035 = vshll.u32 %v2957, 16
      %v3037 = vor.u32 %v3034, %v3035
      %v3038 = vsel %vm2971, %v3030, %v3037
      %v3039 = vrot.slane %v3034, 4
      %v3041 = vshrl.u32 %v2958, 16
      %v3043 = vrot.slane %v3041, 7
      %v3044 = vshll.u32 %v2958, 16
      %v3046 = vor.u32 %v3043, %v3044
      %v3047 = vrot.slane %v3043, 4
      %v3049 = vshrl.u32 %v2959, 16
      %v3051 = vrot.slane %v3049, 7
      %v3052 = vshll.u32 %v2959, 16
      %v3054 = vor.u32 %v3051, %v3052
      %v3055 = vsel %vm2971, %v3047, %v3054
      %v3056 = vrot.slane %v3051, 4
      %v3058 = vshrl.u32 %v2960, 16
      %v3060 = vrot.slane %v3058, 7
      %v3061 = vshll.u32 %v2960, 16
      %v3063 = vor.u32 %v3060, %v3061
      %v3064 = vrot.slane %v3060, 4
      %v3066 = vshrl.u32 %v2961, 16
      %v3068 = vrot.slane %v3066, 7
      %v3069 = vshll.u32 %v2961, 16
      %v3071 = vor.u32 %v3068, %v3069
      %v3072 = vsel %vm2971, %v3064, %v3071
      %v3073 = vrot.slane %v3068, 4
      %v3075 = vshrl.u32 %v2962, 16
      %v3077 = vrot.slane %v3075, 7
      %v3078 = vshll.u32 %v2962, 16
      %v3080 = vor.u32 %v3077, %v3078
      %v3081 = vrot.slane %v3077, 4
      %v3083 = vshrl.u32 %v2963, 16
      %v3085 = vrot.slane %v3083, 7
      %v3086 = vshll.u32 %v2963, 16
      %v3088 = vor.u32 %v3085, %v3086
      %v3089 = vsel %vm2971, %v3081, %v3088
      %v3090 = vrot.slane %v3085, 4
      %v3092 = vshrl.u32 %v2964, 16
      %v3094 = vrot.slane %v3092, 7
      %v3095 = vshll.u32 %v2964, 16
      %v3097 = vor.u32 %v3094, %v3095
      %v3098 = vrot.slane %v3094, 4
      %v3100 = vshrl.u32 %v2965, 16
      %v3102 = vrot.slane %v3100, 7
      %v3103 = vshll.u32 %v2965, 16
      %v3105 = vor.u32 %v3102, %v3103
      %v3106 = vsel %vm2971, %v3098, %v3105
      %v3107 = vrot.slane %v3102, 4
      %v3109 = vshrl.u32 %v2966, 16
      %v3111 = vrot.slane %v3109, 7
      %v3112 = vshll.u32 %v2966, 16
      %v3114 = vor.u32 %v3111, %v3112
      %v3115 = vrot.slane %v3111, 4
      %v3117 = vshrl.u32 %v2967, 16
      %v3119 = vrot.slane %v3117, 7
      %v3120 = vshll.u32 %v2967, 16
      %v3122 = vor.u32 %v3119, %v3120
      %v3123 = vsel %vm2971, %v3115, %v3122
      %v3124 = vrot.slane %v3119, 4
      %v3126 = vshrl.u32 %v2968, 16
      %v3128 = vrot.slane %v3126, 7
      %v3129 = vshll.u32 %v2968, 16
      %v3131 = vor.u32 %v3128, %v3129
      %v3132 = vrot.slane %v3128, 4
      %v3134 = vshrl.u32 %v2969, 16
      %v3136 = vrot.slane %v3134, 7
      %v3137 = vshll.u32 %v2969, 16
      %v3139 = vor.u32 %v3136, %v3137
      %v3140 = vsel %vm2971, %v3132, %v3139
      %v3141 = vrot.slane %v3136, 4
      %vm3172 = vcmask 1043456
      %vm3173 = vsmask.f32 7938
      %vm3174 = vmand %vm3172, %vm3173
      %v3175 = vld [vmem:[#allocation3] sm:$0xf]
      %v3176 = vsel %vm3174, %v2978, %v3175
      %3177 = vst [vmem:[#allocation3] sm:$0xf] %v3176
      %3178 = vst [vmem:[#allocation3 + $0x4] sm:$0xf] %v2987
      %v3179 = vld [vmem:[#allocation3 + $0x8] sm:$0x1]
      %v3180 = vsel %vm2879, %v2988, %v3179
      %3181 = vst [vmem:[#allocation3 + $0x8] sm:$0x1] %v3180
      %v3182 = vld [vmem:[#allocation3 + $0xc] sm:$0xf]
      %v3183 = vsel %vm3174, %v2995, %v3182
      %3184 = vst [vmem:[#allocation3 + $0xc] sm:$0xf] %v3183
      %3185 = vst [vmem:[#allocation3 + $0x10] sm:$0xf] %v3004
      %v3186 = vld [vmem:[#allocation3 + $0x14] sm:$0x1]
      %v3187 = vsel %vm2879, %v3005, %v3186
      %3188 = vst [vmem:[#allocation3 + $0x14] sm:$0x1] %v3187
      %v3189 = vld [vmem:[#allocation3 + $0x18] sm:$0xf]
      %v3190 = vsel %vm3174, %v3012, %v3189
      %3191 = vst [vmem:[#allocation3 + $0x18] sm:$0xf] %v3190
      %3192 = vst [vmem:[#allocation3 + $0x1c] sm:$0xf] %v3021
      %v3193 = vld [vmem:[#allocation3 + $0x20] sm:$0x1]
      %v3194 = vsel %vm2879, %v3022, %v3193
      %3195 = vst [vmem:[#allocation3 + $0x20] sm:$0x1] %v3194
      %v3196 = vld [vmem:[#allocation3 + $0x24] sm:$0xf]
      %v3197 = vsel %vm3174, %v3029, %v3196
      %3198 = vst [vmem:[#allocation3 + $0x24] sm:$0xf] %v3197
      %3199 = vst [vmem:[#allocation3 + $0x28] sm:$0xf] %v3038
      %v3200 = vld [vmem:[#allocation3 + $0x2c] sm:$0x1]
      %v3201 = vsel %vm2879, %v3039, %v3200
      %3202 = vst [vmem:[#allocation3 + $0x2c] sm:$0x1] %v3201
      %v3203 = vld [vmem:[#allocation3 + $0x30] sm:$0xf]
      %v3204 = vsel %vm3174, %v3046, %v3203
      %3205 = vst [vmem:[#allocation3 + $0x30] sm:$0xf] %v3204
      %3206 = vst [vmem:[#allocation3 + $0x34] sm:$0xf] %v3055
      %v3207 = vld [vmem:[#allocation3 + $0x38] sm:$0x1]
      %v3208 = vsel %vm2879, %v3056, %v3207
      %3209 = vst [vmem:[#allocation3 + $0x38] sm:$0x1] %v3208
      %v3210 = vld [vmem:[#allocation3 + $0x3c] sm:$0xf]
      %v3211 = vsel %vm3174, %v3063, %v3210
      %3212 = vst [vmem:[#allocation3 + $0x3c] sm:$0xf] %v3211
      %3213 = vst [vmem:[#allocation3 + $0x40] sm:$0xf] %v3072
      %v3214 = vld [vmem:[#allocation3 + $0x44] sm:$0x1]
      %v3215 = vsel %vm2879, %v3073, %v3214
      %3216 = vst [vmem:[#allocation3 + $0x44] sm:$0x1] %v3215
      %v3217 = vld [vmem:[#allocation3 + $0x48] sm:$0xf]
      %v3218 = vsel %vm3174, %v3080, %v3217
      %3219 = vst [vmem:[#allocation3 + $0x48] sm:$0xf] %v3218
      %3220 = vst [vmem:[#allocation3 + $0x4c] sm:$0xf] %v3089
      %v3221 = vld [vmem:[#allocation3 + $0x50] sm:$0x1]
      %v3222 = vsel %vm2879, %v3090, %v3221
      %3223 = vst [vmem:[#allocation3 + $0x50] sm:$0x1] %v3222
      %v3224 = vld [vmem:[#allocation3 + $0x54] sm:$0xf]
      %v3225 = vsel %vm3174, %v3097, %v3224
      %3226 = vst [vmem:[#allocation3 + $0x54] sm:$0xf] %v3225
      %3227 = vst [vmem:[#allocation3 + $0x58] sm:$0xf] %v3106
      %v3228 = vld [vmem:[#allocation3 + $0x5c] sm:$0x1]
      %v3229 = vsel %vm2879, %v3107, %v3228
      %3230 = vst [vmem:[#allocation3 + $0x5c] sm:$0x1] %v3229
      %v3231 = vld [vmem:[#allocation3 + $0x60] sm:$0xf]
      %v3232 = vsel %vm3174, %v3114, %v3231
      %3233 = vst [vmem:[#allocation3 + $0x60] sm:$0xf] %v3232
      %3234 = vst [vmem:[#allocation3 + $0x64] sm:$0xf] %v3123
      %v3235 = vld [vmem:[#allocation3 + $0x68] sm:$0x1]
      %v3236 = vsel %vm2879, %v3124, %v3235
      %3237 = vst [vmem:[#allocation3 + $0x68] sm:$0x1] %v3236
      %v3238 = vld [vmem:[#allocation3 + $0x6c] sm:$0xf]
      %v3239 = vsel %vm3174, %v3131, %v3238
      %3240 = vst [vmem:[#allocation3 + $0x6c] sm:$0xf] %v3239
      %3241 = vst [vmem:[#allocation3 + $0x70] sm:$0xf] %v3140
      %v3242 = vld [vmem:[#allocation3 + $0x74] sm:$0x1]
      %v3243 = vsel %vm2879, %v3141, %v3242
      %3244 = vst [vmem:[#allocation3 + $0x74] sm:$0x1] %v3243
      %vm3245 = vmand %vm2877, %vm3173
      %v3246 = vld [vmem:[#allocation3 + $0x8] sm:$0x1]
      %v3247 = vsel %vm3245, 0, %v3246
      %3248 = vst [vmem:[#allocation3 + $0x8] sm:$0x1] %v3247
      %v3249 = vld [vmem:[#allocation3 + $0x14] sm:$0x1]
      %v3250 = vsel %vm3245, 0, %v3249
      %3251 = vst [vmem:[#allocation3 + $0x14] sm:$0x1] %v3250
      %v3252 = vld [vmem:[#allocation3 + $0x20] sm:$0x1]
      %v3253 = vsel %vm3245, 0, %v3252
      %3254 = vst [vmem:[#allocation3 + $0x20] sm:$0x1] %v3253
      %v3255 = vld [vmem:[#allocation3 + $0x2c] sm:$0x1]
      %v3256 = vsel %vm3245, 0, %v3255
      %3257 = vst [vmem:[#allocation3 + $0x2c] sm:$0x1] %v3256
      %v3258 = vld [vmem:[#allocation3 + $0x38] sm:$0x1]
      %v3259 = vsel %vm3245, 0, %v3258
      %3260 = vst [vmem:[#allocation3 + $0x38] sm:$0x1] %v3259
      %v3261 = vld [vmem:[#allocation3 + $0x44] sm:$0x1]
      %v3262 = vsel %vm3245, 0, %v3261
      %3263 = vst [vmem:[#allocation3 + $0x44] sm:$0x1] %v3262
      %v3264 = vld [vmem:[#allocation3 + $0x50] sm:$0x1]
      %v3265 = vsel %vm3245, 0, %v3264
      %3266 = vst [vmem:[#allocation3 + $0x50] sm:$0x1] %v3265
      %v3267 = vld [vmem:[#allocation3 + $0x5c] sm:$0x1]
      %v3268 = vsel %vm3245, 0, %v3267
      %3269 = vst [vmem:[#allocation3 + $0x5c] sm:$0x1] %v3268
      %v3270 = vld [vmem:[#allocation3 + $0x68] sm:$0x1]
      %v3271 = vsel %vm3245, 0, %v3270
      %3272 = vst [vmem:[#allocation3 + $0x68] sm:$0x1] %v3271
      %v3273 = vld [vmem:[#allocation3 + $0x74] sm:$0x1]
      %v3274 = vsel %vm3245, 0, %v3273
      %3275 = vst [vmem:[#allocation3 + $0x74] sm:$0x1] %v3274
      %v3276 = vld [vmem:[#allocation3] sm:$0xf]
      %v3277 = vld [vmem:[#allocation3 + $0x4] sm:$0xf]
      %v3278 = vld [vmem:[#allocation3 + $0x8] sm:$0xf]
      %v3279 = vld [vmem:[#allocation3 + $0xc] sm:$0xf]
      %v3280 = vld [vmem:[#allocation3 + $0x10] sm:$0xf]
      %v3281 = vld [vmem:[#allocation3 + $0x14] sm:$0xf]
      %v3282 = vld [vmem:[#allocation3 + $0x18] sm:$0xf]
      %v3283 = vld [vmem:[#allocation3 + $0x1c] sm:$0xf]
      %v3284 = vld [vmem:[#allocation3 + $0x20] sm:$0xf]
      %v3285 = vld [vmem:[#allocation3 + $0x24] sm:$0xf]
      %v3286 = vld [vmem:[#allocation3 + $0x28] sm:$0xf]
      %v3287 = vld [vmem:[#allocation3 + $0x2c] sm:$0xf]
      %v3288 = vld [vmem:[#allocation3 + $0x30] sm:$0xf]
      %v3289 = vld [vmem:[#allocation3 + $0x34] sm:$0xf]
      %v3290 = vld [vmem:[#allocation3 + $0x38] sm:$0xf]
      %v3291 = vld [vmem:[#allocation3 + $0x3c] sm:$0xf]
      %v3292 = vld [vmem:[#allocation3 + $0x40] sm:$0xf]
      %v3293 = vld [vmem:[#allocation3 + $0x44] sm:$0xf]
      %v3294 = vld [vmem:[#allocation3 + $0x48] sm:$0xf]
      %v3295 = vld [vmem:[#allocation3 + $0x4c] sm:$0xf]
      %v3296 = vld [vmem:[#allocation3 + $0x50] sm:$0xf]
      %v3297 = vld [vmem:[#allocation3 + $0x54] sm:$0xf]
      %v3298 = vld [vmem:[#allocation3 + $0x58] sm:$0xf]
      %v3299 = vld [vmem:[#allocation3 + $0x5c] sm:$0xf]
      %v3316 = vunpack.c.l.b16 %v3276
      %v3317 = vunpack.c.l.b16 %v3277
      %v3318 = vunpack.c.l.b16 %v3279
      %v3319 = vunpack.c.l.b16 %v3280
      %v3320 = vunpack.c.l.b16 %v3282
      %v3321 = vunpack.c.l.b16 %v3283
      %v3322 = vunpack.c.l.b16 %v3285
      %v3323 = vunpack.c.l.b16 %v3286
      %v3324 = vunpack.c.l.b16 %v3288
      %v3325 = vunpack.c.l.b16 %v3289
      %v3326 = vunpack.c.l.b16 %v3291
      %v3327 = vunpack.c.l.b16 %v3292
      %v3328 = vunpack.c.l.b16 %v3294
      %v3329 = vunpack.c.l.b16 %v3295
      %v3330 = vunpack.c.l.b16 %v3297
      %v3331 = vunpack.c.l.b16 %v3298
      %v3332 = vpack.c.b16 %v3317, %v3316
      %v3333 = vpack.c.b16 %v3319, %v3318
      %v3334 = vpack.c.b16 %v3321, %v3320
      %v3335 = vpack.c.b16 %v3323, %v3322
      %v3336 = vpack.c.b16 %v3325, %v3324
      %v3337 = vpack.c.b16 %v3327, %v3326
      %v3338 = vpack.c.b16 %v3329, %v3328
      %v3339 = vpack.c.b16 %v3331, %v3330
      %v3356 = vunpack.c.l.b16 %v3278
      %v3357 = vunpack.c.l.b16 %v3281
      %v3358 = vunpack.c.l.b16 %v3284
      %v3359 = vunpack.c.l.b16 %v3287
      %v3360 = vunpack.c.l.b16 %v3290
      %v3361 = vunpack.c.l.b16 %v3293
      %v3362 = vunpack.c.l.b16 %v3296
      %v3363 = vunpack.c.l.b16 %v3299
      %v3364 = vpack.c.b16 %v3356, %v3356
      %v3365 = vpack.c.b16 %v3357, %v3357
      %v3366 = vpack.c.b16 %v3358, %v3358
      %v3367 = vpack.c.b16 %v3359, %v3359
      %v3368 = vpack.c.b16 %v3360, %v3360
      %v3369 = vpack.c.b16 %v3361, %v3361
      %v3370 = vpack.c.b16 %v3362, %v3362
      %v3371 = vpack.c.b16 %v3363, %v3363
      %v3373 = vshrl.u32 %v3332, 16
      %v3375 = vshll.u32 %v3332, 16
      %v3377 = vrot.slane %v3375, 1
      %v3378 = vor.u32 %v3373, %v3377
      %v3380 = vshll.u32 %v3364, 16
      %v3382 = vrot.slane %v3380, 1
      %v3383 = vsel %vm622, %v3378, %v3382
      %v3385 = vshrl.u32 %v3333, 16
      %v3387 = vshll.u32 %v3333, 16
      %v3389 = vrot.slane %v3387, 1
      %v3390 = vor.u32 %v3385, %v3389
      %v3392 = vshll.u32 %v3365, 16
      %v3394 = vrot.slane %v3392, 1
      %v3395 = vsel %vm622, %v3390, %v3394
      %v3397 = vshrl.u32 %v3334, 16
      %v3399 = vshll.u32 %v3334, 16
      %v3401 = vrot.slane %v3399, 1
      %v3402 = vor.u32 %v3397, %v3401
      %v3404 = vshll.u32 %v3366, 16
      %v3406 = vrot.slane %v3404, 1
      %v3407 = vsel %vm622, %v3402, %v3406
      %v3409 = vshrl.u32 %v3335, 16
      %v3411 = vshll.u32 %v3335, 16
      %v3413 = vrot.slane %v3411, 1
      %v3414 = vor.u32 %v3409, %v3413
      %v3416 = vshll.u32 %v3367, 16
      %v3418 = vrot.slane %v3416, 1
      %v3419 = vsel %vm622, %v3414, %v3418
      %v3421 = vshrl.u32 %v3336, 16
      %v3423 = vshll.u32 %v3336, 16
      %v3425 = vrot.slane %v3423, 1
      %v3426 = vor.u32 %v3421, %v3425
      %v3428 = vshll.u32 %v3368, 16
      %v3430 = vrot.slane %v3428, 1
      %v3431 = vsel %vm622, %v3426, %v3430
      %v3433 = vshrl.u32 %v3337, 16
      %v3435 = vshll.u32 %v3337, 16
      %v3437 = vrot.slane %v3435, 1
      %v3438 = vor.u32 %v3433, %v3437
      %v3440 = vshll.u32 %v3369, 16
      %v3442 = vrot.slane %v3440, 1
      %v3443 = vsel %vm622, %v3438, %v3442
      %v3445 = vshrl.u32 %v3338, 16
      %v3447 = vshll.u32 %v3338, 16
      %v3449 = vrot.slane %v3447, 1
      %v3450 = vor.u32 %v3445, %v3449
      %v3452 = vshll.u32 %v3370, 16
      %v3454 = vrot.slane %v3452, 1
      %v3455 = vsel %vm622, %v3450, %v3454
      %v3457 = vshrl.u32 %v3339, 16
      %v3459 = vshll.u32 %v3339, 16
      %v3461 = vrot.slane %v3459, 1
      %v3462 = vor.u32 %v3457, %v3461
      %v3464 = vshll.u32 %v3371, 16
      %v3466 = vrot.slane %v3464, 1
      %v3467 = vsel %vm622, %v3462, %v3466
      %v3476 = vrot.slane %v3332, 1
      %v3477 = vrot.slane %v3364, 1
      %v3478 = vsel %vm753, %v3476, %v3477
      %v3479 = vrot.slane %v3333, 1
      %v3480 = vrot.slane %v3365, 1
      %v3481 = vsel %vm753, %v3479, %v3480
      %v3482 = vrot.slane %v3334, 1
      %v3483 = vrot.slane %v3366, 1
      %v3484 = vsel %vm753, %v3482, %v3483
      %v3485 = vrot.slane %v3335, 1
      %v3486 = vrot.slane %v3367, 1
      %v3487 = vsel %vm753, %v3485, %v3486
      %v3488 = vrot.slane %v3336, 1
      %v3489 = vrot.slane %v3368, 1
      %v3490 = vsel %vm753, %v3488, %v3489
      %v3491 = vrot.slane %v3337, 1
      %v3492 = vrot.slane %v3369, 1
      %v3493 = vsel %vm753, %v3491, %v3492
      %v3494 = vrot.slane %v3338, 1
      %v3495 = vrot.slane %v3370, 1
      %v3496 = vsel %vm753, %v3494, %v3495
      %v3497 = vrot.slane %v3339, 1
      %v3498 = vrot.slane %v3371, 1
      %v3499 = vsel %vm753, %v3497, %v3498
      %v3508 = vld [vmem:[%s5] sm:$0xf]
      %v3509 = vld [vmem:[%s5 + $0x4] sm:$0xf]
      %v3510 = vld [vmem:[%s5 + $0x8] sm:$0xf]
      %v3511 = vld [vmem:[%s5 + $0xc] sm:$0xf]
      %v3512 = vld [vmem:[%s5 + $0x10] sm:$0xf]
      %v3513 = vld [vmem:[%s5 + $0x14] sm:$0xf]
      %v3514 = vld [vmem:[%s5 + $0x18] sm:$0xf]
      %v3515 = vld [vmem:[%s5 + $0x1c] sm:$0xf]
      %v3516 = vld [vmem:[%s5 + $0x20] sm:$0xf]
      %v3517 = vld [vmem:[%s5 + $0x24] sm:$0xf]
      %v3518 = vld [vmem:[%s5 + $0x28] sm:$0xf]
      %v3519 = vld [vmem:[%s5 + $0x2c] sm:$0xf]
      %v3520 = vld [vmem:[%s5 + $0x30] sm:$0xf]
      %v3521 = vld [vmem:[%s5 + $0x34] sm:$0xf]
      %v3522 = vld [vmem:[%s5 + $0x38] sm:$0xf]
      %v3523 = vld [vmem:[%s5 + $0x3c] sm:$0xf]
      %v3524 = vld [vmem:[%s5 + $0x40] sm:$0xf]
      %v3525 = vld [vmem:[%s5 + $0x44] sm:$0xf]
      %v3526 = vld [vmem:[%s5 + $0x48] sm:$0xf]
      %v3527 = vld [vmem:[%s5 + $0x4c] sm:$0xf]
      %v3528 = vld [vmem:[%s5 + $0x50] sm:$0xf]
      %v3529 = vld [vmem:[%s5 + $0x54] sm:$0xf]
      %v3530 = vld [vmem:[%s5 + $0x58] sm:$0xf]
      %v3531 = vld [vmem:[%s5 + $0x5c] sm:$0xf]
      %v3532 = vld [vmem:[%s5 + $0x60] sm:$0xf]
      %v3533 = vld [vmem:[%s5 + $0x64] sm:$0xf]
      %v3534 = vld [vmem:[%s5 + $0x68] sm:$0xf]
      %v3535 = vld [vmem:[%s5 + $0x6c] sm:$0xf]
      %v3536 = vld [vmem:[%s5 + $0x70] sm:$0xf]
      %v3537 = vld [vmem:[%s5 + $0x74] sm:$0xf]
      %v3538 = vld [vmem:[%s5 + $0x78] sm:$0xf]
      %v3539 = vld [vmem:[%s5 + $0x7c] sm:$0xf]
      %v3540 = vld [vmem:[%s5 + $0x80] sm:$0xf]
      %v3541 = vld [vmem:[%s5 + $0x84] sm:$0xf]
      %v3542 = vld [vmem:[%s5 + $0x88] sm:$0xf]
      %v3543 = vld [vmem:[%s5 + $0x8c] sm:$0xf]
      %v3544 = vld [vmem:[%s5 + $0x90] sm:$0xf]
      %v3545 = vld [vmem:[%s5 + $0x94] sm:$0xf]
      %v3546 = vld [vmem:[%s5 + $0x98] sm:$0xf]
      %v3547 = vld [vmem:[%s5 + $0x9c] sm:$0xf]
      %v3548 = vld [vmem:[%s5 + $0xa0] sm:$0xf]
      %v3549 = vld [vmem:[%s5 + $0xa4] sm:$0xf]
      %v3550 = vld [vmem:[%s5 + $0xa8] sm:$0xf]
      %v3551 = vld [vmem:[%s5 + $0xac] sm:$0xf]
      %v3552 = vld [vmem:[%s5 + $0xb0] sm:$0xf]
      %v3553 = vld [vmem:[%s5 + $0xb4] sm:$0xf]
      %v3554 = vld [vmem:[%s5 + $0xb8] sm:$0xf]
      %v3555 = vld [vmem:[%s5 + $0xbc] sm:$0xf]
      %s3556 = scalar_lea.vmem [#allocation3], 12
      %v3557 = vld [vmem:[%s3556] sm:$0xf]
      %v3558 = vld [vmem:[%s3556 + $0x4] sm:$0xf]
      %v3559 = vld [vmem:[%s3556 + $0x8] sm:$0xf]
      %v3560 = vld [vmem:[%s3556 + $0xc] sm:$0xf]
      %v3561 = vld [vmem:[%s3556 + $0x10] sm:$0xf]
      %v3562 = vld [vmem:[%s3556 + $0x14] sm:$0xf]
      %v3563 = vld [vmem:[%s3556 + $0x18] sm:$0xf]
      %v3564 = vld [vmem:[%s3556 + $0x1c] sm:$0xf]
      %v3565 = vld [vmem:[%s3556 + $0x20] sm:$0xf]
      %v3566 = vld [vmem:[%s3556 + $0x24] sm:$0xf]
      %v3567 = vld [vmem:[%s3556 + $0x28] sm:$0xf]
      %v3568 = vld [vmem:[%s3556 + $0x2c] sm:$0xf]
      %v3569 = vld [vmem:[%s3556 + $0x30] sm:$0xf]
      %v3570 = vld [vmem:[%s3556 + $0x34] sm:$0xf]
      %v3571 = vld [vmem:[%s3556 + $0x38] sm:$0xf]
      %v3572 = vld [vmem:[%s3556 + $0x3c] sm:$0xf]
      %v3573 = vld [vmem:[%s3556 + $0x40] sm:$0xf]
      %v3574 = vld [vmem:[%s3556 + $0x44] sm:$0xf]
      %v3575 = vld [vmem:[%s3556 + $0x48] sm:$0xf]
      %v3576 = vld [vmem:[%s3556 + $0x4c] sm:$0xf]
      %v3577 = vld [vmem:[%s3556 + $0x50] sm:$0xf]
      %v3578 = vld [vmem:[%s3556 + $0x54] sm:$0xf]
      %v3579 = vld [vmem:[%s3556 + $0x58] sm:$0xf]
      %v3580 = vld [vmem:[%s3556 + $0x5c] sm:$0xf]
      %v3597 = vunpack.c.l.b16 %v3557
      %v3598 = vunpack.c.l.b16 %v3558
      %v3599 = vunpack.c.l.b16 %v3560
      %v3600 = vunpack.c.l.b16 %v3561
      %v3601 = vunpack.c.l.b16 %v3563
      %v3602 = vunpack.c.l.b16 %v3564
      %v3603 = vunpack.c.l.b16 %v3566
      %v3604 = vunpack.c.l.b16 %v3567
      %v3605 = vunpack.c.l.b16 %v3569
      %v3606 = vunpack.c.l.b16 %v3570
      %v3607 = vunpack.c.l.b16 %v3572
      %v3608 = vunpack.c.l.b16 %v3573
      %v3609 = vunpack.c.l.b16 %v3575
      %v3610 = vunpack.c.l.b16 %v3576
      %v3611 = vunpack.c.l.b16 %v3578
      %v3612 = vunpack.c.l.b16 %v3579
      %v3613 = vpack.c.b16 %v3598, %v3597
      %v3614 = vpack.c.b16 %v3600, %v3599
      %v3615 = vpack.c.b16 %v3602, %v3601
      %v3616 = vpack.c.b16 %v3604, %v3603
      %v3617 = vpack.c.b16 %v3606, %v3605
      %v3618 = vpack.c.b16 %v3608, %v3607
      %v3619 = vpack.c.b16 %v3610, %v3609
      %v3620 = vpack.c.b16 %v3612, %v3611
      %v3637 = vunpack.c.l.b16 %v3559
      %v3638 = vunpack.c.l.b16 %v3562
      %v3639 = vunpack.c.l.b16 %v3565
      %v3640 = vunpack.c.l.b16 %v3568
      %v3641 = vunpack.c.l.b16 %v3571
      %v3642 = vunpack.c.l.b16 %v3574
      %v3643 = vunpack.c.l.b16 %v3577
      %v3644 = vunpack.c.l.b16 %v3580
      %v3645 = vpack.c.b16 %v3637, %v3637
      %v3646 = vpack.c.b16 %v3638, %v3638
      %v3647 = vpack.c.b16 %v3639, %v3639
      %v3648 = vpack.c.b16 %v3640, %v3640
      %v3649 = vpack.c.b16 %v3641, %v3641
      %v3650 = vpack.c.b16 %v3642, %v3642
      %v3651 = vpack.c.b16 %v3643, %v3643
      %v3652 = vpack.c.b16 %v3644, %v3644
      %v3654 = vshrl.u32 %v3613, 16
      %v3656 = vshll.u32 %v3613, 16
      %v3658 = vrot.slane %v3656, 1
      %v3659 = vor.u32 %v3654, %v3658
      %v3661 = vshll.u32 %v3645, 16
      %v3663 = vrot.slane %v3661, 1
      %v3664 = vsel %vm622, %v3659, %v3663
      %v3666 = vshrl.u32 %v3614, 16
      %v3668 = vshll.u32 %v3614, 16
      %v3670 = vrot.slane %v3668, 1
      %v3671 = vor.u32 %v3666, %v3670
      %v3673 = vshll.u32 %v3646, 16
      %v3675 = vrot.slane %v3673, 1
      %v3676 = vsel %vm622, %v3671, %v3675
      %v3678 = vshrl.u32 %v3615, 16
      %v3680 = vshll.u32 %v3615, 16
      %v3682 = vrot.slane %v3680, 1
      %v3683 = vor.u32 %v3678, %v3682
      %v3685 = vshll.u32 %v3647, 16
      %v3687 = vrot.slane %v3685, 1
      %v3688 = vsel %vm622, %v3683, %v3687
      %v3690 = vshrl.u32 %v3616, 16
      %v3692 = vshll.u32 %v3616, 16
      %v3694 = vrot.slane %v3692, 1
      %v3695 = vor.u32 %v3690, %v3694
      %v3697 = vshll.u32 %v3648, 16
      %v3699 = vrot.slane %v3697, 1
      %v3700 = vsel %vm622, %v3695, %v3699
      %v3702 = vshrl.u32 %v3617, 16
      %v3704 = vshll.u32 %v3617, 16
      %v3706 = vrot.slane %v3704, 1
      %v3707 = vor.u32 %v3702, %v3706
      %v3709 = vshll.u32 %v3649, 16
      %v3711 = vrot.slane %v3709, 1
      %v3712 = vsel %vm622, %v3707, %v3711
      %v3714 = vshrl.u32 %v3618, 16
      %v3716 = vshll.u32 %v3618, 16
      %v3718 = vrot.slane %v3716, 1
      %v3719 = vor.u32 %v3714, %v3718
      %v3721 = vshll.u32 %v3650, 16
      %v3723 = vrot.slane %v3721, 1
      %v3724 = vsel %vm622, %v3719, %v3723
      %v3726 = vshrl.u32 %v3619, 16
      %v3728 = vshll.u32 %v3619, 16
      %v3730 = vrot.slane %v3728, 1
      %v3731 = vor.u32 %v3726, %v3730
      %v3733 = vshll.u32 %v3651, 16
      %v3735 = vrot.slane %v3733, 1
      %v3736 = vsel %vm622, %v3731, %v3735
      %v3738 = vshrl.u32 %v3620, 16
      %v3740 = vshll.u32 %v3620, 16
      %v3742 = vrot.slane %v3740, 1
      %v3743 = vor.u32 %v3738, %v3742
      %v3745 = vshll.u32 %v3652, 16
      %v3747 = vrot.slane %v3745, 1
      %v3748 = vsel %vm622, %v3743, %v3747
      %v3757 = vrot.slane %v3613, 1
      %v3758 = vrot.slane %v3645, 1
      %v3759 = vsel %vm753, %v3757, %v3758
      %v3760 = vrot.slane %v3614, 1
      %v3761 = vrot.slane %v3646, 1
      %v3762 = vsel %vm753, %v3760, %v3761
      %v3763 = vrot.slane %v3615, 1
      %v3764 = vrot.slane %v3647, 1
      %v3765 = vsel %vm753, %v3763, %v3764
      %v3766 = vrot.slane %v3616, 1
      %v3767 = vrot.slane %v3648, 1
      %v3768 = vsel %vm753, %v3766, %v3767
      %v3769 = vrot.slane %v3617, 1
      %v3770 = vrot.slane %v3649, 1
      %v3771 = vsel %vm753, %v3769, %v3770
      %v3772 = vrot.slane %v3618, 1
      %v3773 = vrot.slane %v3650, 1
      %v3774 = vsel %vm753, %v3772, %v3773
      %v3775 = vrot.slane %v3619, 1
      %v3776 = vrot.slane %v3651, 1
      %v3777 = vsel %vm753, %v3775, %v3776
      %v3778 = vrot.slane %v3620, 1
      %v3779 = vrot.slane %v3652, 1
      %v3780 = vsel %vm753, %v3778, %v3779
      %s3789 = scalar_lea.vmem %s5, 192
      %v3790 = vld [vmem:[%s3789] sm:$0xf]
      %v3791 = vld [vmem:[%s3789 + $0x4] sm:$0xf]
      %v3792 = vld [vmem:[%s3789 + $0x8] sm:$0xf]
      %v3793 = vld [vmem:[%s3789 + $0xc] sm:$0xf]
      %v3794 = vld [vmem:[%s3789 + $0x10] sm:$0xf]
      %v3795 = vld [vmem:[%s3789 + $0x14] sm:$0xf]
      %v3796 = vld [vmem:[%s3789 + $0x18] sm:$0xf]
      %v3797 = vld [vmem:[%s3789 + $0x1c] sm:$0xf]
      %v3798 = vld [vmem:[%s3789 + $0x20] sm:$0xf]
      %v3799 = vld [vmem:[%s3789 + $0x24] sm:$0xf]
      %v3800 = vld [vmem:[%s3789 + $0x28] sm:$0xf]
      %v3801 = vld [vmem:[%s3789 + $0x2c] sm:$0xf]
      %v3802 = vld [vmem:[%s3789 + $0x30] sm:$0xf]
      %v3803 = vld [vmem:[%s3789 + $0x34] sm:$0xf]
      %v3804 = vld [vmem:[%s3789 + $0x38] sm:$0xf]
      %v3805 = vld [vmem:[%s3789 + $0x3c] sm:$0xf]
      %v3806 = vld [vmem:[%s3789 + $0x40] sm:$0xf]
      %v3807 = vld [vmem:[%s3789 + $0x44] sm:$0xf]
      %v3808 = vld [vmem:[%s3789 + $0x48] sm:$0xf]
      %v3809 = vld [vmem:[%s3789 + $0x4c] sm:$0xf]
      %v3810 = vld [vmem:[%s3789 + $0x50] sm:$0xf]
      %v3811 = vld [vmem:[%s3789 + $0x54] sm:$0xf]
      %v3812 = vld [vmem:[%s3789 + $0x58] sm:$0xf]
      %v3813 = vld [vmem:[%s3789 + $0x5c] sm:$0xf]
      %v3814 = vld [vmem:[%s3789 + $0x60] sm:$0xf]
      %v3815 = vld [vmem:[%s3789 + $0x64] sm:$0xf]
      %v3816 = vld [vmem:[%s3789 + $0x68] sm:$0xf]
      %v3817 = vld [vmem:[%s3789 + $0x6c] sm:$0xf]
      %v3818 = vld [vmem:[%s3789 + $0x70] sm:$0xf]
      %v3819 = vld [vmem:[%s3789 + $0x74] sm:$0xf]
      %v3820 = vld [vmem:[%s3789 + $0x78] sm:$0xf]
      %v3821 = vld [vmem:[%s3789 + $0x7c] sm:$0xf]
      %v3822 = vld [vmem:[%s3789 + $0x80] sm:$0xf]
      %v3823 = vld [vmem:[%s3789 + $0x84] sm:$0xf]
      %v3824 = vld [vmem:[%s3789 + $0x88] sm:$0xf]
      %v3825 = vld [vmem:[%s3789 + $0x8c] sm:$0xf]
      %v3826 = vld [vmem:[%s3789 + $0x90] sm:$0xf]
      %v3827 = vld [vmem:[%s3789 + $0x94] sm:$0xf]
      %v3828 = vld [vmem:[%s3789 + $0x98] sm:$0xf]
      %v3829 = vld [vmem:[%s3789 + $0x9c] sm:$0xf]
      %v3830 = vld [vmem:[%s3789 + $0xa0] sm:$0xf]
      %v3831 = vld [vmem:[%s3789 + $0xa4] sm:$0xf]
      %v3832 = vld [vmem:[%s3789 + $0xa8] sm:$0xf]
      %v3833 = vld [vmem:[%s3789 + $0xac] sm:$0xf]
      %v3834 = vld [vmem:[%s3789 + $0xb0] sm:$0xf]
      %v3835 = vld [vmem:[%s3789 + $0xb4] sm:$0xf]
      %v3836 = vld [vmem:[%s3789 + $0xb8] sm:$0xf]
      %v3837 = vld [vmem:[%s3789 + $0xbc] sm:$0xf]
      %v3886 = vunpack.c.l.b16 %v3790
      %v3887 = vunpack.c.l.b16 %v3791
      %v3888 = vunpack.c.l.b16 %v3792
      %v3889 = vunpack.c.l.b16 %v3793
      %v3890 = vunpack.c.l.b16 %v3794
      %v3891 = vunpack.c.l.b16 %v3795
      %v3892 = vunpack.c.l.b16 %v3796
      %v3893 = vunpack.c.l.b16 %v3797
      %v3894 = vunpack.c.l.b16 %v3798
      %v3895 = vunpack.c.l.b16 %v3799
      %v3896 = vunpack.c.l.b16 %v3800
      %v3897 = vunpack.c.l.b16 %v3801
      %v3898 = vunpack.c.l.b16 %v3802
      %v3899 = vunpack.c.l.b16 %v3803
      %v3900 = vunpack.c.l.b16 %v3804
      %v3901 = vunpack.c.l.b16 %v3805
      %v3902 = vunpack.c.l.b16 %v3806
      %v3903 = vunpack.c.l.b16 %v3807
      %v3904 = vunpack.c.l.b16 %v3808
      %v3905 = vunpack.c.l.b16 %v3809
      %v3906 = vunpack.c.l.b16 %v3810
      %v3907 = vunpack.c.l.b16 %v3811
      %v3908 = vunpack.c.l.b16 %v3812
      %v3909 = vunpack.c.l.b16 %v3813
      %v3910 = vunpack.c.l.b16 %v3814
      %v3911 = vunpack.c.l.b16 %v3815
      %v3912 = vunpack.c.l.b16 %v3816
      %v3913 = vunpack.c.l.b16 %v3817
      %v3914 = vunpack.c.l.b16 %v3818
      %v3915 = vunpack.c.l.b16 %v3819
      %v3916 = vunpack.c.l.b16 %v3820
      %v3917 = vunpack.c.l.b16 %v3821
      %v3918 = vunpack.c.l.b16 %v3822
      %v3919 = vunpack.c.l.b16 %v3823
      %v3920 = vunpack.c.l.b16 %v3824
      %v3921 = vunpack.c.l.b16 %v3825
      %v3922 = vunpack.c.l.b16 %v3826
      %v3923 = vunpack.c.l.b16 %v3827
      %v3924 = vunpack.c.l.b16 %v3828
      %v3925 = vunpack.c.l.b16 %v3829
      %v3926 = vunpack.c.l.b16 %v3830
      %v3927 = vunpack.c.l.b16 %v3831
      %v3928 = vunpack.c.l.b16 %v3832
      %v3929 = vunpack.c.l.b16 %v3833
      %v3930 = vunpack.c.l.b16 %v3834
      %v3931 = vunpack.c.l.b16 %v3835
      %v3932 = vunpack.c.l.b16 %v3836
      %v3933 = vunpack.c.l.b16 %v3837
      %v3934 = vpack.c.b16 %v3887, %v3886
      %v3935 = vpack.c.b16 %v3889, %v3888
      %v3936 = vpack.c.b16 %v3891, %v3890
      %v3937 = vpack.c.b16 %v3893, %v3892
      %v3938 = vpack.c.b16 %v3895, %v3894
      %v3939 = vpack.c.b16 %v3897, %v3896
      %v3940 = vpack.c.b16 %v3899, %v3898
      %v3941 = vpack.c.b16 %v3901, %v3900
      %v3942 = vpack.c.b16 %v3903, %v3902
      %v3943 = vpack.c.b16 %v3905, %v3904
      %v3944 = vpack.c.b16 %v3907, %v3906
      %v3945 = vpack.c.b16 %v3909, %v3908
      %v3946 = vpack.c.b16 %v3911, %v3910
      %v3947 = vpack.c.b16 %v3913, %v3912
      %v3948 = vpack.c.b16 %v3915, %v3914
      %v3949 = vpack.c.b16 %v3917, %v3916
      %v3950 = vpack.c.b16 %v3919, %v3918
      %v3951 = vpack.c.b16 %v3921, %v3920
      %v3952 = vpack.c.b16 %v3923, %v3922
      %v3953 = vpack.c.b16 %v3925, %v3924
      %v3954 = vpack.c.b16 %v3927, %v3926
      %v3955 = vpack.c.b16 %v3929, %v3928
      %v3956 = vpack.c.b16 %v3931, %v3930
      %v3957 = vpack.c.b16 %v3933, %v3932
      %3982 = vmatprep.subr.bf16.mxu0 0
      %3983 = vmatpush1.bf16.msra.mxu0 %v3941
      %3984 = vmatprep.subr.bf16.mxu0 0
      %3985 = vmatpush1.bf16.msra.mxu0 %v3940
      %3986 = vmatprep.subr.bf16.mxu0 0
      %3987 = vmatpush1.bf16.msra.mxu0 %v3939
      %3988 = vmatprep.subr.bf16.mxu0 0
      %3989 = vmatpush1.bf16.msra.mxu0 %v3938
      %3990 = vmatprep.subr.bf16.mxu0 0
      %3991 = vmatpush1.bf16.msra.mxu0 %v3937
      %3992 = vmatprep.subr.bf16.mxu0 0
      %3993 = vmatpush1.bf16.msra.mxu0 %v3936
      %3994 = vmatprep.subr.bf16.mxu0 0
      %3995 = vmatpush1.bf16.msra.mxu0 %v3935
      %3996 = vmatprep.subr.bf16.mxu0 0
      %3997 = vmatpush1.bf16.msra.mxu0 %v3934
      %3998 = vmatprep.subr.bf16.mxu0 0
      %3999 = vmatpush2.bf16.msra.mxu0 %v3949
      %4000 = vmatprep.subr.bf16.mxu0 0
      %4001 = vmatpush2.bf16.msra.mxu0 %v3948
      %4002 = vmatprep.subr.bf16.mxu0 0
      %4003 = vmatpush2.bf16.msra.mxu0 %v3947
      %4004 = vmatprep.subr.bf16.mxu0 0
      %4005 = vmatpush2.bf16.msra.mxu0 %v3946
      %4006 = vmatprep.subr.bf16.mxu0 0
      %4007 = vmatpush2.bf16.msra.mxu0 %v3945
      %4008 = vmatprep.subr.bf16.mxu0 0
      %4009 = vmatpush2.bf16.msra.mxu0 %v3944
      %4010 = vmatprep.subr.bf16.mxu0 0
      %4011 = vmatpush2.bf16.msra.mxu0 %v3943
      %4012 = vmatprep.subr.bf16.mxu0 0
      %4013 = vmatpush2.bf16.msra.mxu0 %v3942
      %4014 = vmatprep.mubr.bf16.mxu0 %v3664
      %4015 = vmatmul.mubr.bf16.gmra.mxu0 %v3613
      %v4016 = vpop.f32.mrf.mxu0
      %v4017 = vadd.f32 0.0, %v4016
      %v4018 = vpop.f32.mrf.mxu0
      %v4019 = vpop.f32.mrf.mxu0
      %v4020 = vadd.f32 0.0, %v4019
      %v4021 = vpop.f32.mrf.mxu0
      %4022 = vmatprep.mubr.bf16.mxu0 %v3676
      %4023 = vmatmul.mubr.bf16.gmra.mxu0 %v3614
      %v4024 = vpop.f32.mrf.mxu0
      %v4025 = vadd.f32 0.0, %v4024
      %v4026 = vpop.f32.mrf.mxu0
      %v4027 = vpop.f32.mrf.mxu0
      %v4028 = vadd.f32 0.0, %v4027
      %v4029 = vpop.f32.mrf.mxu0
      %4030 = vmatprep.mubr.bf16.mxu0 %v3688
      %4031 = vmatmul.mubr.bf16.gmra.mxu0 %v3615
      %v4032 = vpop.f32.mrf.mxu0
      %v4033 = vadd.f32 0.0, %v4032
      %v4034 = vpop.f32.mrf.mxu0
      %v4035 = vpop.f32.mrf.mxu0
      %v4036 = vadd.f32 0.0, %v4035
      %v4037 = vpop.f32.mrf.mxu0
      %4038 = vmatprep.mubr.bf16.mxu0 %v3700
      %4039 = vmatmul.mubr.bf16.gmra.mxu0 %v3616
      %v4040 = vpop.f32.mrf.mxu0
      %v4041 = vadd.f32 0.0, %v4040
      %v4042 = vpop.f32.mrf.mxu0
      %v4043 = vpop.f32.mrf.mxu0
      %v4044 = vadd.f32 0.0, %v4043
      %v4045 = vpop.f32.mrf.mxu0
      %4046 = vmatprep.mubr.bf16.mxu0 %v3712
      %4047 = vmatmul.mubr.bf16.gmra.mxu0 %v3617
      %v4048 = vpop.f32.mrf.mxu0
      %v4049 = vadd.f32 0.0, %v4048
      %v4050 = vpop.f32.mrf.mxu0
      %v4051 = vpop.f32.mrf.mxu0
      %v4052 = vadd.f32 0.0, %v4051
      %v4053 = vpop.f32.mrf.mxu0
      %4054 = vmatprep.mubr.bf16.mxu0 %v3724
      %4055 = vmatmul.mubr.bf16.gmra.mxu0 %v3618
      %v4056 = vpop.f32.mrf.mxu0
      %v4057 = vadd.f32 0.0, %v4056
      %v4058 = vpop.f32.mrf.mxu0
      %v4059 = vpop.f32.mrf.mxu0
      %v4060 = vadd.f32 0.0, %v4059
      %v4061 = vpop.f32.mrf.mxu0
      %4062 = vmatprep.mubr.bf16.mxu0 %v3736
      %4063 = vmatmul.mubr.bf16.gmra.mxu0 %v3619
      %v4064 = vpop.f32.mrf.mxu0
      %v4065 = vadd.f32 0.0, %v4064
      %v4066 = vpop.f32.mrf.mxu0
      %v4067 = vpop.f32.mrf.mxu0
      %v4068 = vadd.f32 0.0, %v4067
      %v4069 = vpop.f32.mrf.mxu0
      %4070 = vmatprep.mubr.bf16.mxu0 %v3748
      %4071 = vmatmul.mubr.bf16.gmra.mxu0 %v3620
      %v4072 = vpop.f32.mrf.mxu0
      %v4073 = vadd.f32 0.0, %v4072
      %v4074 = vpop.f32.mrf.mxu0
      %v4075 = vpop.f32.mrf.mxu0
      %v4076 = vadd.f32 0.0, %v4075
      %v4077 = vpop.f32.mrf.mxu0
      %4078 = vdwg.mxu0
      %4079 = vmatprep.subr.bf16.mxu0 0
      %4080 = vmatpush1.bf16.msra.mxu0 %v3957
      %4081 = vmatprep.subr.bf16.mxu0 0
      %4082 = vmatpush1.bf16.msra.mxu0 %v3956
      %4083 = vmatprep.subr.bf16.mxu0 0
      %4084 = vmatpush1.bf16.msra.mxu0 %v3955
      %4085 = vmatprep.subr.bf16.mxu0 0
      %4086 = vmatpush1.bf16.msra.mxu0 %v3954
      %4087 = vmatprep.subr.bf16.mxu0 0
      %4088 = vmatpush1.bf16.msra.mxu0 %v3953
      %4089 = vmatprep.subr.bf16.mxu0 0
      %4090 = vmatpush1.bf16.msra.mxu0 %v3952
      %4091 = vmatprep.subr.bf16.mxu0 0
      %4092 = vmatpush1.bf16.msra.mxu0 %v3951
      %4093 = vmatprep.subr.bf16.mxu0 0
      %4094 = vmatpush1.bf16.msra.mxu0 %v3950
      %4095 = vmatprep.subr.bf16.mxu0 0
      %4096 = vmatpush2.bf16.msra.mxu0 0
      %4097 = vmatprep.subr.bf16.mxu0 0
      %4098 = vmatpush2.bf16.msra.mxu0 0
      %4099 = vmatprep.subr.bf16.mxu0 0
      %4100 = vmatpush2.bf16.msra.mxu0 0
      %4101 = vmatprep.subr.bf16.mxu0 0
      %4102 = vmatpush2.bf16.msra.mxu0 0
      %4103 = vmatprep.subr.bf16.mxu0 0
      %4104 = vmatpush2.bf16.msra.mxu0 0
      %4105 = vmatprep.subr.bf16.mxu0 0
      %4106 = vmatpush2.bf16.msra.mxu0 0
      %4107 = vmatprep.subr.bf16.mxu0 0
      %4108 = vmatpush2.bf16.msra.mxu0 0
      %4109 = vmatprep.subr.bf16.mxu0 0
      %4110 = vmatpush2.bf16.msra.mxu0 0
      %4111 = vmatprep.mubr.bf16.mxu0 0
      %4112 = vmatmul.mubr.bf16.gmra.mxu0 %v3759
      %v4113 = vpop.f32.mrf.mxu0
      %v4114 = vadd.f32 %v4017, %v4113
      %v4115 = vpop.f32.mrf.mxu0
      %v4116 = vpop.f32.mrf.mxu0
      %v4117 = vadd.f32 %v4020, %v4116
      %v4118 = vpop.f32.mrf.mxu0
      %4119 = vmatprep.mubr.bf16.mxu0 0
      %4120 = vmatmul.mubr.bf16.gmra.mxu0 %v3762
      %v4121 = vpop.f32.mrf.mxu0
      %v4122 = vadd.f32 %v4025, %v4121
      %v4123 = vpop.f32.mrf.mxu0
      %v4124 = vpop.f32.mrf.mxu0
      %v4125 = vadd.f32 %v4028, %v4124
      %v4126 = vpop.f32.mrf.mxu0
      %4127 = vmatprep.mubr.bf16.mxu0 0
      %4128 = vmatmul.mubr.bf16.gmra.mxu0 %v3765
      %v4129 = vpop.f32.mrf.mxu0
      %v4130 = vadd.f32 %v4033, %v4129
      %v4131 = vpop.f32.mrf.mxu0
      %v4132 = vpop.f32.mrf.mxu0
      %v4133 = vadd.f32 %v4036, %v4132
      %v4134 = vpop.f32.mrf.mxu0
      %4135 = vmatprep.mubr.bf16.mxu0 0
      %4136 = vmatmul.mubr.bf16.gmra.mxu0 %v3768
      %v4137 = vpop.f32.mrf.mxu0
      %v4138 = vadd.f32 %v4041, %v4137
      %v4139 = vpop.f32.mrf.mxu0
      %v4140 = vpop.f32.mrf.mxu0
      %v4141 = vadd.f32 %v4044, %v4140
      %v4142 = vpop.f32.mrf.mxu0
      %4143 = vmatprep.mubr.bf16.mxu0 0
      %4144 = vmatmul.mubr.bf16.gmra.mxu0 %v3771
      %v4145 = vpop.f32.mrf.mxu0
      %v4146 = vadd.f32 %v4049, %v4145
      %v4147 = vpop.f32.mrf.mxu0
      %v4148 = vpop.f32.mrf.mxu0
      %v4149 = vadd.f32 %v4052, %v4148
      %v4150 = vpop.f32.mrf.mxu0
      %4151 = vmatprep.mubr.bf16.mxu0 0
      %4152 = vmatmul.mubr.bf16.gmra.mxu0 %v3774
      %v4153 = vpop.f32.mrf.mxu0
      %v4154 = vadd.f32 %v4057, %v4153
      %v4155 = vpop.f32.mrf.mxu0
      %v4156 = vpop.f32.mrf.mxu0
      %v4157 = vadd.f32 %v4060, %v4156
      %v4158 = vpop.f32.mrf.mxu0
      %4159 = vmatprep.mubr.bf16.mxu0 0
      %4160 = vmatmul.mubr.bf16.gmra.mxu0 %v3777
      %v4161 = vpop.f32.mrf.mxu0
      %v4162 = vadd.f32 %v4065, %v4161
      %v4163 = vpop.f32.mrf.mxu0
      %v4164 = vpop.f32.mrf.mxu0
      %v4165 = vadd.f32 %v4068, %v4164
      %v4166 = vpop.f32.mrf.mxu0
      %4167 = vmatprep.mubr.bf16.mxu0 0
      %4168 = vmatmul.mubr.bf16.gmra.mxu0 %v3780
      %v4169 = vpop.f32.mrf.mxu0
      %v4170 = vadd.f32 %v4073, %v4169
      %v4171 = vpop.f32.mrf.mxu0
      %v4172 = vpop.f32.mrf.mxu0
      %v4173 = vadd.f32 %v4076, %v4172
      %v4174 = vpop.f32.mrf.mxu0
      %4175 = vdwg.mxu0
      %v4224 = vunpack.c.l.b16 %v3508
      %v4225 = vunpack.c.l.b16 %v3509
      %v4226 = vunpack.c.l.b16 %v3510
      %v4227 = vunpack.c.l.b16 %v3511
      %v4228 = vunpack.c.l.b16 %v3512
      %v4229 = vunpack.c.l.b16 %v3513
      %v4230 = vunpack.c.l.b16 %v3514
      %v4231 = vunpack.c.l.b16 %v3515
      %v4232 = vunpack.c.l.b16 %v3516
      %v4233 = vunpack.c.l.b16 %v3517
      %v4234 = vunpack.c.l.b16 %v3518
      %v4235 = vunpack.c.l.b16 %v3519
      %v4236 = vunpack.c.l.b16 %v3520
      %v4237 = vunpack.c.l.b16 %v3521
      %v4238 = vunpack.c.l.b16 %v3522
      %v4239 = vunpack.c.l.b16 %v3523
      %v4240 = vunpack.c.l.b16 %v3524
      %v4241 = vunpack.c.l.b16 %v3525
      %v4242 = vunpack.c.l.b16 %v3526
      %v4243 = vunpack.c.l.b16 %v3527
      %v4244 = vunpack.c.l.b16 %v3528
      %v4245 = vunpack.c.l.b16 %v3529
      %v4246 = vunpack.c.l.b16 %v3530
      %v4247 = vunpack.c.l.b16 %v3531
      %v4248 = vunpack.c.l.b16 %v3532
      %v4249 = vunpack.c.l.b16 %v3533
      %v4250 = vunpack.c.l.b16 %v3534
      %v4251 = vunpack.c.l.b16 %v3535
      %v4252 = vunpack.c.l.b16 %v3536
      %v4253 = vunpack.c.l.b16 %v3537
      %v4254 = vunpack.c.l.b16 %v3538
      %v4255 = vunpack.c.l.b16 %v3539
      %v4256 = vunpack.c.l.b16 %v3540
      %v4257 = vunpack.c.l.b16 %v3541
      %v4258 = vunpack.c.l.b16 %v3542
      %v4259 = vunpack.c.l.b16 %v3543
      %v4260 = vunpack.c.l.b16 %v3544
      %v4261 = vunpack.c.l.b16 %v3545
      %v4262 = vunpack.c.l.b16 %v3546
      %v4263 = vunpack.c.l.b16 %v3547
      %v4264 = vunpack.c.l.b16 %v3548
      %v4265 = vunpack.c.l.b16 %v3549
      %v4266 = vunpack.c.l.b16 %v3550
      %v4267 = vunpack.c.l.b16 %v3551
      %v4268 = vunpack.c.l.b16 %v3552
      %v4269 = vunpack.c.l.b16 %v3553
      %v4270 = vunpack.c.l.b16 %v3554
      %v4271 = vunpack.c.l.b16 %v3555
      %v4272 = vpack.c.b16 %v4225, %v4224
      %v4273 = vpack.c.b16 %v4227, %v4226
      %v4274 = vpack.c.b16 %v4229, %v4228
      %v4275 = vpack.c.b16 %v4231, %v4230
      %v4276 = vpack.c.b16 %v4233, %v4232
      %v4277 = vpack.c.b16 %v4235, %v4234
      %v4278 = vpack.c.b16 %v4237, %v4236
      %v4279 = vpack.c.b16 %v4239, %v4238
      %v4280 = vpack.c.b16 %v4241, %v4240
      %v4281 = vpack.c.b16 %v4243, %v4242
      %v4282 = vpack.c.b16 %v4245, %v4244
      %v4283 = vpack.c.b16 %v4247, %v4246
      %v4284 = vpack.c.b16 %v4249, %v4248
      %v4285 = vpack.c.b16 %v4251, %v4250
      %v4286 = vpack.c.b16 %v4253, %v4252
      %v4287 = vpack.c.b16 %v4255, %v4254
      %v4288 = vpack.c.b16 %v4257, %v4256
      %v4289 = vpack.c.b16 %v4259, %v4258
      %v4290 = vpack.c.b16 %v4261, %v4260
      %v4291 = vpack.c.b16 %v4263, %v4262
      %v4292 = vpack.c.b16 %v4265, %v4264
      %v4293 = vpack.c.b16 %v4267, %v4266
      %v4294 = vpack.c.b16 %v4269, %v4268
      %v4295 = vpack.c.b16 %v4271, %v4270
      %4320 = vmatprep.subr.bf16.mxu0 0
      %4321 = vmatpush1.bf16.msra.mxu0 %v4279
      %4322 = vmatprep.subr.bf16.mxu0 0
      %4323 = vmatpush1.bf16.msra.mxu0 %v4278
      %4324 = vmatprep.subr.bf16.mxu0 0
      %4325 = vmatpush1.bf16.msra.mxu0 %v4277
      %4326 = vmatprep.subr.bf16.mxu0 0
      %4327 = vmatpush1.bf16.msra.mxu0 %v4276
      %4328 = vmatprep.subr.bf16.mxu0 0
      %4329 = vmatpush1.bf16.msra.mxu0 %v4275
      %4330 = vmatprep.subr.bf16.mxu0 0
      %4331 = vmatpush1.bf16.msra.mxu0 %v4274
      %4332 = vmatprep.subr.bf16.mxu0 0
      %4333 = vmatpush1.bf16.msra.mxu0 %v4273
      %4334 = vmatprep.subr.bf16.mxu0 0
      %4335 = vmatpush1.bf16.msra.mxu0 %v4272
      %4336 = vmatprep.subr.bf16.mxu0 0
      %4337 = vmatpush2.bf16.msra.mxu0 %v4287
      %4338 = vmatprep.subr.bf16.mxu0 0
      %4339 = vmatpush2.bf16.msra.mxu0 %v4286
      %4340 = vmatprep.subr.bf16.mxu0 0
      %4341 = vmatpush2.bf16.msra.mxu0 %v4285
      %4342 = vmatprep.subr.bf16.mxu0 0
      %4343 = vmatpush2.bf16.msra.mxu0 %v4284
      %4344 = vmatprep.subr.bf16.mxu0 0
      %4345 = vmatpush2.bf16.msra.mxu0 %v4283
      %4346 = vmatprep.subr.bf16.mxu0 0
      %4347 = vmatpush2.bf16.msra.mxu0 %v4282
      %4348 = vmatprep.subr.bf16.mxu0 0
      %4349 = vmatpush2.bf16.msra.mxu0 %v4281
      %4350 = vmatprep.subr.bf16.mxu0 0
      %4351 = vmatpush2.bf16.msra.mxu0 %v4280
      %4352 = vmatprep.mubr.bf16.mxu0 %v3383
      %4353 = vmatmul.mubr.bf16.gmra.mxu0 %v3332
      %v4354 = vpop.f32.mrf.mxu0
      %v4355 = vadd.f32 %v4114, %v4354
      %v4356 = vpop.f32.mrf.mxu0
      %v4357 = vpop.f32.mrf.mxu0
      %v4358 = vadd.f32 %v4117, %v4357
      %v4359 = vpop.f32.mrf.mxu0
      %4360 = vmatprep.mubr.bf16.mxu0 %v3395
      %4361 = vmatmul.mubr.bf16.gmra.mxu0 %v3333
      %v4362 = vpop.f32.mrf.mxu0
      %v4363 = vadd.f32 %v4122, %v4362
      %v4364 = vpop.f32.mrf.mxu0
      %v4365 = vpop.f32.mrf.mxu0
      %v4366 = vadd.f32 %v4125, %v4365
      %v4367 = vpop.f32.mrf.mxu0
      %4368 = vmatprep.mubr.bf16.mxu0 %v3407
      %4369 = vmatmul.mubr.bf16.gmra.mxu0 %v3334
      %v4370 = vpop.f32.mrf.mxu0
      %v4371 = vadd.f32 %v4130, %v4370
      %v4372 = vpop.f32.mrf.mxu0
      %v4373 = vpop.f32.mrf.mxu0
      %v4374 = vadd.f32 %v4133, %v4373
      %v4375 = vpop.f32.mrf.mxu0
      %4376 = vmatprep.mubr.bf16.mxu0 %v3419
      %4377 = vmatmul.mubr.bf16.gmra.mxu0 %v3335
      %v4378 = vpop.f32.mrf.mxu0
      %v4379 = vadd.f32 %v4138, %v4378
      %v4380 = vpop.f32.mrf.mxu0
      %v4381 = vpop.f32.mrf.mxu0
      %v4382 = vadd.f32 %v4141, %v4381
      %v4383 = vpop.f32.mrf.mxu0
      %4384 = vmatprep.mubr.bf16.mxu0 %v3431
      %4385 = vmatmul.mubr.bf16.gmra.mxu0 %v3336
      %v4386 = vpop.f32.mrf.mxu0
      %v4387 = vadd.f32 %v4146, %v4386
      %v4388 = vpop.f32.mrf.mxu0
      %v4389 = vpop.f32.mrf.mxu0
      %v4390 = vadd.f32 %v4149, %v4389
      %v4391 = vpop.f32.mrf.mxu0
      %4392 = vmatprep.mubr.bf16.mxu0 %v3443
      %4393 = vmatmul.mubr.bf16.gmra.mxu0 %v3337
      %v4394 = vpop.f32.mrf.mxu0
      %v4395 = vadd.f32 %v4154, %v4394
      %v4396 = vpop.f32.mrf.mxu0
      %v4397 = vpop.f32.mrf.mxu0
      %v4398 = vadd.f32 %v4157, %v4397
      %v4399 = vpop.f32.mrf.mxu0
      %4400 = vmatprep.mubr.bf16.mxu0 %v3455
      %4401 = vmatmul.mubr.bf16.gmra.mxu0 %v3338
      %v4402 = vpop.f32.mrf.mxu0
      %v4403 = vadd.f32 %v4162, %v4402
      %v4404 = vpop.f32.mrf.mxu0
      %v4405 = vpop.f32.mrf.mxu0
      %v4406 = vadd.f32 %v4165, %v4405
      %v4407 = vpop.f32.mrf.mxu0
      %4408 = vmatprep.mubr.bf16.mxu0 %v3467
      %4409 = vmatmul.mubr.bf16.gmra.mxu0 %v3339
      %v4410 = vpop.f32.mrf.mxu0
      %v4411 = vadd.f32 %v4170, %v4410
      %v4412 = vpop.f32.mrf.mxu0
      %v4413 = vpop.f32.mrf.mxu0
      %v4414 = vadd.f32 %v4173, %v4413
      %v4415 = vpop.f32.mrf.mxu0
      %4416 = vdwg.mxu0
      %4417 = vmatprep.subr.bf16.mxu0 0
      %4418 = vmatpush1.bf16.msra.mxu0 %v4295
      %4419 = vmatprep.subr.bf16.mxu0 0
      %4420 = vmatpush1.bf16.msra.mxu0 %v4294
      %4421 = vmatprep.subr.bf16.mxu0 0
      %4422 = vmatpush1.bf16.msra.mxu0 %v4293
      %4423 = vmatprep.subr.bf16.mxu0 0
      %4424 = vmatpush1.bf16.msra.mxu0 %v4292
      %4425 = vmatprep.subr.bf16.mxu0 0
      %4426 = vmatpush1.bf16.msra.mxu0 %v4291
      %4427 = vmatprep.subr.bf16.mxu0 0
      %4428 = vmatpush1.bf16.msra.mxu0 %v4290
      %4429 = vmatprep.subr.bf16.mxu0 0
      %4430 = vmatpush1.bf16.msra.mxu0 %v4289
      %4431 = vmatprep.subr.bf16.mxu0 0
      %4432 = vmatpush1.bf16.msra.mxu0 %v4288
      %4433 = vmatprep.subr.bf16.mxu0 0
      %4434 = vmatpush2.bf16.msra.mxu0 0
      %4435 = vmatprep.subr.bf16.mxu0 0
      %4436 = vmatpush2.bf16.msra.mxu0 0
      %4437 = vmatprep.subr.bf16.mxu0 0
      %4438 = vmatpush2.bf16.msra.mxu0 0
      %4439 = vmatprep.subr.bf16.mxu0 0
      %4440 = vmatpush2.bf16.msra.mxu0 0
      %4441 = vmatprep.subr.bf16.mxu0 0
      %4442 = vmatpush2.bf16.msra.mxu0 0
      %4443 = vmatprep.subr.bf16.mxu0 0
      %4444 = vmatpush2.bf16.msra.mxu0 0
      %4445 = vmatprep.subr.bf16.mxu0 0
      %4446 = vmatpush2.bf16.msra.mxu0 0
      %4447 = vmatprep.subr.bf16.mxu0 0
      %4448 = vmatpush2.bf16.msra.mxu0 0
      %4449 = vmatprep.mubr.bf16.mxu0 0
      %4450 = vmatmul.mubr.bf16.gmra.mxu0 %v3478
      %v4451 = vpop.f32.mrf.mxu0
      %v4452 = vadd.f32 %v4355, %v4451
      %v4453 = vpop.f32.mrf.mxu0
      %v4454 = vpop.f32.mrf.mxu0
      %v4455 = vadd.f32 %v4358, %v4454
      %v4456 = vpop.f32.mrf.mxu0
      %4457 = vmatprep.mubr.bf16.mxu0 0
      %4458 = vmatmul.mubr.bf16.gmra.mxu0 %v3481
      %v4459 = vpop.f32.mrf.mxu0
      %v4460 = vadd.f32 %v4363, %v4459
      %v4461 = vpop.f32.mrf.mxu0
      %v4462 = vpop.f32.mrf.mxu0
      %v4463 = vadd.f32 %v4366, %v4462
      %v4464 = vpop.f32.mrf.mxu0
      %4465 = vmatprep.mubr.bf16.mxu0 0
      %4466 = vmatmul.mubr.bf16.gmra.mxu0 %v3484
      %v4467 = vpop.f32.mrf.mxu0
      %v4468 = vadd.f32 %v4371, %v4467
      %v4469 = vpop.f32.mrf.mxu0
      %v4470 = vpop.f32.mrf.mxu0
      %v4471 = vadd.f32 %v4374, %v4470
      %v4472 = vpop.f32.mrf.mxu0
      %4473 = vmatprep.mubr.bf16.mxu0 0
      %4474 = vmatmul.mubr.bf16.gmra.mxu0 %v3487
      %v4475 = vpop.f32.mrf.mxu0
      %v4476 = vadd.f32 %v4379, %v4475
      %v4477 = vpop.f32.mrf.mxu0
      %v4478 = vpop.f32.mrf.mxu0
      %v4479 = vadd.f32 %v4382, %v4478
      %v4480 = vpop.f32.mrf.mxu0
      %4481 = vmatprep.mubr.bf16.mxu0 0
      %4482 = vmatmul.mubr.bf16.gmra.mxu0 %v3490
      %v4483 = vpop.f32.mrf.mxu0
      %v4484 = vadd.f32 %v4387, %v4483
      %v4485 = vpop.f32.mrf.mxu0
      %v4486 = vpop.f32.mrf.mxu0
      %v4487 = vadd.f32 %v4390, %v4486
      %v4488 = vpop.f32.mrf.mxu0
      %4489 = vmatprep.mubr.bf16.mxu0 0
      %4490 = vmatmul.mubr.bf16.gmra.mxu0 %v3493
      %v4491 = vpop.f32.mrf.mxu0
      %v4492 = vadd.f32 %v4395, %v4491
      %v4493 = vpop.f32.mrf.mxu0
      %v4494 = vpop.f32.mrf.mxu0
      %v4495 = vadd.f32 %v4398, %v4494
      %v4496 = vpop.f32.mrf.mxu0
      %4497 = vmatprep.mubr.bf16.mxu0 0
      %4498 = vmatmul.mubr.bf16.gmra.mxu0 %v3496
      %v4499 = vpop.f32.mrf.mxu0
      %v4500 = vadd.f32 %v4403, %v4499
      %v4501 = vpop.f32.mrf.mxu0
      %v4502 = vpop.f32.mrf.mxu0
      %v4503 = vadd.f32 %v4406, %v4502
      %v4504 = vpop.f32.mrf.mxu0
      %4505 = vmatprep.mubr.bf16.mxu0 0
      %4506 = vmatmul.mubr.bf16.gmra.mxu0 %v3499
      %v4507 = vpop.f32.mrf.mxu0
      %v4508 = vadd.f32 %v4411, %v4507
      %v4509 = vpop.f32.mrf.mxu0
      %v4510 = vpop.f32.mrf.mxu0
      %v4511 = vadd.f32 %v4414, %v4510
      %v4512 = vpop.f32.mrf.mxu0
      %4513 = vdwg.mxu0
      %s4514 = scalar_lea.vmem [#allocation3], 24
      %v4515 = vld [vmem:[%s4514] sm:$0xf]
      %v4516 = vld [vmem:[%s4514 + $0x4] sm:$0xf]
      %v4517 = vld [vmem:[%s4514 + $0x8] sm:$0xf]
      %v4518 = vld [vmem:[%s4514 + $0xc] sm:$0xf]
      %v4519 = vld [vmem:[%s4514 + $0x10] sm:$0xf]
      %v4520 = vld [vmem:[%s4514 + $0x14] sm:$0xf]
      %v4521 = vld [vmem:[%s4514 + $0x18] sm:$0xf]
      %v4522 = vld [vmem:[%s4514 + $0x1c] sm:$0xf]
      %v4523 = vld [vmem:[%s4514 + $0x20] sm:$0xf]
      %v4524 = vld [vmem:[%s4514 + $0x24] sm:$0xf]
      %v4525 = vld [vmem:[%s4514 + $0x28] sm:$0xf]
      %v4526 = vld [vmem:[%s4514 + $0x2c] sm:$0xf]
      %v4527 = vld [vmem:[%s4514 + $0x30] sm:$0xf]
      %v4528 = vld [vmem:[%s4514 + $0x34] sm:$0xf]
      %v4529 = vld [vmem:[%s4514 + $0x38] sm:$0xf]
      %v4530 = vld [vmem:[%s4514 + $0x3c] sm:$0xf]
      %v4531 = vld [vmem:[%s4514 + $0x40] sm:$0xf]
      %v4532 = vld [vmem:[%s4514 + $0x44] sm:$0xf]
      %v4533 = vld [vmem:[%s4514 + $0x48] sm:$0xf]
      %v4534 = vld [vmem:[%s4514 + $0x4c] sm:$0xf]
      %v4535 = vld [vmem:[%s4514 + $0x50] sm:$0xf]
      %v4536 = vld [vmem:[%s4514 + $0x54] sm:$0xf]
      %v4537 = vld [vmem:[%s4514 + $0x58] sm:$0xf]
      %v4538 = vld [vmem:[%s4514 + $0x5c] sm:$0xf]
      %v4555 = vunpack.c.l.b16 %v4515
      %v4556 = vunpack.c.l.b16 %v4516
      %v4557 = vunpack.c.l.b16 %v4518
      %v4558 = vunpack.c.l.b16 %v4519
      %v4559 = vunpack.c.l.b16 %v4521
      %v4560 = vunpack.c.l.b16 %v4522
      %v4561 = vunpack.c.l.b16 %v4524
      %v4562 = vunpack.c.l.b16 %v4525
      %v4563 = vunpack.c.l.b16 %v4527
      %v4564 = vunpack.c.l.b16 %v4528
      %v4565 = vunpack.c.l.b16 %v4530
      %v4566 = vunpack.c.l.b16 %v4531
      %v4567 = vunpack.c.l.b16 %v4533
      %v4568 = vunpack.c.l.b16 %v4534
      %v4569 = vunpack.c.l.b16 %v4536
      %v4570 = vunpack.c.l.b16 %v4537
      %v4571 = vpack.c.b16 %v4556, %v4555
      %v4572 = vpack.c.b16 %v4558, %v4557
      %v4573 = vpack.c.b16 %v4560, %v4559
      %v4574 = vpack.c.b16 %v4562, %v4561
      %v4575 = vpack.c.b16 %v4564, %v4563
      %v4576 = vpack.c.b16 %v4566, %v4565
      %v4577 = vpack.c.b16 %v4568, %v4567
      %v4578 = vpack.c.b16 %v4570, %v4569
      %v4595 = vunpack.c.l.b16 %v4517
      %v4596 = vunpack.c.l.b16 %v4520
      %v4597 = vunpack.c.l.b16 %v4523
      %v4598 = vunpack.c.l.b16 %v4526
      %v4599 = vunpack.c.l.b16 %v4529
      %v4600 = vunpack.c.l.b16 %v4532
      %v4601 = vunpack.c.l.b16 %v4535
      %v4602 = vunpack.c.l.b16 %v4538
      %v4603 = vpack.c.b16 %v4595, %v4595
      %v4604 = vpack.c.b16 %v4596, %v4596
      %v4605 = vpack.c.b16 %v4597, %v4597
      %v4606 = vpack.c.b16 %v4598, %v4598
      %v4607 = vpack.c.b16 %v4599, %v4599
      %v4608 = vpack.c.b16 %v4600, %v4600
      %v4609 = vpack.c.b16 %v4601, %v4601
      %v4610 = vpack.c.b16 %v4602, %v4602
      %v4612 = vshrl.u32 %v4571, 16
      %v4614 = vshll.u32 %v4571, 16
      %v4616 = vrot.slane %v4614, 1
      %v4617 = vor.u32 %v4612, %v4616
      %v4619 = vshll.u32 %v4603, 16
      %v4621 = vrot.slane %v4619, 1
      %v4622 = vsel %vm622, %v4617, %v4621
      %v4624 = vshrl.u32 %v4572, 16
      %v4626 = vshll.u32 %v4572, 16
      %v4628 = vrot.slane %v4626, 1
      %v4629 = vor.u32 %v4624, %v4628
      %v4631 = vshll.u32 %v4604, 16
      %v4633 = vrot.slane %v4631, 1
      %v4634 = vsel %vm622, %v4629, %v4633
      %v4636 = vshrl.u32 %v4573, 16
      %v4638 = vshll.u32 %v4573, 16
      %v4640 = vrot.slane %v4638, 1
      %v4641 = vor.u32 %v4636, %v4640
      %v4643 = vshll.u32 %v4605, 16
      %v4645 = vrot.slane %v4643, 1
      %v4646 = vsel %vm622, %v4641, %v4645
      %v4648 = vshrl.u32 %v4574, 16
      %v4650 = vshll.u32 %v4574, 16
      %v4652 = vrot.slane %v4650, 1
      %v4653 = vor.u32 %v4648, %v4652
      %v4655 = vshll.u32 %v4606, 16
      %v4657 = vrot.slane %v4655, 1
      %v4658 = vsel %vm622, %v4653, %v4657
      %v4660 = vshrl.u32 %v4575, 16
      %v4662 = vshll.u32 %v4575, 16
      %v4664 = vrot.slane %v4662, 1
      %v4665 = vor.u32 %v4660, %v4664
      %v4667 = vshll.u32 %v4607, 16
      %v4669 = vrot.slane %v4667, 1
      %v4670 = vsel %vm622, %v4665, %v4669
      %v4672 = vshrl.u32 %v4576, 16
      %v4674 = vshll.u32 %v4576, 16
      %v4676 = vrot.slane %v4674, 1
      %v4677 = vor.u32 %v4672, %v4676
      %v4679 = vshll.u32 %v4608, 16
      %v4681 = vrot.slane %v4679, 1
      %v4682 = vsel %vm622, %v4677, %v4681
      %v4684 = vshrl.u32 %v4577, 16
      %v4686 = vshll.u32 %v4577, 16
      %v4688 = vrot.slane %v4686, 1
      %v4689 = vor.u32 %v4684, %v4688
      %v4691 = vshll.u32 %v4609, 16
      %v4693 = vrot.slane %v4691, 1
      %v4694 = vsel %vm622, %v4689, %v4693
      %v4696 = vshrl.u32 %v4578, 16
      %v4698 = vshll.u32 %v4578, 16
      %v4700 = vrot.slane %v4698, 1
      %v4701 = vor.u32 %v4696, %v4700
      %v4703 = vshll.u32 %v4610, 16
      %v4705 = vrot.slane %v4703, 1
      %v4706 = vsel %vm622, %v4701, %v4705
      %v4715 = vrot.slane %v4571, 1
      %v4716 = vrot.slane %v4603, 1
      %v4717 = vsel %vm753, %v4715, %v4716
      %v4718 = vrot.slane %v4572, 1
      %v4719 = vrot.slane %v4604, 1
      %v4720 = vsel %vm753, %v4718, %v4719
      %v4721 = vrot.slane %v4573, 1
      %v4722 = vrot.slane %v4605, 1
      %v4723 = vsel %vm753, %v4721, %v4722
      %v4724 = vrot.slane %v4574, 1
      %v4725 = vrot.slane %v4606, 1
      %v4726 = vsel %vm753, %v4724, %v4725
      %v4727 = vrot.slane %v4575, 1
      %v4728 = vrot.slane %v4607, 1
      %v4729 = vsel %vm753, %v4727, %v4728
      %v4730 = vrot.slane %v4576, 1
      %v4731 = vrot.slane %v4608, 1
      %v4732 = vsel %vm753, %v4730, %v4731
      %v4733 = vrot.slane %v4577, 1
      %v4734 = vrot.slane %v4609, 1
      %v4735 = vsel %vm753, %v4733, %v4734
      %v4736 = vrot.slane %v4578, 1
      %v4737 = vrot.slane %v4610, 1
      %v4738 = vsel %vm753, %v4736, %v4737
      %s4747 = scalar_lea.vmem %s5, 384
      %v4748 = vld [vmem:[%s4747] sm:$0xf]
      %v4749 = vld [vmem:[%s4747 + $0x4] sm:$0xf]
      %v4750 = vld [vmem:[%s4747 + $0x8] sm:$0xf]
      %v4751 = vld [vmem:[%s4747 + $0xc] sm:$0xf]
      %v4752 = vld [vmem:[%s4747 + $0x10] sm:$0xf]
      %v4753 = vld [vmem:[%s4747 + $0x14] sm:$0xf]
      %v4754 = vld [vmem:[%s4747 + $0x18] sm:$0xf]
      %v4755 = vld [vmem:[%s4747 + $0x1c] sm:$0xf]
      %v4756 = vld [vmem:[%s4747 + $0x20] sm:$0xf]
      %v4757 = vld [vmem:[%s4747 + $0x24] sm:$0xf]
      %v4758 = vld [vmem:[%s4747 + $0x28] sm:$0xf]
      %v4759 = vld [vmem:[%s4747 + $0x2c] sm:$0xf]
      %v4760 = vld [vmem:[%s4747 + $0x30] sm:$0xf]
      %v4761 = vld [vmem:[%s4747 + $0x34] sm:$0xf]
      %v4762 = vld [vmem:[%s4747 + $0x38] sm:$0xf]
      %v4763 = vld [vmem:[%s4747 + $0x3c] sm:$0xf]
      %v4764 = vld [vmem:[%s4747 + $0x40] sm:$0xf]
      %v4765 = vld [vmem:[%s4747 + $0x44] sm:$0xf]
      %v4766 = vld [vmem:[%s4747 + $0x48] sm:$0xf]
      %v4767 = vld [vmem:[%s4747 + $0x4c] sm:$0xf]
      %v4768 = vld [vmem:[%s4747 + $0x50] sm:$0xf]
      %v4769 = vld [vmem:[%s4747 + $0x54] sm:$0xf]
      %v4770 = vld [vmem:[%s4747 + $0x58] sm:$0xf]
      %v4771 = vld [vmem:[%s4747 + $0x5c] sm:$0xf]
      %v4772 = vld [vmem:[%s4747 + $0x60] sm:$0xf]
      %v4773 = vld [vmem:[%s4747 + $0x64] sm:$0xf]
      %v4774 = vld [vmem:[%s4747 + $0x68] sm:$0xf]
      %v4775 = vld [vmem:[%s4747 + $0x6c] sm:$0xf]
      %v4776 = vld [vmem:[%s4747 + $0x70] sm:$0xf]
      %v4777 = vld [vmem:[%s4747 + $0x74] sm:$0xf]
      %v4778 = vld [vmem:[%s4747 + $0x78] sm:$0xf]
      %v4779 = vld [vmem:[%s4747 + $0x7c] sm:$0xf]
      %v4780 = vld [vmem:[%s4747 + $0x80] sm:$0xf]
      %v4781 = vld [vmem:[%s4747 + $0x84] sm:$0xf]
      %v4782 = vld [vmem:[%s4747 + $0x88] sm:$0xf]
      %v4783 = vld [vmem:[%s4747 + $0x8c] sm:$0xf]
      %v4784 = vld [vmem:[%s4747 + $0x90] sm:$0xf]
      %v4785 = vld [vmem:[%s4747 + $0x94] sm:$0xf]
      %v4786 = vld [vmem:[%s4747 + $0x98] sm:$0xf]
      %v4787 = vld [vmem:[%s4747 + $0x9c] sm:$0xf]
      %v4788 = vld [vmem:[%s4747 + $0xa0] sm:$0xf]
      %v4789 = vld [vmem:[%s4747 + $0xa4] sm:$0xf]
      %v4790 = vld [vmem:[%s4747 + $0xa8] sm:$0xf]
      %v4791 = vld [vmem:[%s4747 + $0xac] sm:$0xf]
      %v4792 = vld [vmem:[%s4747 + $0xb0] sm:$0xf]
      %v4793 = vld [vmem:[%s4747 + $0xb4] sm:$0xf]
      %v4794 = vld [vmem:[%s4747 + $0xb8] sm:$0xf]
      %v4795 = vld [vmem:[%s4747 + $0xbc] sm:$0xf]
      %v4844 = vunpack.c.l.b16 %v4748
      %v4845 = vunpack.c.l.b16 %v4749
      %v4846 = vunpack.c.l.b16 %v4750
      %v4847 = vunpack.c.l.b16 %v4751
      %v4848 = vunpack.c.l.b16 %v4752
      %v4849 = vunpack.c.l.b16 %v4753
      %v4850 = vunpack.c.l.b16 %v4754
      %v4851 = vunpack.c.l.b16 %v4755
      %v4852 = vunpack.c.l.b16 %v4756
      %v4853 = vunpack.c.l.b16 %v4757
      %v4854 = vunpack.c.l.b16 %v4758
      %v4855 = vunpack.c.l.b16 %v4759
      %v4856 = vunpack.c.l.b16 %v4760
      %v4857 = vunpack.c.l.b16 %v4761
      %v4858 = vunpack.c.l.b16 %v4762
      %v4859 = vunpack.c.l.b16 %v4763
      %v4860 = vunpack.c.l.b16 %v4764
      %v4861 = vunpack.c.l.b16 %v4765
      %v4862 = vunpack.c.l.b16 %v4766
      %v4863 = vunpack.c.l.b16 %v4767
      %v4864 = vunpack.c.l.b16 %v4768
      %v4865 = vunpack.c.l.b16 %v4769
      %v4866 = vunpack.c.l.b16 %v4770
      %v4867 = vunpack.c.l.b16 %v4771
      %v4868 = vunpack.c.l.b16 %v4772
      %v4869 = vunpack.c.l.b16 %v4773
      %v4870 = vunpack.c.l.b16 %v4774
      %v4871 = vunpack.c.l.b16 %v4775
      %v4872 = vunpack.c.l.b16 %v4776
      %v4873 = vunpack.c.l.b16 %v4777
      %v4874 = vunpack.c.l.b16 %v4778
      %v4875 = vunpack.c.l.b16 %v4779
      %v4876 = vunpack.c.l.b16 %v4780
      %v4877 = vunpack.c.l.b16 %v4781
      %v4878 = vunpack.c.l.b16 %v4782
      %v4879 = vunpack.c.l.b16 %v4783
      %v4880 = vunpack.c.l.b16 %v4784
      %v4881 = vunpack.c.l.b16 %v4785
      %v4882 = vunpack.c.l.b16 %v4786
      %v4883 = vunpack.c.l.b16 %v4787
      %v4884 = vunpack.c.l.b16 %v4788
      %v4885 = vunpack.c.l.b16 %v4789
      %v4886 = vunpack.c.l.b16 %v4790
      %v4887 = vunpack.c.l.b16 %v4791
      %v4888 = vunpack.c.l.b16 %v4792
      %v4889 = vunpack.c.l.b16 %v4793
      %v4890 = vunpack.c.l.b16 %v4794
      %v4891 = vunpack.c.l.b16 %v4795
      %v4892 = vpack.c.b16 %v4845, %v4844
      %v4893 = vpack.c.b16 %v4847, %v4846
      %v4894 = vpack.c.b16 %v4849, %v4848
      %v4895 = vpack.c.b16 %v4851, %v4850
      %v4896 = vpack.c.b16 %v4853, %v4852
      %v4897 = vpack.c.b16 %v4855, %v4854
      %v4898 = vpack.c.b16 %v4857, %v4856
      %v4899 = vpack.c.b16 %v4859, %v4858
      %v4900 = vpack.c.b16 %v4861, %v4860
      %v4901 = vpack.c.b16 %v4863, %v4862
      %v4902 = vpack.c.b16 %v4865, %v4864
      %v4903 = vpack.c.b16 %v4867, %v4866
      %v4904 = vpack.c.b16 %v4869, %v4868
      %v4905 = vpack.c.b16 %v4871, %v4870
      %v4906 = vpack.c.b16 %v4873, %v4872
      %v4907 = vpack.c.b16 %v4875, %v4874
      %v4908 = vpack.c.b16 %v4877, %v4876
      %v4909 = vpack.c.b16 %v4879, %v4878
      %v4910 = vpack.c.b16 %v4881, %v4880
      %v4911 = vpack.c.b16 %v4883, %v4882
      %v4912 = vpack.c.b16 %v4885, %v4884
      %v4913 = vpack.c.b16 %v4887, %v4886
      %v4914 = vpack.c.b16 %v4889, %v4888
      %v4915 = vpack.c.b16 %v4891, %v4890
      %4940 = vmatprep.subr.bf16.mxu0 0
      %4941 = vmatpush1.bf16.msra.mxu0 %v4899
      %4942 = vmatprep.subr.bf16.mxu0 0
      %4943 = vmatpush1.bf16.msra.mxu0 %v4898
      %4944 = vmatprep.subr.bf16.mxu0 0
      %4945 = vmatpush1.bf16.msra.mxu0 %v4897
      %4946 = vmatprep.subr.bf16.mxu0 0
      %4947 = vmatpush1.bf16.msra.mxu0 %v4896
      %4948 = vmatprep.subr.bf16.mxu0 0
      %4949 = vmatpush1.bf16.msra.mxu0 %v4895
      %4950 = vmatprep.subr.bf16.mxu0 0
      %4951 = vmatpush1.bf16.msra.mxu0 %v4894
      %4952 = vmatprep.subr.bf16.mxu0 0
      %4953 = vmatpush1.bf16.msra.mxu0 %v4893
      %4954 = vmatprep.subr.bf16.mxu0 0
      %4955 = vmatpush1.bf16.msra.mxu0 %v4892
      %4956 = vmatprep.subr.bf16.mxu0 0
      %4957 = vmatpush2.bf16.msra.mxu0 %v4907
      %4958 = vmatprep.subr.bf16.mxu0 0
      %4959 = vmatpush2.bf16.msra.mxu0 %v4906
      %4960 = vmatprep.subr.bf16.mxu0 0
      %4961 = vmatpush2.bf16.msra.mxu0 %v4905
      %4962 = vmatprep.subr.bf16.mxu0 0
      %4963 = vmatpush2.bf16.msra.mxu0 %v4904
      %4964 = vmatprep.subr.bf16.mxu0 0
      %4965 = vmatpush2.bf16.msra.mxu0 %v4903
      %4966 = vmatprep.subr.bf16.mxu0 0
      %4967 = vmatpush2.bf16.msra.mxu0 %v4902
      %4968 = vmatprep.subr.bf16.mxu0 0
      %4969 = vmatpush2.bf16.msra.mxu0 %v4901
      %4970 = vmatprep.subr.bf16.mxu0 0
      %4971 = vmatpush2.bf16.msra.mxu0 %v4900
      %4972 = vmatprep.mubr.bf16.mxu0 %v4622
      %4973 = vmatmul.mubr.bf16.gmra.mxu0 %v4571
      %v4974 = vpop.f32.mrf.mxu0
      %v4975 = vadd.f32 0.0, %v4974
      %v4976 = vpop.f32.mrf.mxu0
      %v4977 = vpop.f32.mrf.mxu0
      %v4978 = vadd.f32 0.0, %v4977
      %v4979 = vpop.f32.mrf.mxu0
      %4980 = vmatprep.mubr.bf16.mxu0 %v4634
      %4981 = vmatmul.mubr.bf16.gmra.mxu0 %v4572
      %v4982 = vpop.f32.mrf.mxu0
      %v4983 = vadd.f32 0.0, %v4982
      %v4984 = vpop.f32.mrf.mxu0
      %v4985 = vpop.f32.mrf.mxu0
      %v4986 = vadd.f32 0.0, %v4985
      %v4987 = vpop.f32.mrf.mxu0
      %4988 = vmatprep.mubr.bf16.mxu0 %v4646
      %4989 = vmatmul.mubr.bf16.gmra.mxu0 %v4573
      %v4990 = vpop.f32.mrf.mxu0
      %v4991 = vadd.f32 0.0, %v4990
      %v4992 = vpop.f32.mrf.mxu0
      %v4993 = vpop.f32.mrf.mxu0
      %v4994 = vadd.f32 0.0, %v4993
      %v4995 = vpop.f32.mrf.mxu0
      %4996 = vmatprep.mubr.bf16.mxu0 %v4658
      %4997 = vmatmul.mubr.bf16.gmra.mxu0 %v4574
      %v4998 = vpop.f32.mrf.mxu0
      %v4999 = vadd.f32 0.0, %v4998
      %v5000 = vpop.f32.mrf.mxu0
      %v5001 = vpop.f32.mrf.mxu0
      %v5002 = vadd.f32 0.0, %v5001
      %v5003 = vpop.f32.mrf.mxu0
      %5004 = vmatprep.mubr.bf16.mxu0 %v4670
      %5005 = vmatmul.mubr.bf16.gmra.mxu0 %v4575
      %v5006 = vpop.f32.mrf.mxu0
      %v5007 = vadd.f32 0.0, %v5006
      %v5008 = vpop.f32.mrf.mxu0
      %v5009 = vpop.f32.mrf.mxu0
      %v5010 = vadd.f32 0.0, %v5009
      %v5011 = vpop.f32.mrf.mxu0
      %5012 = vmatprep.mubr.bf16.mxu0 %v4682
      %5013 = vmatmul.mubr.bf16.gmra.mxu0 %v4576
      %v5014 = vpop.f32.mrf.mxu0
      %v5015 = vadd.f32 0.0, %v5014
      %v5016 = vpop.f32.mrf.mxu0
      %v5017 = vpop.f32.mrf.mxu0
      %v5018 = vadd.f32 0.0, %v5017
      %v5019 = vpop.f32.mrf.mxu0
      %5020 = vmatprep.mubr.bf16.mxu0 %v4694
      %5021 = vmatmul.mubr.bf16.gmra.mxu0 %v4577
      %v5022 = vpop.f32.mrf.mxu0
      %v5023 = vadd.f32 0.0, %v5022
      %v5024 = vpop.f32.mrf.mxu0
      %v5025 = vpop.f32.mrf.mxu0
      %v5026 = vadd.f32 0.0, %v5025
      %v5027 = vpop.f32.mrf.mxu0
      %5028 = vmatprep.mubr.bf16.mxu0 %v4706
      %5029 = vmatmul.mubr.bf16.gmra.mxu0 %v4578
      %v5030 = vpop.f32.mrf.mxu0
      %v5031 = vadd.f32 0.0, %v5030
      %v5032 = vpop.f32.mrf.mxu0
      %v5033 = vpop.f32.mrf.mxu0
      %v5034 = vadd.f32 0.0, %v5033
      %v5035 = vpop.f32.mrf.mxu0
      %5036 = vdwg.mxu0
      %5037 = vmatprep.subr.bf16.mxu0 0
      %5038 = vmatpush1.bf16.msra.mxu0 %v4915
      %5039 = vmatprep.subr.bf16.mxu0 0
      %5040 = vmatpush1.bf16.msra.mxu0 %v4914
      %5041 = vmatprep.subr.bf16.mxu0 0
      %5042 = vmatpush1.bf16.msra.mxu0 %v4913
      %5043 = vmatprep.subr.bf16.mxu0 0
      %5044 = vmatpush1.bf16.msra.mxu0 %v4912
      %5045 = vmatprep.subr.bf16.mxu0 0
      %5046 = vmatpush1.bf16.msra.mxu0 %v4911
      %5047 = vmatprep.subr.bf16.mxu0 0
      %5048 = vmatpush1.bf16.msra.mxu0 %v4910
      %5049 = vmatprep.subr.bf16.mxu0 0
      %5050 = vmatpush1.bf16.msra.mxu0 %v4909
      %5051 = vmatprep.subr.bf16.mxu0 0
      %5052 = vmatpush1.bf16.msra.mxu0 %v4908
      %5053 = vmatprep.subr.bf16.mxu0 0
      %5054 = vmatpush2.bf16.msra.mxu0 0
      %5055 = vmatprep.subr.bf16.mxu0 0
      %5056 = vmatpush2.bf16.msra.mxu0 0
      %5057 = vmatprep.subr.bf16.mxu0 0
      %5058 = vmatpush2.bf16.msra.mxu0 0
      %5059 = vmatprep.subr.bf16.mxu0 0
      %5060 = vmatpush2.bf16.msra.mxu0 0
      %5061 = vmatprep.subr.bf16.mxu0 0
      %5062 = vmatpush2.bf16.msra.mxu0 0
      %5063 = vmatprep.subr.bf16.mxu0 0
      %5064 = vmatpush2.bf16.msra.mxu0 0
      %5065 = vmatprep.subr.bf16.mxu0 0
      %5066 = vmatpush2.bf16.msra.mxu0 0
      %5067 = vmatprep.subr.bf16.mxu0 0
      %5068 = vmatpush2.bf16.msra.mxu0 0
      %5069 = vmatprep.mubr.bf16.mxu0 0
      %5070 = vmatmul.mubr.bf16.gmra.mxu0 %v4717
      %v5071 = vpop.f32.mrf.mxu0
      %v5072 = vadd.f32 %v4975, %v5071
      %v5073 = vpop.f32.mrf.mxu0
      %v5074 = vpop.f32.mrf.mxu0
      %v5075 = vadd.f32 %v4978, %v5074
      %v5076 = vpop.f32.mrf.mxu0
      %5077 = vmatprep.mubr.bf16.mxu0 0
      %5078 = vmatmul.mubr.bf16.gmra.mxu0 %v4720
      %v5079 = vpop.f32.mrf.mxu0
      %v5080 = vadd.f32 %v4983, %v5079
      %v5081 = vpop.f32.mrf.mxu0
      %v5082 = vpop.f32.mrf.mxu0
      %v5083 = vadd.f32 %v4986, %v5082
      %v5084 = vpop.f32.mrf.mxu0
      %5085 = vmatprep.mubr.bf16.mxu0 0
      %5086 = vmatmul.mubr.bf16.gmra.mxu0 %v4723
      %v5087 = vpop.f32.mrf.mxu0
      %v5088 = vadd.f32 %v4991, %v5087
      %v5089 = vpop.f32.mrf.mxu0
      %v5090 = vpop.f32.mrf.mxu0
      %v5091 = vadd.f32 %v4994, %v5090
      %v5092 = vpop.f32.mrf.mxu0
      %5093 = vmatprep.mubr.bf16.mxu0 0
      %5094 = vmatmul.mubr.bf16.gmra.mxu0 %v4726
      %v5095 = vpop.f32.mrf.mxu0
      %v5096 = vadd.f32 %v4999, %v5095
      %v5097 = vpop.f32.mrf.mxu0
      %v5098 = vpop.f32.mrf.mxu0
      %v5099 = vadd.f32 %v5002, %v5098
      %v5100 = vpop.f32.mrf.mxu0
      %5101 = vmatprep.mubr.bf16.mxu0 0
      %5102 = vmatmul.mubr.bf16.gmra.mxu0 %v4729
      %v5103 = vpop.f32.mrf.mxu0
      %v5104 = vadd.f32 %v5007, %v5103
      %v5105 = vpop.f32.mrf.mxu0
      %v5106 = vpop.f32.mrf.mxu0
      %v5107 = vadd.f32 %v5010, %v5106
      %v5108 = vpop.f32.mrf.mxu0
      %5109 = vmatprep.mubr.bf16.mxu0 0
      %5110 = vmatmul.mubr.bf16.gmra.mxu0 %v4732
      %v5111 = vpop.f32.mrf.mxu0
      %v5112 = vadd.f32 %v5015, %v5111
      %v5113 = vpop.f32.mrf.mxu0
      %v5114 = vpop.f32.mrf.mxu0
      %v5115 = vadd.f32 %v5018, %v5114
      %v5116 = vpop.f32.mrf.mxu0
      %5117 = vmatprep.mubr.bf16.mxu0 0
      %5118 = vmatmul.mubr.bf16.gmra.mxu0 %v4735
      %v5119 = vpop.f32.mrf.mxu0
      %v5120 = vadd.f32 %v5023, %v5119
      %v5121 = vpop.f32.mrf.mxu0
      %v5122 = vpop.f32.mrf.mxu0
      %v5123 = vadd.f32 %v5026, %v5122
      %v5124 = vpop.f32.mrf.mxu0
      %5125 = vmatprep.mubr.bf16.mxu0 0
      %5126 = vmatmul.mubr.bf16.gmra.mxu0 %v4738
      %v5127 = vpop.f32.mrf.mxu0
      %v5128 = vadd.f32 %v5031, %v5127
      %v5129 = vpop.f32.mrf.mxu0
      %v5130 = vpop.f32.mrf.mxu0
      %v5131 = vadd.f32 %v5034, %v5130
      %v5132 = vpop.f32.mrf.mxu0
      %5133 = vdwg.mxu0
      %v5134 = vadd.f32 %v4452, %v5072
      %v5135 = vadd.f32 %v4455, %v5075
      %v5136 = vadd.f32 %v4460, %v5080
      %v5137 = vadd.f32 %v4463, %v5083
      %v5138 = vadd.f32 %v4468, %v5088
      %v5139 = vadd.f32 %v4471, %v5091
      %v5140 = vadd.f32 %v4476, %v5096
      %v5141 = vadd.f32 %v4479, %v5099
      %v5142 = vadd.f32 %v4484, %v5104
      %v5143 = vadd.f32 %v4487, %v5107
      %v5144 = vadd.f32 %v4492, %v5112
      %v5145 = vadd.f32 %v4495, %v5115
      %v5146 = vadd.f32 %v4500, %v5120
      %v5147 = vadd.f32 %v4503, %v5123
      %v5148 = vadd.f32 %v4508, %v5128
      %v5149 = vadd.f32 %v4511, %v5131
      %v5150 = vld [vmem:[%s6] sm:$0x1]
      %v5152 = vlaneseq
      %v5153 = vshrl.u32 %v5152, 7
      %v5154 = vsub.s32 0, %v5153
      %v5155 = vrot.slane %v5150, %v5154
      %v5157 = vmul.f32 %v5134, %v5155
      %v5158 = vmul.f32 %v5135, %v5155
      %v5159 = vmul.f32 %v5136, %v5155
      %v5160 = vmul.f32 %v5137, %v5155
      %v5161 = vmul.f32 %v5138, %v5155
      %v5162 = vmul.f32 %v5139, %v5155
      %v5163 = vmul.f32 %v5140, %v5155
      %v5164 = vmul.f32 %v5141, %v5155
      %v5165 = vmul.f32 %v5142, %v5155
      %v5166 = vmul.f32 %v5143, %v5155
      %v5167 = vmul.f32 %v5144, %v5155
      %v5168 = vmul.f32 %v5145, %v5155
      %v5169 = vmul.f32 %v5146, %v5155
      %v5170 = vmul.f32 %v5147, %v5155
      %v5171 = vmul.f32 %v5148, %v5155
      %v5172 = vmul.f32 %v5149, %v5155
      %v5173 = vld [vmem:[%s7] sm:$0x1]
      %v5175 = vlaneseq
      %v5176 = vshrl.u32 %v5175, 7
      %v5177 = vsub.s32 0, %v5176
      %v5178 = vrot.slane %v5173, %v5177
      %v5180 = vadd.f32 %v5157, %v5178
      %v5181 = vadd.f32 %v5158, %v5178
      %v5182 = vadd.f32 %v5159, %v5178
      %v5183 = vadd.f32 %v5160, %v5178
      %v5184 = vadd.f32 %v5161, %v5178
      %v5185 = vadd.f32 %v5162, %v5178
      %v5186 = vadd.f32 %v5163, %v5178
      %v5187 = vadd.f32 %v5164, %v5178
      %v5188 = vadd.f32 %v5165, %v5178
      %v5189 = vadd.f32 %v5166, %v5178
      %v5190 = vadd.f32 %v5167, %v5178
      %v5191 = vadd.f32 %v5168, %v5178
      %v5192 = vadd.f32 %v5169, %v5178
      %v5193 = vadd.f32 %v5170, %v5178
      %v5194 = vadd.f32 %v5171, %v5178
      %v5195 = vadd.f32 %v5172, %v5178
      %v5196 = vmax.f32 %v5180, 0.0
      %v5197 = vmax.f32 %v5181, 0.0
      %v5198 = vmax.f32 %v5182, 0.0
      %v5199 = vmax.f32 %v5183, 0.0
      %v5200 = vmax.f32 %v5184, 0.0
      %v5201 = vmax.f32 %v5185, 0.0
      %v5202 = vmax.f32 %v5186, 0.0
      %v5203 = vmax.f32 %v5187, 0.0
      %v5204 = vmax.f32 %v5188, 0.0
      %v5205 = vmax.f32 %v5189, 0.0
      %v5206 = vmax.f32 %v5190, 0.0
      %v5207 = vmax.f32 %v5191, 0.0
      %v5208 = vmax.f32 %v5192, 0.0
      %v5209 = vmax.f32 %v5193, 0.0
      %v5210 = vmax.f32 %v5194, 0.0
      %v5211 = vmax.f32 %v5195, 0.0
      %5212 = vst [vmem:[%s426] sm:$0xff] %v5196
      %5213 = vst [vmem:[%s426 + $0x8] sm:$0xff] %v5197
      %5214 = vst [vmem:[%s426 + $0x10] sm:$0xff] %v5198
      %5215 = vst [vmem:[%s426 + $0x18] sm:$0xff] %v5199
      %5216 = vst [vmem:[%s426 + $0x20] sm:$0xff] %v5200
      %5217 = vst [vmem:[%s426 + $0x28] sm:$0xff] %v5201
      %5218 = vst [vmem:[%s426 + $0x30] sm:$0xff] %v5202
      %5219 = vst [vmem:[%s426 + $0x38] sm:$0xff] %v5203
      %5220 = vst [vmem:[%s426 + $0x40] sm:$0xff] %v5204
      %5221 = vst [vmem:[%s426 + $0x48] sm:$0xff] %v5205
      %5222 = vst [vmem:[%s426 + $0x50] sm:$0xff] %v5206
      %5223 = vst [vmem:[%s426 + $0x58] sm:$0xff] %v5207
      %5224 = vst [vmem:[%s426 + $0x60] sm:$0xff] %v5208
      %5225 = vst [vmem:[%s426 + $0x68] sm:$0xff] %v5209
      %5226 = vst [vmem:[%s426 + $0x70] sm:$0xff] %v5210
      %5227 = vst [vmem:[%s426 + $0x78] sm:$0xff] %v5211
      %s5228 = smul.u32 8, %s24
      %p5229 = scmp.lt.s32.totalorder %s23, 1
      %s5230 = scalar_select %p5229, %s23, 1
      %p5231 = scmp.lt.s32.totalorder %s5228, 15
      %s5232 = scalar_select %p5231, %s5228, 15
      %s5233 = smul.addr %s5232, 2
      %s5234 = smul.addr %s5230, 32
      %s5235 = sadd.s32 %s5233, %s5234
      %s5236 = smul.addr %s5235, 8
      %s5237 = scalar_lea.vmem %s8, %s5236
      // Predicated region
      $region53: #{double_conv_pallas.1} parent=51 // pred_check
        %p5238 = pneg %p237
      $region54: #{double_conv_pallas.1} parent=51 // pred_check_branch
        %5240 = sbr.rel (%p5238) target = $region56
      $region55: #{double_conv_pallas.1} parent=51 // pred_region
        %s5241 = smul.u32 8, %s24
      $region56: #{double_conv_pallas.1} parent=51 // pred_fallthru
        _
    $region52: #{double_conv_pallas.1} parent=5 // pred_fallthru
      _
    %p5242 = scmp.le.s32.totalorder 2, %s14
    // Predicated region
    $region57: #{double_conv_pallas.1} parent=5 // pred_check
      %p5243 = pneg %p5242
    $region58: #{double_conv_pallas.1} parent=5 // pred_check_branch
      %5245 = sbr.rel (%p5243) target = $region60
    $region59: #{double_conv_pallas.1} parent=5 // pred_region
      %s5246 = ssub.s32 %s14, 2
      // Predicated region
      $region61: #{double_conv_pallas.1} parent=59 // pred_check
        %p5247 = pneg %p243
      $region62: #{double_conv_pallas.1} parent=59 // pred_check_branch
        %5249 = sbr.rel (%p5247) target = $region64
      $region63: #{double_conv_pallas.1} parent=59 // pred_region
        %s5250 = smul.u32 8, %s26
        %p5251 = scmp.lt.s32.totalorder %s25, 1
        %s5252 = scalar_select %p5251, %s25, 1
        %p5253 = scmp.lt.s32.totalorder %s5250, 15
        %s5254 = scalar_select %p5253, %s5250, 15
        %s5255 = smul.addr %s5254, 2
        %s5256 = smul.addr %s5252, 32
        %s5257 = sadd.s32 %s5255, %s5256
        %s5258 = smul.addr %s5257, 8
        %s5259 = scalar_lea.vmem %s8, %s5258
      $region64: #{double_conv_pallas.1} parent=59 // pred_fallthru
        _
    $region60: #{double_conv_pallas.1} parent=5 // pred_fallthru
      _
  $region6: #{double_conv_pallas.1} parent=0 // loop_footer
    %s18 = sadd.s32 1, %s14
  $region7: #{double_conv_pallas.1} parent=0 // loop_footer_branch
    %13 = sbr.rel target = $region3
  $region8: #{double_conv_pallas.1} parent=0 // loop_exit
    _

</llo_original>
